<compile_context>
chip_gen: v5e
topology: v5e:2x2
jax: 0.10.0
libtpu: 0.0.40
codegen_flags: <defaults>
</compile_context>

<pallas_src>
import functools

import jax
import jax.numpy as jnp
from jax.experimental import pallas as pl
from jax.experimental.pallas import tpu as pltpu


def _round_up(x, m):
    return ((x + m - 1) // m) * m


def _vmem_limit_bytes():
    """Generation-aware VMEM limit: ~100 MiB on v5e/v6e (128 MiB), ~56 MiB on v7x (64 MiB)."""
    cap = 64 * 1024 * 1024
    try:
        info = pltpu.get_tpu_info()
        cap = int(getattr(info, "vmem_capacity_bytes", cap))
    except Exception:
        pass
    return int(min(cap * 7 // 8, 100 * 1024 * 1024))


# ---------------------------------------------------------------------------
# Fused kernel: per-chunk input projection + sequential LSTM recurrence
# + final Linear epilogue on the last chunk.
# Gate column order is [i, f, o, g] (reordered + padded in the wrapper).
# ---------------------------------------------------------------------------
def lstm_fused_kernel(x_ref, bias_ref, wih_hbm, whh_hbm, wfc_hbm, bfc_ref,
                      out_ref,
                      wih_sc, whh_sc, wfc_sc, gx_sc, h_sc, c_sc, dma_sem,
                      *, t_chunk, seq_len, h_pad, unroll):
    c_idx = pl.program_id(0)
    n_chunks = pl.num_programs(0)

    # ---- first grid step: load weights once into single-buffered VMEM scratch,
    #      zero-init h/c state -------------------------------------------------
    @pl.when(c_idx == 0)
    def _():
        cp_ih = pltpu.make_async_copy(wih_hbm, wih_sc, dma_sem.at[0])
        cp_hh = pltpu.make_async_copy(whh_hbm, whh_sc, dma_sem.at[1])
        cp_fc = pltpu.make_async_copy(wfc_hbm, wfc_sc, dma_sem.at[2])
        cp_ih.start(); cp_hh.start(); cp_fc.start()
        cp_ih.wait(); cp_hh.wait(); cp_fc.wait()
        h_sc[...] = jnp.zeros_like(h_sc)
        c_sc[...] = jnp.zeros_like(c_sc)

    # ---- fused input projection for this chunk (one big MXU matmul), result
    #      stays in VMEM (no gx HBM round trip) --------------------------------
    tc, b_pad, d_pad = x_ref.shape
    x2 = x_ref[...].reshape(tc * b_pad, d_pad).astype(jnp.bfloat16)
    gx_sc[...] = (jnp.dot(x2, wih_sc[...], preferred_element_type=jnp.float32)
                  + bias_ref[...]).reshape(tc, b_pad, 4 * h_pad)

    # ---- recurrence over the chunk's timesteps -------------------------------
    def make_step(masked):
        def step(s, carry):
            # gates = gx[t] + h_{t-1} @ W_hh^T   (bf16 MXU operands, f32 accumulate)
            gates = gx_sc[s] + jnp.dot(h_sc[...].astype(jnp.bfloat16), whh_sc[...],
                                       preferred_element_type=jnp.float32)
            sig = jax.nn.sigmoid(gates[:, :3 * h_pad])          # [ i | f | o ]
            i_g = sig[:, :h_pad]
            f_g = sig[:, h_pad:2 * h_pad]
            o_g = sig[:, 2 * h_pad:3 * h_pad]
            g_g = jnp.tanh(gates[:, 3 * h_pad:])                # g
            c_new = f_g * c_sc[...] + i_g * g_g
            h_new = o_g * jnp.tanh(c_new)
            if masked:
                # Only needed in the tail chunk (padded timesteps).
                valid = (c_idx * t_chunk + s) < seq_len
                c_sc[...] = jnp.where(valid, c_new, c_sc[...])
                h_sc[...] = jnp.where(valid, h_new, h_sc[...])
            else:
                c_sc[...] = c_new
                h_sc[...] = h_new
            return carry
        return step

    needs_mask = (seq_len % t_chunk) != 0
    if needs_mask:
        @pl.when(c_idx == n_chunks - 1)
        def _():
            jax.lax.fori_loop(0, t_chunk, make_step(True), 0, unroll=unroll)

        @pl.when(c_idx != n_chunks - 1)
        def _():
            jax.lax.fori_loop(0, t_chunk, make_step(False), 0, unroll=unroll)
    else:
        jax.lax.fori_loop(0, t_chunk, make_step(False), 0, unroll=unroll)

    # ---- fused FC epilogue on the last chunk ----------------------------------
    @pl.when(c_idx == n_chunks - 1)
    def _():
        out_ref[...] = (jnp.dot(h_sc[...].astype(jnp.bfloat16), wfc_sc[...],
                                preferred_element_type=jnp.float32)
                        + bfc_ref[...]).astype(out_ref.dtype)


def lstm_model_forward(x, params, *, t_chunk=32, unroll=8):
    """x: (B, T, D) float32.  Returns (B, O) float32."""
    w_ih, w_hh, b_ih, b_hh, w_fc, b_fc = (
        params["w_ih"], params["w_hh"], params["b_ih"], params["b_hh"],
        params["w_fc"], params["b_fc"])
    B, T, D = x.shape
    H = w_hh.shape[1]
    O = w_fc.shape[0]

    # Hardware-aligned sizes: sublane (8) for batch, lane (128) for features.
    B_pad = _round_up(B, 8)
    D_pad = _round_up(D, 128)
    H_pad = _round_up(H, 128)
    O_pad = _round_up(O, 128)
    t_chunk = max(1, min(t_chunk, T))
    n_chunks = pl.cdiv(T, t_chunk)
    T_pad = n_chunks * t_chunk
    unroll = max(1, min(unroll, t_chunk))

    # ---- weight preprocessing (PyTorch gate order (i,f,g,o) -> (i,f,o,g),
    #      each gate block zero-padded to H_pad; bf16 matmul operands) ----------
    def reorder_pad_rows(w, in_dim, in_pad):
        i_w, f_w, g_w, o_w = w[:H], w[H:2 * H], w[2 * H:3 * H], w[3 * H:]
        padg = lambda gw: jnp.pad(gw, ((0, H_pad - H), (0, in_pad - in_dim)))
        return jnp.concatenate([padg(i_w), padg(f_w), padg(o_w), padg(g_w)], 0)

    def reorder_pad_bias(b):
        i_b, f_b, g_b, o_b = b[:H], b[H:2 * H], b[2 * H:3 * H], b[3 * H:]
        padb = lambda v: jnp.pad(v, (0, H_pad - H))
        return jnp.concatenate([padb(i_b), padb(f_b), padb(o_b), padb(g_b)], 0)

    wih_t = jnp.transpose(reorder_pad_rows(w_ih, D, D_pad)).astype(jnp.bfloat16)  # (D_pad, 4H_pad)
    whh_t = jnp.transpose(reorder_pad_rows(w_hh, H, H_pad)).astype(jnp.bfloat16)  # (H_pad, 4H_pad)
    bias = reorder_pad_bias(b_ih + b_hh).reshape(1, 4 * H_pad)                    # (1, 4H_pad) f32
    wfc_t = jnp.transpose(
        jnp.pad(w_fc, ((0, O_pad - O), (0, H_pad - H)))).astype(jnp.bfloat16)     # (H_pad, O_pad)
    bfc = jnp.pad(b_fc, (0, O_pad - O)).reshape(1, O_pad)                         # (1, O_pad) f32

    # ---- input: time-major, zero-padded ---------------------------------------
    x_tm = jnp.transpose(x, (1, 0, 2))                                            # (T, B, D)
    x_tm = jnp.pad(x_tm, ((0, T_pad - T), (0, B_pad - B), (0, D_pad - D)))

    kernel = functools.partial(
        lstm_fused_kernel, t_chunk=t_chunk, seq_len=T, h_pad=H_pad, unroll=unroll)

    out_pad = pl.pallas_call(
        kernel,
        out_shape=jax.ShapeDtypeStruct((B_pad, O_pad), jnp.float32),
        grid_spec=pltpu.PrefetchScalarGridSpec(
            num_scalar_prefetch=0,
            grid=(n_chunks,),
            in_specs=[
                pl.BlockSpec((t_chunk, B_pad, D_pad), lambda c: (c, 0, 0)),   # x chunk (pipelined)
                pl.BlockSpec((1, 4 * H_pad), lambda c: (0, 0)),               # bias
                pl.BlockSpec(memory_space=pl.ANY),                            # W_ih (HBM, copied once)
                pl.BlockSpec(memory_space=pl.ANY),                            # W_hh (HBM, copied once)
                pl.BlockSpec(memory_space=pl.ANY),                            # W_fc (HBM, copied once)
                pl.BlockSpec((1, O_pad), lambda c: (0, 0)),                   # b_fc
            ],
            out_specs=pl.BlockSpec((B_pad, O_pad), lambda c: (0, 0)),
            scratch_shapes=[
                pltpu.VMEM((D_pad, 4 * H_pad), jnp.bfloat16),        # W_ih resident (single buffer)
                pltpu.VMEM((H_pad, 4 * H_pad), jnp.bfloat16),        # W_hh resident (single buffer)
                pltpu.VMEM((H_pad, O_pad), jnp.bfloat16),            # W_fc resident (single buffer)
                pltpu.VMEM((t_chunk, B_pad, 4 * H_pad), jnp.float32),  # gx chunk (VMEM only)
                pltpu.VMEM((B_pad, H_pad), jnp.float32),             # h state
                pltpu.VMEM((B_pad, H_pad), jnp.float32),             # c state
                pltpu.SemaphoreType.DMA((3,)),                       # weight-load DMAs
            ],
        ),
        compiler_params=pltpu.CompilerParams(
            dimension_semantics=("arbitrary",),            # sequential recurrence
            vmem_limit_bytes=_vmem_limit_bytes()),
    )(x_tm, bias, wih_t, whh_t, wfc_t, bfc)

    return out_pad[:B, :O]


# ---------------------------------------------------------------------------
# Pure-JAX f32 reference (mirrors torch.nn.LSTM + Linear) for validation.
# ---------------------------------------------------------------------------
def lstm_model_reference(x, params):
    w_ih, w_hh, b_ih, b_hh, w_fc, b_fc = (
        params["w_ih"], params["w_hh"], params["b_ih"], params["b_hh"],
        params["w_fc"], params["b_fc"])
    B, T, D = x.shape
    H = w_hh.shape[1]

    def step(carry, xt):
        h, c = carry
        gates = xt @ w_ih.T + h @ w_hh.T + b_ih + b_hh
        i, f, g, o = jnp.split(gates, 4, axis=-1)
        i = jax.nn.sigmoid(i)
        f = jax.nn.sigmoid(f)
        g = jnp.tanh(g)
        o = jax.nn.sigmoid(o)
        c = f * c + i * g
        h = o * jnp.tanh(c)
        return (h, c), None

    h0 = jnp.zeros((B, H), jnp.float32)
    c0 = jnp.zeros((B, H), jnp.float32)
    (h_last, _), _ = jax.lax.scan(step, (h0, c0), jnp.transpose(x, (1, 0, 2)))
    return h_last @ w_fc.T + b_fc


def init_params(key, input_size, hidden_size, output_size):
    # Deterministic init, PyTorch-style uniform(-1/sqrt(H), 1/sqrt(H)).
    ks = jax.random.split(key, 6)
    bound = 1.0 / jnp.sqrt(jnp.float32(hidden_size))
    u = lambda k, shape: jax.random.uniform(k, shape, jnp.float32, -bound, bound)
    return {
        "w_ih": u(ks[0], (4 * hidden_size, input_size)),
        "w_hh": u(ks[1], (4 * hidden_size, hidden_size)),
        "b_ih": u(ks[2], (4 * hidden_size,)),
        "b_hh": u(ks[3], (4 * hidden_size,)),
        "w_fc": u(ks[4], (output_size, hidden_size)),
        "b_fc": u(ks[5], (output_size,)),
    }


if __name__ == "__main__":
    B, T, D, H, O = 2, 8, 16, 32, 8  # batch, seq, input, hidden, output

    key = jax.random.PRNGKey(0)
    k_x, k_p = jax.random.split(key)
    x = jax.random.normal(k_x, (B, T, D), dtype=jnp.float32)
    params = init_params(k_p, D, H, O)

    ref = lstm_model_reference(x, params)

    # Single-chunk path (t_chunk >= T).
    fwd = jax.jit(lstm_model_forward)
    out = fwd(x, params)
    jax.block_until_ready(out)
    assert out.shape == (B, O)
    assert jnp.allclose(out, ref, atol=5e-2, rtol=5e-2), "single-chunk mismatch vs reference"

    # Multi-chunk + masked-tail path (T % t_chunk != 0).
    fwd_mc = jax.jit(functools.partial(lstm_model_forward, t_chunk=3, unroll=2))
    out_mc = fwd_mc(x, params)
    jax.block_until_ready(out_mc)
    assert jnp.allclose(out_mc, ref, atol=5e-2, rtol=5e-2), "multi-chunk mismatch vs reference"

    print("KERNEL_OK")
</pallas_src>

<mosaic_0001>
module attributes {stable_mosaic.version = 11 : i64} {
  func.func @lstm_fused_kernel(%arg0: i32, %arg1: memref<8x8x128xf32, #tpu.memory_space<vmem>>, %arg2: memref<1x512xf32, #tpu.memory_space<vmem>>, %arg3: memref<128x512xbf16, #tpu.memory_space<any>>, %arg4: memref<128x512xbf16, #tpu.memory_space<any>>, %arg5: memref<128x128xbf16, #tpu.memory_space<any>>, %arg6: memref<1x128xf32, #tpu.memory_space<vmem>>, %arg7: memref<8x128xf32, #tpu.memory_space<vmem>>, %arg8: memref<128x512xbf16, #tpu.memory_space<vmem>>, %arg9: memref<128x512xbf16, #tpu.memory_space<vmem>>, %arg10: memref<128x128xbf16, #tpu.memory_space<vmem>>, %arg11: memref<8x8x512xf32, #tpu.memory_space<vmem>>, %arg12: memref<8x128xf32, #tpu.memory_space<vmem>>, %arg13: memref<8x128xf32, #tpu.memory_space<vmem>>, %arg14: memref<3x!tpu.dma_semaphore, #tpu.memory_space<semaphore_mem>>) attributes {dimension_semantics = [#tpu.dimension_semantics<arbitrary>], iteration_bounds = array<i64: 1>, scalar_prefetch = 0 : i64, scratch_operands = 7 : i64, tpu.core_type = #tpu.core_type<tc>, window_params = [{transform_indices = @transform_0, window_bounds = array<i64: 8, 8, 128>}, {pipeline_mode = #tpu.pipeline_mode<synchronous>, transform_indices = @transform_1, window_bounds = array<i64: 1, 512>}, {}, {}, {}, {pipeline_mode = #tpu.pipeline_mode<synchronous>, transform_indices = @transform_5, window_bounds = array<i64: 1, 128>}, {pipeline_mode = #tpu.pipeline_mode<synchronous>, transform_indices = @transform_6, window_bounds = array<i64: 8, 128>}]} {
    %c0_i32 = arith.constant 0 : i32
    %0 = arith.cmpi eq, %arg0, %c0_i32 : i32
    %1 = arith.extui %0 : i1 to i32
    %c0_i32_0 = arith.constant 0 : i32
    %2 = arith.cmpi ne, %1, %c0_i32_0 : i32
    scf.if %2 {
      %c0_i32_125 = arith.constant 0 : i32
      %232 = tpu.memref_slice %arg14[%c0_i32_125] : memref<3x!tpu.dma_semaphore, #tpu.memory_space<semaphore_mem>> -> memref<1x!tpu.dma_semaphore, #tpu.memory_space<semaphore_mem>>
      %233 = tpu.memref_squeeze %232 : memref<1x!tpu.dma_semaphore, #tpu.memory_space<semaphore_mem>> -> memref<!tpu.dma_semaphore, #tpu.memory_space<semaphore_mem>>
      tpu.enqueue_dma source(%arg3 : memref<128x512xbf16, #tpu.memory_space<any>>) target(%arg8 : memref<128x512xbf16, #tpu.memory_space<vmem>>) target_semaphore(%233 : memref<!tpu.dma_semaphore, #tpu.memory_space<semaphore_mem>>)
      %c1_i32_126 = arith.constant 1 : i32
      %234 = tpu.memref_slice %arg14[%c1_i32_126] : memref<3x!tpu.dma_semaphore, #tpu.memory_space<semaphore_mem>> -> memref<1x!tpu.dma_semaphore, #tpu.memory_space<semaphore_mem>>
      %235 = tpu.memref_squeeze %234 : memref<1x!tpu.dma_semaphore, #tpu.memory_space<semaphore_mem>> -> memref<!tpu.dma_semaphore, #tpu.memory_space<semaphore_mem>>
      tpu.enqueue_dma source(%arg4 : memref<128x512xbf16, #tpu.memory_space<any>>) target(%arg9 : memref<128x512xbf16, #tpu.memory_space<vmem>>) target_semaphore(%235 : memref<!tpu.dma_semaphore, #tpu.memory_space<semaphore_mem>>)
      %c2_i32_127 = arith.constant 2 : i32
      %236 = tpu.memref_slice %arg14[%c2_i32_127] : memref<3x!tpu.dma_semaphore, #tpu.memory_space<semaphore_mem>> -> memref<1x!tpu.dma_semaphore, #tpu.memory_space<semaphore_mem>>
      %237 = tpu.memref_squeeze %236 : memref<1x!tpu.dma_semaphore, #tpu.memory_space<semaphore_mem>> -> memref<!tpu.dma_semaphore, #tpu.memory_space<semaphore_mem>>
      tpu.enqueue_dma source(%arg5 : memref<128x128xbf16, #tpu.memory_space<any>>) target(%arg10 : memref<128x128xbf16, #tpu.memory_space<vmem>>) target_semaphore(%237 : memref<!tpu.dma_semaphore, #tpu.memory_space<semaphore_mem>>)
      %c0_i32_128 = arith.constant 0 : i32
      %238 = tpu.memref_slice %arg14[%c0_i32_128] : memref<3x!tpu.dma_semaphore, #tpu.memory_space<semaphore_mem>> -> memref<1x!tpu.dma_semaphore, #tpu.memory_space<semaphore_mem>>
      %239 = tpu.memref_squeeze %238 : memref<1x!tpu.dma_semaphore, #tpu.memory_space<semaphore_mem>> -> memref<!tpu.dma_semaphore, #tpu.memory_space<semaphore_mem>>
      tpu.wait_dma2 semaphore(%239 : memref<!tpu.dma_semaphore, #tpu.memory_space<semaphore_mem>>) src(%arg3 : memref<128x512xbf16, #tpu.memory_space<any>>) dst(%arg8 : memref<128x512xbf16, #tpu.memory_space<vmem>>)
      %c1_i32_129 = arith.constant 1 : i32
      %240 = tpu.memref_slice %arg14[%c1_i32_129] : memref<3x!tpu.dma_semaphore, #tpu.memory_space<semaphore_mem>> -> memref<1x!tpu.dma_semaphore, #tpu.memory_space<semaphore_mem>>
      %241 = tpu.memref_squeeze %240 : memref<1x!tpu.dma_semaphore, #tpu.memory_space<semaphore_mem>> -> memref<!tpu.dma_semaphore, #tpu.memory_space<semaphore_mem>>
      tpu.wait_dma2 semaphore(%241 : memref<!tpu.dma_semaphore, #tpu.memory_space<semaphore_mem>>) src(%arg4 : memref<128x512xbf16, #tpu.memory_space<any>>) dst(%arg9 : memref<128x512xbf16, #tpu.memory_space<vmem>>)
      %c2_i32_130 = arith.constant 2 : i32
      %242 = tpu.memref_slice %arg14[%c2_i32_130] : memref<3x!tpu.dma_semaphore, #tpu.memory_space<semaphore_mem>> -> memref<1x!tpu.dma_semaphore, #tpu.memory_space<semaphore_mem>>
      %243 = tpu.memref_squeeze %242 : memref<1x!tpu.dma_semaphore, #tpu.memory_space<semaphore_mem>> -> memref<!tpu.dma_semaphore, #tpu.memory_space<semaphore_mem>>
      tpu.wait_dma2 semaphore(%243 : memref<!tpu.dma_semaphore, #tpu.memory_space<semaphore_mem>>) src(%arg5 : memref<128x128xbf16, #tpu.memory_space<any>>) dst(%arg10 : memref<128x128xbf16, #tpu.memory_space<vmem>>)
      %cst_131 = arith.constant 0.000000e+00 : f32
      %244 = vector.broadcast %cst_131 : f32 to vector<8x128xf32>
      %c0_132 = arith.constant 0 : index
      %c0_133 = arith.constant 0 : index
      %245 = vector.load %arg12[%c0_132, %c0_133] : memref<8x128xf32, #tpu.memory_space<vmem>>, vector<8x128xf32>
      tpu.vector_store %arg12[%c0_132, %c0_133], %244 {strides = array<i32>} : memref<8x128xf32, #tpu.memory_space<vmem>>, vector<8x128xf32>,
      %cst_134 = arith.constant 0.000000e+00 : f32
      %246 = vector.broadcast %cst_134 : f32 to vector<8x128xf32>
      %c0_135 = arith.constant 0 : index
      %c0_136 = arith.constant 0 : index
      %247 = vector.load %arg13[%c0_135, %c0_136] : memref<8x128xf32, #tpu.memory_space<vmem>>, vector<8x128xf32>
      tpu.vector_store %arg13[%c0_135, %c0_136], %246 {strides = array<i32>} : memref<8x128xf32, #tpu.memory_space<vmem>>, vector<8x128xf32>,
    } else {
    }
    %c0 = arith.constant 0 : index
    %c0_1 = arith.constant 0 : index
    %c0_2 = arith.constant 0 : index
    %3 = vector.load %arg1[%c0, %c0_1, %c0_2] : memref<8x8x128xf32, #tpu.memory_space<vmem>>, vector<8x8x128xf32>
    %4 = vector.shape_cast %3 : vector<8x8x128xf32> to vector<64x128xf32>
    %5 = arith.truncf %4 : vector<64x128xf32> to vector<64x128xbf16>
    %c0_3 = arith.constant 0 : index
    %c0_4 = arith.constant 0 : index
    %6 = vector.load %arg8[%c0_3, %c0_4] : memref<128x512xbf16, #tpu.memory_space<vmem>>, vector<128x512xbf16>
    %cst = arith.constant dense<0.000000e+00> : vector<64x512xf32>
    %7 = tpu.matmul %5, %6, %cst {dimension_numbers = #tpu.dot_dimension_numbers<[1], [0], [0], [1], [0, 0, 1, 1], [], []>} : vector<64x128xbf16>, vector<128x512xbf16>, vector<64x512xf32> -> vector<64x512xf32>
    %c0_5 = arith.constant 0 : index
    %c0_6 = arith.constant 0 : index
    %8 = vector.load %arg2[%c0_5, %c0_6] : memref<1x512xf32, #tpu.memory_space<vmem>>, vector<1x512xf32>
    %9 = vector.broadcast %8 : vector<1x512xf32> to vector<64x512xf32>
    %10 = arith.addf %7, %9 : vector<64x512xf32>
    %11 = vector.shape_cast %10 : vector<64x512xf32> to vector<8x8x512xf32>
    %c0_7 = arith.constant 0 : index
    %c0_8 = arith.constant 0 : index
    %c0_9 = arith.constant 0 : index
    %12 = vector.load %arg11[%c0_7, %c0_8, %c0_9] : memref<8x8x512xf32, #tpu.memory_space<vmem>>, vector<8x8x512xf32>
    tpu.vector_store %arg11[%c0_7, %c0_8, %c0_9], %11 {strides = array<i32>} : memref<8x8x512xf32, #tpu.memory_space<vmem>>, vector<8x8x512xf32>,
    %c0_i32_10 = arith.constant 0 : i32
    %13 = arith.index_cast %c0_i32_10 : i32 to index
    %c0_11 = arith.constant 0 : index
    %c0_12 = arith.constant 0 : index
    %14 = vector.load %arg11[%13, %c0_11, %c0_12] : memref<8x8x512xf32, #tpu.memory_space<vmem>>, vector<1x8x512xf32>
    %15 = vector.shape_cast %14 : vector<1x8x512xf32> to vector<8x512xf32>
    %c0_13 = arith.constant 0 : index
    %c0_14 = arith.constant 0 : index
    %16 = vector.load %arg12[%c0_13, %c0_14] : memref<8x128xf32, #tpu.memory_space<vmem>>, vector<8x128xf32>
    %17 = arith.truncf %16 : vector<8x128xf32> to vector<8x128xbf16>
    %c0_15 = arith.constant 0 : index
    %c0_16 = arith.constant 0 : index
    %18 = vector.load %arg9[%c0_15, %c0_16] : memref<128x512xbf16, #tpu.memory_space<vmem>>, vector<128x512xbf16>
    %cst_17 = arith.constant dense<0.000000e+00> : vector<8x512xf32>
    %19 = tpu.matmul %17, %18, %cst_17 {dimension_numbers = #tpu.dot_dimension_numbers<[1], [0], [0], [1], [0, 0, 1, 1], [], []>} : vector<8x128xbf16>, vector<128x512xbf16>, vector<8x512xf32> -> vector<8x512xf32>
    %20 = arith.addf %15, %19 : vector<8x512xf32>
    %21 = vector.extract_strided_slice %20 {offsets = [0, 0], sizes = [8, 384], strides = [1, 1]} : vector<8x512xf32> to vector<8x384xf32>
    %22 = arith.negf %21 : vector<8x384xf32>
    %23 = math.exp %22 : vector<8x384xf32>
    %cst_18 = arith.constant 1.000000e+00 : f32
    %24 = vector.broadcast %cst_18 : f32 to vector<8x384xf32>
    %25 = arith.addf %24, %23 : vector<8x384xf32>
    %26 = arith.divf %24, %25 : vector<8x384xf32>
    %27 = vector.extract_strided_slice %26 {offsets = [0, 0], sizes = [8, 128], strides = [1, 1]} : vector<8x384xf32> to vector<8x128xf32>
    %28 = vector.extract_strided_slice %26 {offsets = [0, 128], sizes = [8, 128], strides = [1, 1]} : vector<8x384xf32> to vector<8x128xf32>
    %29 = vector.extract_strided_slice %26 {offsets = [0, 256], sizes = [8, 128], strides = [1, 1]} : vector<8x384xf32> to vector<8x128xf32>
    %30 = vector.extract_strided_slice %20 {offsets = [0, 384], sizes = [8, 128], strides = [1, 1]} : vector<8x512xf32> to vector<8x128xf32>
    %31 = math.tanh %30 : vector<8x128xf32>
    %c0_19 = arith.constant 0 : index
    %c0_20 = arith.constant 0 : index
    %32 = vector.load %arg13[%c0_19, %c0_20] : memref<8x128xf32, #tpu.memory_space<vmem>>, vector<8x128xf32>
    %33 = arith.mulf %28, %32 : vector<8x128xf32>
    %34 = arith.mulf %27, %31 : vector<8x128xf32>
    %35 = arith.addf %33, %34 : vector<8x128xf32>
    %36 = math.tanh %35 : vector<8x128xf32>
    %37 = arith.mulf %29, %36 : vector<8x128xf32>
    %c0_21 = arith.constant 0 : index
    %c0_22 = arith.constant 0 : index
    %38 = vector.load %arg13[%c0_21, %c0_22] : memref<8x128xf32, #tpu.memory_space<vmem>>, vector<8x128xf32>
    tpu.vector_store %arg13[%c0_21, %c0_22], %35 {strides = array<i32>} : memref<8x128xf32, #tpu.memory_space<vmem>>, vector<8x128xf32>,
    %c0_23 = arith.constant 0 : index
    %c0_24 = arith.constant 0 : index
    %39 = vector.load %arg12[%c0_23, %c0_24] : memref<8x128xf32, #tpu.memory_space<vmem>>, vector<8x128xf32>
    tpu.vector_store %arg12[%c0_23, %c0_24], %37 {strides = array<i32>} : memref<8x128xf32, #tpu.memory_space<vmem>>, vector<8x128xf32>,
    %c1_i32 = arith.constant 1 : i32
    %40 = arith.index_cast %c1_i32 : i32 to index
    %c0_25 = arith.constant 0 : index
    %c0_26 = arith.constant 0 : index
    %41 = vector.load %arg11[%40, %c0_25, %c0_26] : memref<8x8x512xf32, #tpu.memory_space<vmem>>, vector<1x8x512xf32>
    %42 = vector.shape_cast %41 : vector<1x8x512xf32> to vector<8x512xf32>
    %c0_27 = arith.constant 0 : index
    %c0_28 = arith.constant 0 : index
    %43 = vector.load %arg12[%c0_27, %c0_28] : memref<8x128xf32, #tpu.memory_space<vmem>>, vector<8x128xf32>
    %44 = arith.truncf %43 : vector<8x128xf32> to vector<8x128xbf16>
    %c0_29 = arith.constant 0 : index
    %c0_30 = arith.constant 0 : index
    %45 = vector.load %arg9[%c0_29, %c0_30] : memref<128x512xbf16, #tpu.memory_space<vmem>>, vector<128x512xbf16>
    %cst_31 = arith.constant dense<0.000000e+00> : vector<8x512xf32>
    %46 = tpu.matmul %44, %45, %cst_31 {dimension_numbers = #tpu.dot_dimension_numbers<[1], [0], [0], [1], [0, 0, 1, 1], [], []>} : vector<8x128xbf16>, vector<128x512xbf16>, vector<8x512xf32> -> vector<8x512xf32>
    %47 = arith.addf %42, %46 : vector<8x512xf32>
    %48 = vector.extract_strided_slice %47 {offsets = [0, 0], sizes = [8, 384], strides = [1, 1]} : vector<8x512xf32> to vector<8x384xf32>
    %49 = arith.negf %48 : vector<8x384xf32>
    %50 = math.exp %49 : vector<8x384xf32>
    %cst_32 = arith.constant 1.000000e+00 : f32
    %51 = vector.broadcast %cst_32 : f32 to vector<8x384xf32>
    %52 = arith.addf %51, %50 : vector<8x384xf32>
    %53 = arith.divf %51, %52 : vector<8x384xf32>
    %54 = vector.extract_strided_slice %53 {offsets = [0, 0], sizes = [8, 128], strides = [1, 1]} : vector<8x384xf32> to vector<8x128xf32>
    %55 = vector.extract_strided_slice %53 {offsets = [0, 128], sizes = [8, 128], strides = [1, 1]} : vector<8x384xf32> to vector<8x128xf32>
    %56 = vector.extract_strided_slice %53 {offsets = [0, 256], sizes = [8, 128], strides = [1, 1]} : vector<8x384xf32> to vector<8x128xf32>
    %57 = vector.extract_strided_slice %47 {offsets = [0, 384], sizes = [8, 128], strides = [1, 1]} : vector<8x512xf32> to vector<8x128xf32>
    %58 = math.tanh %57 : vector<8x128xf32>
    %c0_33 = arith.constant 0 : index
    %c0_34 = arith.constant 0 : index
    %59 = vector.load %arg13[%c0_33, %c0_34] : memref<8x128xf32, #tpu.memory_space<vmem>>, vector<8x128xf32>
    %60 = arith.mulf %55, %59 : vector<8x128xf32>
    %61 = arith.mulf %54, %58 : vector<8x128xf32>
    %62 = arith.addf %60, %61 : vector<8x128xf32>
    %63 = math.tanh %62 : vector<8x128xf32>
    %64 = arith.mulf %56, %63 : vector<8x128xf32>
    %c0_35 = arith.constant 0 : index
    %c0_36 = arith.constant 0 : index
    %65 = vector.load %arg13[%c0_35, %c0_36] : memref<8x128xf32, #tpu.memory_space<vmem>>, vector<8x128xf32>
    tpu.vector_store %arg13[%c0_35, %c0_36], %62 {strides = array<i32>} : memref<8x128xf32, #tpu.memory_space<vmem>>, vector<8x128xf32>,
    %c0_37 = arith.constant 0 : index
    %c0_38 = arith.constant 0 : index
    %66 = vector.load %arg12[%c0_37, %c0_38] : memref<8x128xf32, #tpu.memory_space<vmem>>, vector<8x128xf32>
    tpu.vector_store %arg12[%c0_37, %c0_38], %64 {strides = array<i32>} : memref<8x128xf32, #tpu.memory_space<vmem>>, vector<8x128xf32>,
    %c2_i32 = arith.constant 2 : i32
    %67 = arith.index_cast %c2_i32 : i32 to index
    %c0_39 = arith.constant 0 : index
    %c0_40 = arith.constant 0 : index
    %68 = vector.load %arg11[%67, %c0_39, %c0_40] : memref<8x8x512xf32, #tpu.memory_space<vmem>>, vector<1x8x512xf32>
    %69 = vector.shape_cast %68 : vector<1x8x512xf32> to vector<8x512xf32>
    %c0_41 = arith.constant 0 : index
    %c0_42 = arith.constant 0 : index
    %70 = vector.load %arg12[%c0_41, %c0_42] : memref<8x128xf32, #tpu.memory_space<vmem>>, vector<8x128xf32>
    %71 = arith.truncf %70 : vector<8x128xf32> to vector<8x128xbf16>
    %c0_43 = arith.constant 0 : index
    %c0_44 = arith.constant 0 : index
    %72 = vector.load %arg9[%c0_43, %c0_44] : memref<128x512xbf16, #tpu.memory_space<vmem>>, vector<128x512xbf16>
    %cst_45 = arith.constant dense<0.000000e+00> : vector<8x512xf32>
    %73 = tpu.matmul %71, %72, %cst_45 {dimension_numbers = #tpu.dot_dimension_numbers<[1], [0], [0], [1], [0, 0, 1, 1], [], []>} : vector<8x128xbf16>, vector<128x512xbf16>, vector<8x512xf32> -> vector<8x512xf32>
    %74 = arith.addf %69, %73 : vector<8x512xf32>
    %75 = vector.extract_strided_slice %74 {offsets = [0, 0], sizes = [8, 384], strides = [1, 1]} : vector<8x512xf32> to vector<8x384xf32>
    %76 = arith.negf %75 : vector<8x384xf32>
    %77 = math.exp %76 : vector<8x384xf32>
    %cst_46 = arith.constant 1.000000e+00 : f32
    %78 = vector.broadcast %cst_46 : f32 to vector<8x384xf32>
    %79 = arith.addf %78, %77 : vector<8x384xf32>
    %80 = arith.divf %78, %79 : vector<8x384xf32>
    %81 = vector.extract_strided_slice %80 {offsets = [0, 0], sizes = [8, 128], strides = [1, 1]} : vector<8x384xf32> to vector<8x128xf32>
    %82 = vector.extract_strided_slice %80 {offsets = [0, 128], sizes = [8, 128], strides = [1, 1]} : vector<8x384xf32> to vector<8x128xf32>
    %83 = vector.extract_strided_slice %80 {offsets = [0, 256], sizes = [8, 128], strides = [1, 1]} : vector<8x384xf32> to vector<8x128xf32>
    %84 = vector.extract_strided_slice %74 {offsets = [0, 384], sizes = [8, 128], strides = [1, 1]} : vector<8x512xf32> to vector<8x128xf32>
    %85 = math.tanh %84 : vector<8x128xf32>
    %c0_47 = arith.constant 0 : index
    %c0_48 = arith.constant 0 : index
    %86 = vector.load %arg13[%c0_47, %c0_48] : memref<8x128xf32, #tpu.memory_space<vmem>>, vector<8x128xf32>
    %87 = arith.mulf %82, %86 : vector<8x128xf32>
    %88 = arith.mulf %81, %85 : vector<8x128xf32>
    %89 = arith.addf %87, %88 : vector<8x128xf32>
    %90 = math.tanh %89 : vector<8x128xf32>
    %91 = arith.mulf %83, %90 : vector<8x128xf32>
    %c0_49 = arith.constant 0 : index
    %c0_50 = arith.constant 0 : index
    %92 = vector.load %arg13[%c0_49, %c0_50] : memref<8x128xf32, #tpu.memory_space<vmem>>, vector<8x128xf32>
    tpu.vector_store %arg13[%c0_49, %c0_50], %89 {strides = array<i32>} : memref<8x128xf32, #tpu.memory_space<vmem>>, vector<8x128xf32>,
    %c0_51 = arith.constant 0 : index
    %c0_52 = arith.constant 0 : index
    %93 = vector.load %arg12[%c0_51, %c0_52] : memref<8x128xf32, #tpu.memory_space<vmem>>, vector<8x128xf32>
    tpu.vector_store %arg12[%c0_51, %c0_52], %91 {strides = array<i32>} : memref<8x128xf32, #tpu.memory_space<vmem>>, vector<8x128xf32>,
    %c3_i32 = arith.constant 3 : i32
    %94 = arith.index_cast %c3_i32 : i32 to index
    %c0_53 = arith.constant 0 : index
    %c0_54 = arith.constant 0 : index
    %95 = vector.load %arg11[%94, %c0_53, %c0_54] : memref<8x8x512xf32, #tpu.memory_space<vmem>>, vector<1x8x512xf32>
    %96 = vector.shape_cast %95 : vector<1x8x512xf32> to vector<8x512xf32>
    %c0_55 = arith.constant 0 : index
    %c0_56 = arith.constant 0 : index
    %97 = vector.load %arg12[%c0_55, %c0_56] : memref<8x128xf32, #tpu.memory_space<vmem>>, vector<8x128xf32>
    %98 = arith.truncf %97 : vector<8x128xf32> to vector<8x128xbf16>
    %c0_57 = arith.constant 0 : index
    %c0_58 = arith.constant 0 : index
    %99 = vector.load %arg9[%c0_57, %c0_58] : memref<128x512xbf16, #tpu.memory_space<vmem>>, vector<128x512xbf16>
    %cst_59 = arith.constant dense<0.000000e+00> : vector<8x512xf32>
    %100 = tpu.matmul %98, %99, %cst_59 {dimension_numbers = #tpu.dot_dimension_numbers<[1], [0], [0], [1], [0, 0, 1, 1], [], []>} : vector<8x128xbf16>, vector<128x512xbf16>, vector<8x512xf32> -> vector<8x512xf32>
    %101 = arith.addf %96, %100 : vector<8x512xf32>
    %102 = vector.extract_strided_slice %101 {offsets = [0, 0], sizes = [8, 384], strides = [1, 1]} : vector<8x512xf32> to vector<8x384xf32>
    %103 = arith.negf %102 : vector<8x384xf32>
    %104 = math.exp %103 : vector<8x384xf32>
    %cst_60 = arith.constant 1.000000e+00 : f32
    %105 = vector.broadcast %cst_60 : f32 to vector<8x384xf32>
    %106 = arith.addf %105, %104 : vector<8x384xf32>
    %107 = arith.divf %105, %106 : vector<8x384xf32>
    %108 = vector.extract_strided_slice %107 {offsets = [0, 0], sizes = [8, 128], strides = [1, 1]} : vector<8x384xf32> to vector<8x128xf32>
    %109 = vector.extract_strided_slice %107 {offsets = [0, 128], sizes = [8, 128], strides = [1, 1]} : vector<8x384xf32> to vector<8x128xf32>
    %110 = vector.extract_strided_slice %107 {offsets = [0, 256], sizes = [8, 128], strides = [1, 1]} : vector<8x384xf32> to vector<8x128xf32>
    %111 = vector.extract_strided_slice %101 {offsets = [0, 384], sizes = [8, 128], strides = [1, 1]} : vector<8x512xf32> to vector<8x128xf32>
    %112 = math.tanh %111 : vector<8x128xf32>
    %c0_61 = arith.constant 0 : index
    %c0_62 = arith.constant 0 : index
    %113 = vector.load %arg13[%c0_61, %c0_62] : memref<8x128xf32, #tpu.memory_space<vmem>>, vector<8x128xf32>
    %114 = arith.mulf %109, %113 : vector<8x128xf32>
    %115 = arith.mulf %108, %112 : vector<8x128xf32>
    %116 = arith.addf %114, %115 : vector<8x128xf32>
    %117 = math.tanh %116 : vector<8x128xf32>
    %118 = arith.mulf %110, %117 : vector<8x128xf32>
    %c0_63 = arith.constant 0 : index
    %c0_64 = arith.constant 0 : index
    %119 = vector.load %arg13[%c0_63, %c0_64] : memref<8x128xf32, #tpu.memory_space<vmem>>, vector<8x128xf32>
    tpu.vector_store %arg13[%c0_63, %c0_64], %116 {strides = array<i32>} : memref<8x128xf32, #tpu.memory_space<vmem>>, vector<8x128xf32>,
    %c0_65 = arith.constant 0 : index
    %c0_66 = arith.constant 0 : index
    %120 = vector.load %arg12[%c0_65, %c0_66] : memref<8x128xf32, #tpu.memory_space<vmem>>, vector<8x128xf32>
    tpu.vector_store %arg12[%c0_65, %c0_66], %118 {strides = array<i32>} : memref<8x128xf32, #tpu.memory_space<vmem>>, vector<8x128xf32>,
    %c4_i32 = arith.constant 4 : i32
    %121 = arith.index_cast %c4_i32 : i32 to index
    %c0_67 = arith.constant 0 : index
    %c0_68 = arith.constant 0 : index
    %122 = vector.load %arg11[%121, %c0_67, %c0_68] : memref<8x8x512xf32, #tpu.memory_space<vmem>>, vector<1x8x512xf32>
    %123 = vector.shape_cast %122 : vector<1x8x512xf32> to vector<8x512xf32>
    %c0_69 = arith.constant 0 : index
    %c0_70 = arith.constant 0 : index
    %124 = vector.load %arg12[%c0_69, %c0_70] : memref<8x128xf32, #tpu.memory_space<vmem>>, vector<8x128xf32>
    %125 = arith.truncf %124 : vector<8x128xf32> to vector<8x128xbf16>
    %c0_71 = arith.constant 0 : index
    %c0_72 = arith.constant 0 : index
    %126 = vector.load %arg9[%c0_71, %c0_72] : memref<128x512xbf16, #tpu.memory_space<vmem>>, vector<128x512xbf16>
    %cst_73 = arith.constant dense<0.000000e+00> : vector<8x512xf32>
    %127 = tpu.matmul %125, %126, %cst_73 {dimension_numbers = #tpu.dot_dimension_numbers<[1], [0], [0], [1], [0, 0, 1, 1], [], []>} : vector<8x128xbf16>, vector<128x512xbf16>, vector<8x512xf32> -> vector<8x512xf32>
    %128 = arith.addf %123, %127 : vector<8x512xf32>
    %129 = vector.extract_strided_slice %128 {offsets = [0, 0], sizes = [8, 384], strides = [1, 1]} : vector<8x512xf32> to vector<8x384xf32>
    %130 = arith.negf %129 : vector<8x384xf32>
    %131 = math.exp %130 : vector<8x384xf32>
    %cst_74 = arith.constant 1.000000e+00 : f32
    %132 = vector.broadcast %cst_74 : f32 to vector<8x384xf32>
    %133 = arith.addf %132, %131 : vector<8x384xf32>
    %134 = arith.divf %132, %133 : vector<8x384xf32>
    %135 = vector.extract_strided_slice %134 {offsets = [0, 0], sizes = [8, 128], strides = [1, 1]} : vector<8x384xf32> to vector<8x128xf32>
    %136 = vector.extract_strided_slice %134 {offsets = [0, 128], sizes = [8, 128], strides = [1, 1]} : vector<8x384xf32> to vector<8x128xf32>
    %137 = vector.extract_strided_slice %134 {offsets = [0, 256], sizes = [8, 128], strides = [1, 1]} : vector<8x384xf32> to vector<8x128xf32>
    %138 = vector.extract_strided_slice %128 {offsets = [0, 384], sizes = [8, 128], strides = [1, 1]} : vector<8x512xf32> to vector<8x128xf32>
    %139 = math.tanh %138 : vector<8x128xf32>
    %c0_75 = arith.constant 0 : index
    %c0_76 = arith.constant 0 : index
    %140 = vector.load %arg13[%c0_75, %c0_76] : memref<8x128xf32, #tpu.memory_space<vmem>>, vector<8x128xf32>
    %141 = arith.mulf %136, %140 : vector<8x128xf32>
    %142 = arith.mulf %135, %139 : vector<8x128xf32>
    %143 = arith.addf %141, %142 : vector<8x128xf32>
    %144 = math.tanh %143 : vector<8x128xf32>
    %145 = arith.mulf %137, %144 : vector<8x128xf32>
    %c0_77 = arith.constant 0 : index
    %c0_78 = arith.constant 0 : index
    %146 = vector.load %arg13[%c0_77, %c0_78] : memref<8x128xf32, #tpu.memory_space<vmem>>, vector<8x128xf32>
    tpu.vector_store %arg13[%c0_77, %c0_78], %143 {strides = array<i32>} : memref<8x128xf32, #tpu.memory_space<vmem>>, vector<8x128xf32>,
    %c0_79 = arith.constant 0 : index
    %c0_80 = arith.constant 0 : index
    %147 = vector.load %arg12[%c0_79, %c0_80] : memref<8x128xf32, #tpu.memory_space<vmem>>, vector<8x128xf32>
    tpu.vector_store %arg12[%c0_79, %c0_80], %145 {strides = array<i32>} : memref<8x128xf32, #tpu.memory_space<vmem>>, vector<8x128xf32>,
    %c5_i32 = arith.constant 5 : i32
    %148 = arith.index_cast %c5_i32 : i32 to index
    %c0_81 = arith.constant 0 : index
    %c0_82 = arith.constant 0 : index
    %149 = vector.load %arg11[%148, %c0_81, %c0_82] : memref<8x8x512xf32, #tpu.memory_space<vmem>>, vector<1x8x512xf32>
    %150 = vector.shape_cast %149 : vector<1x8x512xf32> to vector<8x512xf32>
    %c0_83 = arith.constant 0 : index
    %c0_84 = arith.constant 0 : index
    %151 = vector.load %arg12[%c0_83, %c0_84] : memref<8x128xf32, #tpu.memory_space<vmem>>, vector<8x128xf32>
    %152 = arith.truncf %151 : vector<8x128xf32> to vector<8x128xbf16>
    %c0_85 = arith.constant 0 : index
    %c0_86 = arith.constant 0 : index
    %153 = vector.load %arg9[%c0_85, %c0_86] : memref<128x512xbf16, #tpu.memory_space<vmem>>, vector<128x512xbf16>
    %cst_87 = arith.constant dense<0.000000e+00> : vector<8x512xf32>
    %154 = tpu.matmul %152, %153, %cst_87 {dimension_numbers = #tpu.dot_dimension_numbers<[1], [0], [0], [1], [0, 0, 1, 1], [], []>} : vector<8x128xbf16>, vector<128x512xbf16>, vector<8x512xf32> -> vector<8x512xf32>
    %155 = arith.addf %150, %154 : vector<8x512xf32>
    %156 = vector.extract_strided_slice %155 {offsets = [0, 0], sizes = [8, 384], strides = [1, 1]} : vector<8x512xf32> to vector<8x384xf32>
    %157 = arith.negf %156 : vector<8x384xf32>
    %158 = math.exp %157 : vector<8x384xf32>
    %cst_88 = arith.constant 1.000000e+00 : f32
    %159 = vector.broadcast %cst_88 : f32 to vector<8x384xf32>
    %160 = arith.addf %159, %158 : vector<8x384xf32>
    %161 = arith.divf %159, %160 : vector<8x384xf32>
    %162 = vector.extract_strided_slice %161 {offsets = [0, 0], sizes = [8, 128], strides = [1, 1]} : vector<8x384xf32> to vector<8x128xf32>
    %163 = vector.extract_strided_slice %161 {offsets = [0, 128], sizes = [8, 128], strides = [1, 1]} : vector<8x384xf32> to vector<8x128xf32>
    %164 = vector.extract_strided_slice %161 {offsets = [0, 256], sizes = [8, 128], strides = [1, 1]} : vector<8x384xf32> to vector<8x128xf32>
    %165 = vector.extract_strided_slice %155 {offsets = [0, 384], sizes = [8, 128], strides = [1, 1]} : vector<8x512xf32> to vector<8x128xf32>
    %166 = math.tanh %165 : vector<8x128xf32>
    %c0_89 = arith.constant 0 : index
    %c0_90 = arith.constant 0 : index
    %167 = vector.load %arg13[%c0_89, %c0_90] : memref<8x128xf32, #tpu.memory_space<vmem>>, vector<8x128xf32>
    %168 = arith.mulf %163, %167 : vector<8x128xf32>
    %169 = arith.mulf %162, %166 : vector<8x128xf32>
    %170 = arith.addf %168, %169 : vector<8x128xf32>
    %171 = math.tanh %170 : vector<8x128xf32>
    %172 = arith.mulf %164, %171 : vector<8x128xf32>
    %c0_91 = arith.constant 0 : index
    %c0_92 = arith.constant 0 : index
    %173 = vector.load %arg13[%c0_91, %c0_92] : memref<8x128xf32, #tpu.memory_space<vmem>>, vector<8x128xf32>
    tpu.vector_store %arg13[%c0_91, %c0_92], %170 {strides = array<i32>} : memref<8x128xf32, #tpu.memory_space<vmem>>, vector<8x128xf32>,
    %c0_93 = arith.constant 0 : index
    %c0_94 = arith.constant 0 : index
    %174 = vector.load %arg12[%c0_93, %c0_94] : memref<8x128xf32, #tpu.memory_space<vmem>>, vector<8x128xf32>
    tpu.vector_store %arg12[%c0_93, %c0_94], %172 {strides = array<i32>} : memref<8x128xf32, #tpu.memory_space<vmem>>, vector<8x128xf32>,
    %c6_i32 = arith.constant 6 : i32
    %175 = arith.index_cast %c6_i32 : i32 to index
    %c0_95 = arith.constant 0 : index
    %c0_96 = arith.constant 0 : index
    %176 = vector.load %arg11[%175, %c0_95, %c0_96] : memref<8x8x512xf32, #tpu.memory_space<vmem>>, vector<1x8x512xf32>
    %177 = vector.shape_cast %176 : vector<1x8x512xf32> to vector<8x512xf32>
    %c0_97 = arith.constant 0 : index
    %c0_98 = arith.constant 0 : index
    %178 = vector.load %arg12[%c0_97, %c0_98] : memref<8x128xf32, #tpu.memory_space<vmem>>, vector<8x128xf32>
    %179 = arith.truncf %178 : vector<8x128xf32> to vector<8x128xbf16>
    %c0_99 = arith.constant 0 : index
    %c0_100 = arith.constant 0 : index
    %180 = vector.load %arg9[%c0_99, %c0_100] : memref<128x512xbf16, #tpu.memory_space<vmem>>, vector<128x512xbf16>
    %cst_101 = arith.constant dense<0.000000e+00> : vector<8x512xf32>
    %181 = tpu.matmul %179, %180, %cst_101 {dimension_numbers = #tpu.dot_dimension_numbers<[1], [0], [0], [1], [0, 0, 1, 1], [], []>} : vector<8x128xbf16>, vector<128x512xbf16>, vector<8x512xf32> -> vector<8x512xf32>
    %182 = arith.addf %177, %181 : vector<8x512xf32>
    %183 = vector.extract_strided_slice %182 {offsets = [0, 0], sizes = [8, 384], strides = [1, 1]} : vector<8x512xf32> to vector<8x384xf32>
    %184 = arith.negf %183 : vector<8x384xf32>
    %185 = math.exp %184 : vector<8x384xf32>
    %cst_102 = arith.constant 1.000000e+00 : f32
    %186 = vector.broadcast %cst_102 : f32 to vector<8x384xf32>
    %187 = arith.addf %186, %185 : vector<8x384xf32>
    %188 = arith.divf %186, %187 : vector<8x384xf32>
    %189 = vector.extract_strided_slice %188 {offsets = [0, 0], sizes = [8, 128], strides = [1, 1]} : vector<8x384xf32> to vector<8x128xf32>
    %190 = vector.extract_strided_slice %188 {offsets = [0, 128], sizes = [8, 128], strides = [1, 1]} : vector<8x384xf32> to vector<8x128xf32>
    %191 = vector.extract_strided_slice %188 {offsets = [0, 256], sizes = [8, 128], strides = [1, 1]} : vector<8x384xf32> to vector<8x128xf32>
    %192 = vector.extract_strided_slice %182 {offsets = [0, 384], sizes = [8, 128], strides = [1, 1]} : vector<8x512xf32> to vector<8x128xf32>
    %193 = math.tanh %192 : vector<8x128xf32>
    %c0_103 = arith.constant 0 : index
    %c0_104 = arith.constant 0 : index
    %194 = vector.load %arg13[%c0_103, %c0_104] : memref<8x128xf32, #tpu.memory_space<vmem>>, vector<8x128xf32>
    %195 = arith.mulf %190, %194 : vector<8x128xf32>
    %196 = arith.mulf %189, %193 : vector<8x128xf32>
    %197 = arith.addf %195, %196 : vector<8x128xf32>
    %198 = math.tanh %197 : vector<8x128xf32>
    %199 = arith.mulf %191, %198 : vector<8x128xf32>
    %c0_105 = arith.constant 0 : index
    %c0_106 = arith.constant 0 : index
    %200 = vector.load %arg13[%c0_105, %c0_106] : memref<8x128xf32, #tpu.memory_space<vmem>>, vector<8x128xf32>
    tpu.vector_store %arg13[%c0_105, %c0_106], %197 {strides = array<i32>} : memref<8x128xf32, #tpu.memory_space<vmem>>, vector<8x128xf32>,
    %c0_107 = arith.constant 0 : index
    %c0_108 = arith.constant 0 : index
    %201 = vector.load %arg12[%c0_107, %c0_108] : memref<8x128xf32, #tpu.memory_space<vmem>>, vector<8x128xf32>
    tpu.vector_store %arg12[%c0_107, %c0_108], %199 {strides = array<i32>} : memref<8x128xf32, #tpu.memory_space<vmem>>, vector<8x128xf32>,
    %c7_i32 = arith.constant 7 : i32
    %202 = arith.index_cast %c7_i32 : i32 to index
    %c0_109 = arith.constant 0 : index
    %c0_110 = arith.constant 0 : index
    %203 = vector.load %arg11[%202, %c0_109, %c0_110] : memref<8x8x512xf32, #tpu.memory_space<vmem>>, vector<1x8x512xf32>
    %204 = vector.shape_cast %203 : vector<1x8x512xf32> to vector<8x512xf32>
    %c0_111 = arith.constant 0 : index
    %c0_112 = arith.constant 0 : index
    %205 = vector.load %arg12[%c0_111, %c0_112] : memref<8x128xf32, #tpu.memory_space<vmem>>, vector<8x128xf32>
    %206 = arith.truncf %205 : vector<8x128xf32> to vector<8x128xbf16>
    %c0_113 = arith.constant 0 : index
    %c0_114 = arith.constant 0 : index
    %207 = vector.load %arg9[%c0_113, %c0_114] : memref<128x512xbf16, #tpu.memory_space<vmem>>, vector<128x512xbf16>
    %cst_115 = arith.constant dense<0.000000e+00> : vector<8x512xf32>
    %208 = tpu.matmul %206, %207, %cst_115 {dimension_numbers = #tpu.dot_dimension_numbers<[1], [0], [0], [1], [0, 0, 1, 1], [], []>} : vector<8x128xbf16>, vector<128x512xbf16>, vector<8x512xf32> -> vector<8x512xf32>
    %209 = arith.addf %204, %208 : vector<8x512xf32>
    %210 = vector.extract_strided_slice %209 {offsets = [0, 0], sizes = [8, 384], strides = [1, 1]} : vector<8x512xf32> to vector<8x384xf32>
    %211 = arith.negf %210 : vector<8x384xf32>
    %212 = math.exp %211 : vector<8x384xf32>
    %cst_116 = arith.constant 1.000000e+00 : f32
    %213 = vector.broadcast %cst_116 : f32 to vector<8x384xf32>
    %214 = arith.addf %213, %212 : vector<8x384xf32>
    %215 = arith.divf %213, %214 : vector<8x384xf32>
    %216 = vector.extract_strided_slice %215 {offsets = [0, 0], sizes = [8, 128], strides = [1, 1]} : vector<8x384xf32> to vector<8x128xf32>
    %217 = vector.extract_strided_slice %215 {offsets = [0, 128], sizes = [8, 128], strides = [1, 1]} : vector<8x384xf32> to vector<8x128xf32>
    %218 = vector.extract_strided_slice %215 {offsets = [0, 256], sizes = [8, 128], strides = [1, 1]} : vector<8x384xf32> to vector<8x128xf32>
    %219 = vector.extract_strided_slice %209 {offsets = [0, 384], sizes = [8, 128], strides = [1, 1]} : vector<8x512xf32> to vector<8x128xf32>
    %220 = math.tanh %219 : vector<8x128xf32>
    %c0_117 = arith.constant 0 : index
    %c0_118 = arith.constant 0 : index
    %221 = vector.load %arg13[%c0_117, %c0_118] : memref<8x128xf32, #tpu.memory_space<vmem>>, vector<8x128xf32>
    %222 = arith.mulf %217, %221 : vector<8x128xf32>
    %223 = arith.mulf %216, %220 : vector<8x128xf32>
    %224 = arith.addf %222, %223 : vector<8x128xf32>
    %225 = math.tanh %224 : vector<8x128xf32>
    %226 = arith.mulf %218, %225 : vector<8x128xf32>
    %c0_119 = arith.constant 0 : index
    %c0_120 = arith.constant 0 : index
    %227 = vector.load %arg13[%c0_119, %c0_120] : memref<8x128xf32, #tpu.memory_space<vmem>>, vector<8x128xf32>
    tpu.vector_store %arg13[%c0_119, %c0_120], %224 {strides = array<i32>} : memref<8x128xf32, #tpu.memory_space<vmem>>, vector<8x128xf32>,
    %c0_121 = arith.constant 0 : index
    %c0_122 = arith.constant 0 : index
    %228 = vector.load %arg12[%c0_121, %c0_122] : memref<8x128xf32, #tpu.memory_space<vmem>>, vector<8x128xf32>
    tpu.vector_store %arg12[%c0_121, %c0_122], %226 {strides = array<i32>} : memref<8x128xf32, #tpu.memory_space<vmem>>, vector<8x128xf32>,
    %c8_i32 = arith.constant 8 : i32
    %c0_i32_123 = arith.constant 0 : i32
    %229 = arith.cmpi eq, %arg0, %c0_i32_123 : i32
    %230 = arith.extui %229 : i1 to i32
    %c0_i32_124 = arith.constant 0 : i32
    %231 = arith.cmpi ne, %230, %c0_i32_124 : i32
    scf.if %231 {
      %c0_125 = arith.constant 0 : index
      %c0_126 = arith.constant 0 : index
      %232 = vector.load %arg12[%c0_125, %c0_126] : memref<8x128xf32, #tpu.memory_space<vmem>>, vector<8x128xf32>
      %233 = arith.truncf %232 : vector<8x128xf32> to vector<8x128xbf16>
      %c0_127 = arith.constant 0 : index
      %c0_128 = arith.constant 0 : index
      %234 = vector.load %arg10[%c0_127, %c0_128] : memref<128x128xbf16, #tpu.memory_space<vmem>>, vector<128x128xbf16>
      %cst_129 = arith.constant dense<0.000000e+00> : vector<8x128xf32>
      %235 = tpu.matmul %233, %234, %cst_129 {dimension_numbers = #tpu.dot_dimension_numbers<[1], [0], [0], [1], [0, 0, 1, 1], [], []>} : vector<8x128xbf16>, vector<128x128xbf16>, vector<8x128xf32> -> vector<8x128xf32>
      %c0_130 = arith.constant 0 : index
      %c0_131 = arith.constant 0 : index
      %236 = vector.load %arg6[%c0_130, %c0_131] : memref<1x128xf32, #tpu.memory_space<vmem>>, vector<1x128xf32>
      %237 = vector.broadcast %236 : vector<1x128xf32> to vector<8x128xf32>
      %238 = arith.addf %235, %237 : vector<8x128xf32>
      %c0_132 = arith.constant 0 : index
      %c0_133 = arith.constant 0 : index
      %239 = vector.load %arg7[%c0_132, %c0_133] : memref<8x128xf32, #tpu.memory_space<vmem>>, vector<8x128xf32>
      tpu.vector_store %arg7[%c0_132, %c0_133], %238 {strides = array<i32>} : memref<8x128xf32, #tpu.memory_space<vmem>>, vector<8x128xf32>,
    } else {
    }
    return
  }
  func.func @transform_0(%arg0: i32) -> (i32, i32, i32) {
    %c0_i32 = arith.constant 0 : i32
    %c0_i32_0 = arith.constant 0 : i32
    %c0_i32_1 = arith.constant 0 : i32
    return %arg0, %c0_i32, %c0_i32_0 : i32, i32, i32
  }
  func.func @transform_1(%arg0: i32) -> (i32, i32) {
    %c0_i32 = arith.constant 0 : i32
    %c0_i32_0 = arith.constant 0 : i32
    %c0_i32_1 = arith.constant 0 : i32
    return %c0_i32, %c0_i32_0 : i32, i32
  }
  func.func @transform_5(%arg0: i32) -> (i32, i32) {
    %c0_i32 = arith.constant 0 : i32
    %c0_i32_0 = arith.constant 0 : i32
    %c0_i32_1 = arith.constant 0 : i32
    return %c0_i32, %c0_i32_0 : i32, i32
  }
  func.func @transform_6(%arg0: i32) -> (i32, i32) {
    %c0_i32 = arith.constant 0 : i32
    %c0_i32_0 = arith.constant 0 : i32
    %c0_i32_1 = arith.constant 0 : i32
    return %c0_i32, %c0_i32_0 : i32, i32
  }
}

</mosaic_0001>

<llo_original>
// kernel: lstm_model_forward.1
$region0: #{lstm_model_forward.1}
  #allocation0 [shape = 'u32[]', space=smem, size = 0x4, offset = 0x4, fixed_abs, tag = 'smem constant byte address 0x4 - core index']
  #allocation1 [shape = 'u32[72,128]{1,0:T(1,128)}', space=vmem, size = 0x9000, scoped, tag = 'internal scratch']
  #allocation2 [shape = 'bf16[128,512]{1,0:T(8,128)(2,1)}', space=vmem, size = 0x20000, scoped, tag = 'scratch operand']
  #allocation3 [shape = 'bf16[128,512]{1,0:T(8,128)(2,1)}', space=vmem, size = 0x20000, scoped, tag = 'scratch operand']
  #allocation4 [shape = 'bf16[128,128]{1,0:T(8,128)(2,1)}', space=vmem, size = 0x8000, scoped, tag = 'scratch operand']
  #allocation5 [shape = 'f32[8,8,512]{2,1,0:T(8,128)}', space=vmem, size = 0x20000, scoped, tag = 'scratch operand']
  #allocation6 [shape = 'f32[8,128]{1,0:T(8,128)}', space=vmem, size = 0x1000, scoped, tag = 'scratch operand']
  #allocation7 [shape = 'f32[8,128]{1,0:T(8,128)}', space=vmem, size = 0x1000, scoped, tag = 'scratch operand']
  #allocation8 [shape = 's32[3]{0}', space=sflag, size = 0xc, scoped, tag = 'scratch operand']
  #allocation9 [shape = 's32[]', space=sflag, size = 0x4, offset = 0, fixed_abs, tag = 'sflag constant byte address 0x0 - dummy sync flag']
  #allocation10 [shape = 's32[]', space=sflag, size = 0x4, offset = 0, fixed_abs, tag = 'sflag constant byte address 0x0 - dummy sync flag']
  #allocation11 [shape = 's32[]', space=sflag, size = 0x4, offset = 0, fixed_abs, tag = 'sflag constant byte address 0x0 - dummy sync flag']
  %s0 = inlined_call_operand.vmem [shape: f32[8,8,128], index: 0, kind: input, shape index: {}]
  %s1 = inlined_call_operand.vmem [shape: f32[1,512], index: 1, kind: input, shape index: {}]
  %s2 = inlined_call_operand.vmem [shape: bf16[128,512], index: 2, kind: input, shape index: {}]
  %s3 = inlined_call_operand.vmem [shape: bf16[128,512], index: 3, kind: input, shape index: {}]
  %s4 = inlined_call_operand.vmem [shape: bf16[128,128], index: 4, kind: input, shape index: {}]
  %s5 = inlined_call_operand.vmem [shape: f32[1,128], index: 5, kind: input, shape index: {}]
  %s6 = inlined_call_operand.vmem [shape: f32[8,128], index: 6, kind: output, shape index: {}]
  %s7 = sld [smem:[#allocation0]]
  $region87: #{lstm_model_forward.1} parent=0
    _
  %s9 = ssub.s32 1, %s7
  %s10 = scalar_select 0, %s9, %s7
  // Predicated region
  $region2: #{lstm_model_forward.1} parent=0 // pred_check
    _
  $region3: #{lstm_model_forward.1} parent=0 // pred_check_branch
    %12 = sbr.rel (0) target = $region5
  $region4: #{lstm_model_forward.1} parent=0 // pred_region
    _
  $region5: #{lstm_model_forward.1} parent=0 // pred_fallthru
    _
  // Predicated region
  $region6: #{lstm_model_forward.1} parent=0 // pred_check
    _
  $region7: #{lstm_model_forward.1} parent=0 // pred_check_branch
    %14 = sbr.rel (0) target = $region9
  $region8: #{lstm_model_forward.1} parent=0 // pred_region
    _
  $region9: #{lstm_model_forward.1} parent=0 // pred_fallthru
    _
  // Predicated region
  $region10: #{lstm_model_forward.1} parent=0 // pred_check
    _
  $region11: #{lstm_model_forward.1} parent=0 // pred_check_branch
    %16 = sbr.rel (0) target = $region13
  $region12: #{lstm_model_forward.1} parent=0 // pred_region
    _
  $region13: #{lstm_model_forward.1} parent=0 // pred_fallthru
    _
  %p17 = scmp.eq.s32.totalorder 0, 0
  // Predicated region
  $region14: #{lstm_model_forward.1} parent=0 // pred_check
    %p18 = pneg %p17
  $region15: #{lstm_model_forward.1} parent=0 // pred_check_branch
    %20 = sbr.rel (%p18) target = $region17
  $region16: #{lstm_model_forward.1} parent=0 // pred_region
    // Predicated region
    $region18: #{lstm_model_forward.1} parent=16 // pred_check
      _
    $region19: #{lstm_model_forward.1} parent=16 // pred_check_branch
      %22 = sbr.rel (0) target = $region21
    $region20: #{lstm_model_forward.1} parent=16 // pred_region
      loop: start=0, step=1, limit=1
      $region22: #{lstm_model_forward.1} parent=20 // loop_pre_header
        _
      $region23: #{lstm_model_forward.1} parent=20 // loop_header
        %s24 = sphi 0, %s28
        %p25 = scmp.ge.s32.totalorder %s24, 1
        %s29 = sphi %s2, %s2
        %s30 = sphi [#allocation2], [#allocation2]
      $region24: #{lstm_model_forward.1} parent=20 // loop_header_branch
        %27 = sbr.rel (%p25) target = $region28
      $region25: #{lstm_model_forward.1} parent=20 // loop_body
        %v31 = vld [vmem:[%s29] sm:$0xff]
        %32 = vst [vmem:[%s30] sm:$0xff] %v31
        %v33 = vld [vmem:[%s29 + $0x8] sm:$0xff]
        %34 = vst [vmem:[%s30 + $0x8] sm:$0xff] %v33
        %v35 = vld [vmem:[%s29 + $0x10] sm:$0xff]
        %36 = vst [vmem:[%s30 + $0x10] sm:$0xff] %v35
        %v37 = vld [vmem:[%s29 + $0x18] sm:$0xff]
        %38 = vst [vmem:[%s30 + $0x18] sm:$0xff] %v37
        %v39 = vld [vmem:[%s29 + $0x20] sm:$0xff]
        %40 = vst [vmem:[%s30 + $0x20] sm:$0xff] %v39
        %v41 = vld [vmem:[%s29 + $0x28] sm:$0xff]
        %42 = vst [vmem:[%s30 + $0x28] sm:$0xff] %v41
        %v43 = vld [vmem:[%s29 + $0x30] sm:$0xff]
        %44 = vst [vmem:[%s30 + $0x30] sm:$0xff] %v43
        %v45 = vld [vmem:[%s29 + $0x38] sm:$0xff]
        %46 = vst [vmem:[%s30 + $0x38] sm:$0xff] %v45
        %v47 = vld [vmem:[%s29 + $0x40] sm:$0xff]
        %48 = vst [vmem:[%s30 + $0x40] sm:$0xff] %v47
        %v49 = vld [vmem:[%s29 + $0x48] sm:$0xff]
        %50 = vst [vmem:[%s30 + $0x48] sm:$0xff] %v49
        %v51 = vld [vmem:[%s29 + $0x50] sm:$0xff]
        %52 = vst [vmem:[%s30 + $0x50] sm:$0xff] %v51
        %v53 = vld [vmem:[%s29 + $0x58] sm:$0xff]
        %54 = vst [vmem:[%s30 + $0x58] sm:$0xff] %v53
        %v55 = vld [vmem:[%s29 + $0x60] sm:$0xff]
        %56 = vst [vmem:[%s30 + $0x60] sm:$0xff] %v55
        %v57 = vld [vmem:[%s29 + $0x68] sm:$0xff]
        %58 = vst [vmem:[%s30 + $0x68] sm:$0xff] %v57
        %v59 = vld [vmem:[%s29 + $0x70] sm:$0xff]
        %60 = vst [vmem:[%s30 + $0x70] sm:$0xff] %v59
        %v61 = vld [vmem:[%s29 + $0x78] sm:$0xff]
        %62 = vst [vmem:[%s30 + $0x78] sm:$0xff] %v61
        %v63 = vld [vmem:[%s29 + $0x80] sm:$0xff]
        %64 = vst [vmem:[%s30 + $0x80] sm:$0xff] %v63
        %v65 = vld [vmem:[%s29 + $0x88] sm:$0xff]
        %66 = vst [vmem:[%s30 + $0x88] sm:$0xff] %v65
        %v67 = vld [vmem:[%s29 + $0x90] sm:$0xff]
        %68 = vst [vmem:[%s30 + $0x90] sm:$0xff] %v67
        %v69 = vld [vmem:[%s29 + $0x98] sm:$0xff]
        %70 = vst [vmem:[%s30 + $0x98] sm:$0xff] %v69
        %v71 = vld [vmem:[%s29 + $0xa0] sm:$0xff]
        %72 = vst [vmem:[%s30 + $0xa0] sm:$0xff] %v71
        %v73 = vld [vmem:[%s29 + $0xa8] sm:$0xff]
        %74 = vst [vmem:[%s30 + $0xa8] sm:$0xff] %v73
        %v75 = vld [vmem:[%s29 + $0xb0] sm:$0xff]
        %76 = vst [vmem:[%s30 + $0xb0] sm:$0xff] %v75
        %v77 = vld [vmem:[%s29 + $0xb8] sm:$0xff]
        %78 = vst [vmem:[%s30 + $0xb8] sm:$0xff] %v77
        %v79 = vld [vmem:[%s29 + $0xc0] sm:$0xff]
        %80 = vst [vmem:[%s30 + $0xc0] sm:$0xff] %v79
        %v81 = vld [vmem:[%s29 + $0xc8] sm:$0xff]
        %82 = vst [vmem:[%s30 + $0xc8] sm:$0xff] %v81
        %v83 = vld [vmem:[%s29 + $0xd0] sm:$0xff]
        %84 = vst [vmem:[%s30 + $0xd0] sm:$0xff] %v83
        %v85 = vld [vmem:[%s29 + $0xd8] sm:$0xff]
        %86 = vst [vmem:[%s30 + $0xd8] sm:$0xff] %v85
        %v87 = vld [vmem:[%s29 + $0xe0] sm:$0xff]
        %88 = vst [vmem:[%s30 + $0xe0] sm:$0xff] %v87
        %v89 = vld [vmem:[%s29 + $0xe8] sm:$0xff]
        %90 = vst [vmem:[%s30 + $0xe8] sm:$0xff] %v89
        %v91 = vld [vmem:[%s29 + $0xf0] sm:$0xff]
        %92 = vst [vmem:[%s30 + $0xf0] sm:$0xff] %v91
        %v93 = vld [vmem:[%s29 + $0xf8] sm:$0xff]
        %94 = vst [vmem:[%s30 + $0xf8] sm:$0xff] %v93
      $region26: #{lstm_model_forward.1} parent=20 // loop_footer
        %s28 = sadd.s32 1, %s24
      $region27: #{lstm_model_forward.1} parent=20 // loop_footer_branch
        %23 = sbr.rel target = $region23
      $region28: #{lstm_model_forward.1} parent=20 // loop_exit
        _
    $region21: #{lstm_model_forward.1} parent=16 // pred_fallthru
      _
    // Predicated region
    $region29: #{lstm_model_forward.1} parent=16 // pred_check
      _
    $region30: #{lstm_model_forward.1} parent=16 // pred_check_branch
      %96 = sbr.rel target = $region32
    $region31: #{lstm_model_forward.1} parent=16 // pred_region
      _
    $region32: #{lstm_model_forward.1} parent=16 // pred_fallthru
      _
    // Predicated region
    $region33: #{lstm_model_forward.1} parent=16 // pred_check
      _
    $region34: #{lstm_model_forward.1} parent=16 // pred_check_branch
      %99 = sbr.rel (0) target = $region36
    $region35: #{lstm_model_forward.1} parent=16 // pred_region
      %100 = vsyncadd [#allocation8], 4096
    $region36: #{lstm_model_forward.1} parent=16 // pred_fallthru
      _
    %s101 = scalar_lea.sflag [#allocation8], 1
    // Predicated region
    $region37: #{lstm_model_forward.1} parent=16 // pred_check
      _
    $region38: #{lstm_model_forward.1} parent=16 // pred_check_branch
      %103 = sbr.rel (0) target = $region40
    $region39: #{lstm_model_forward.1} parent=16 // pred_region
      loop: start=0, step=1, limit=1
      $region41: #{lstm_model_forward.1} parent=39 // loop_pre_header
        _
      $region42: #{lstm_model_forward.1} parent=39 // loop_header
        %s105 = sphi 0, %s109
        %p106 = scmp.ge.s32.totalorder %s105, 1
        %s110 = sphi %s3, %s3
        %s111 = sphi [#allocation3], [#allocation3]
      $region43: #{lstm_model_forward.1} parent=39 // loop_header_branch
        %108 = sbr.rel (%p106) target = $region47
      $region44: #{lstm_model_forward.1} parent=39 // loop_body
        %v112 = vld [vmem:[%s110] sm:$0xff]
        %113 = vst [vmem:[%s111] sm:$0xff] %v112
        %v114 = vld [vmem:[%s110 + $0x8] sm:$0xff]
        %115 = vst [vmem:[%s111 + $0x8] sm:$0xff] %v114
        %v116 = vld [vmem:[%s110 + $0x10] sm:$0xff]
        %117 = vst [vmem:[%s111 + $0x10] sm:$0xff] %v116
        %v118 = vld [vmem:[%s110 + $0x18] sm:$0xff]
        %119 = vst [vmem:[%s111 + $0x18] sm:$0xff] %v118
        %v120 = vld [vmem:[%s110 + $0x20] sm:$0xff]
        %121 = vst [vmem:[%s111 + $0x20] sm:$0xff] %v120
        %v122 = vld [vmem:[%s110 + $0x28] sm:$0xff]
        %123 = vst [vmem:[%s111 + $0x28] sm:$0xff] %v122
        %v124 = vld [vmem:[%s110 + $0x30] sm:$0xff]
        %125 = vst [vmem:[%s111 + $0x30] sm:$0xff] %v124
        %v126 = vld [vmem:[%s110 + $0x38] sm:$0xff]
        %127 = vst [vmem:[%s111 + $0x38] sm:$0xff] %v126
        %v128 = vld [vmem:[%s110 + $0x40] sm:$0xff]
        %129 = vst [vmem:[%s111 + $0x40] sm:$0xff] %v128
        %v130 = vld [vmem:[%s110 + $0x48] sm:$0xff]
        %131 = vst [vmem:[%s111 + $0x48] sm:$0xff] %v130
        %v132 = vld [vmem:[%s110 + $0x50] sm:$0xff]
        %133 = vst [vmem:[%s111 + $0x50] sm:$0xff] %v132
        %v134 = vld [vmem:[%s110 + $0x58] sm:$0xff]
        %135 = vst [vmem:[%s111 + $0x58] sm:$0xff] %v134
        %v136 = vld [vmem:[%s110 + $0x60] sm:$0xff]
        %137 = vst [vmem:[%s111 + $0x60] sm:$0xff] %v136
        %v138 = vld [vmem:[%s110 + $0x68] sm:$0xff]
        %139 = vst [vmem:[%s111 + $0x68] sm:$0xff] %v138
        %v140 = vld [vmem:[%s110 + $0x70] sm:$0xff]
        %141 = vst [vmem:[%s111 + $0x70] sm:$0xff] %v140
        %v142 = vld [vmem:[%s110 + $0x78] sm:$0xff]
        %143 = vst [vmem:[%s111 + $0x78] sm:$0xff] %v142
        %v144 = vld [vmem:[%s110 + $0x80] sm:$0xff]
        %145 = vst [vmem:[%s111 + $0x80] sm:$0xff] %v144
        %v146 = vld [vmem:[%s110 + $0x88] sm:$0xff]
        %147 = vst [vmem:[%s111 + $0x88] sm:$0xff] %v146
        %v148 = vld [vmem:[%s110 + $0x90] sm:$0xff]
        %149 = vst [vmem:[%s111 + $0x90] sm:$0xff] %v148
        %v150 = vld [vmem:[%s110 + $0x98] sm:$0xff]
        %151 = vst [vmem:[%s111 + $0x98] sm:$0xff] %v150
        %v152 = vld [vmem:[%s110 + $0xa0] sm:$0xff]
        %153 = vst [vmem:[%s111 + $0xa0] sm:$0xff] %v152
        %v154 = vld [vmem:[%s110 + $0xa8] sm:$0xff]
        %155 = vst [vmem:[%s111 + $0xa8] sm:$0xff] %v154
        %v156 = vld [vmem:[%s110 + $0xb0] sm:$0xff]
        %157 = vst [vmem:[%s111 + $0xb0] sm:$0xff] %v156
        %v158 = vld [vmem:[%s110 + $0xb8] sm:$0xff]
        %159 = vst [vmem:[%s111 + $0xb8] sm:$0xff] %v158
        %v160 = vld [vmem:[%s110 + $0xc0] sm:$0xff]
        %161 = vst [vmem:[%s111 + $0xc0] sm:$0xff] %v160
        %v162 = vld [vmem:[%s110 + $0xc8] sm:$0xff]
        %163 = vst [vmem:[%s111 + $0xc8] sm:$0xff] %v162
        %v164 = vld [vmem:[%s110 + $0xd0] sm:$0xff]
        %165 = vst [vmem:[%s111 + $0xd0] sm:$0xff] %v164
        %v166 = vld [vmem:[%s110 + $0xd8] sm:$0xff]
        %167 = vst [vmem:[%s111 + $0xd8] sm:$0xff] %v166
        %v168 = vld [vmem:[%s110 + $0xe0] sm:$0xff]
        %169 = vst [vmem:[%s111 + $0xe0] sm:$0xff] %v168
        %v170 = vld [vmem:[%s110 + $0xe8] sm:$0xff]
        %171 = vst [vmem:[%s111 + $0xe8] sm:$0xff] %v170
        %v172 = vld [vmem:[%s110 + $0xf0] sm:$0xff]
        %173 = vst [vmem:[%s111 + $0xf0] sm:$0xff] %v172
        %v174 = vld [vmem:[%s110 + $0xf8] sm:$0xff]
        %175 = vst [vmem:[%s111 + $0xf8] sm:$0xff] %v174
      $region45: #{lstm_model_forward.1} parent=39 // loop_footer
        %s109 = sadd.s32 1, %s105
      $region46: #{lstm_model_forward.1} parent=39 // loop_footer_branch
        %104 = sbr.rel target = $region42
      $region47: #{lstm_model_forward.1} parent=39 // loop_exit
        _
    $region40: #{lstm_model_forward.1} parent=16 // pred_fallthru
      _
    // Predicated region
    $region48: #{lstm_model_forward.1} parent=16 // pred_check
      _
    $region49: #{lstm_model_forward.1} parent=16 // pred_check_branch
      %177 = sbr.rel target = $region51
    $region50: #{lstm_model_forward.1} parent=16 // pred_region
      _
    $region51: #{lstm_model_forward.1} parent=16 // pred_fallthru
      _
    // Predicated region
    $region52: #{lstm_model_forward.1} parent=16 // pred_check
      _
    $region53: #{lstm_model_forward.1} parent=16 // pred_check_branch
      %180 = sbr.rel (0) target = $region55
    $region54: #{lstm_model_forward.1} parent=16 // pred_region
      %181 = vsyncadd %s101, 4096
    $region55: #{lstm_model_forward.1} parent=16 // pred_fallthru
      _
    %s182 = scalar_lea.sflag [#allocation8], 2
    // Predicated region
    $region56: #{lstm_model_forward.1} parent=16 // pred_check
      _
    $region57: #{lstm_model_forward.1} parent=16 // pred_check_branch
      %184 = sbr.rel (0) target = $region59
    $region58: #{lstm_model_forward.1} parent=16 // pred_region
      loop: start=0, step=1, limit=1
      $region60: #{lstm_model_forward.1} parent=58 // loop_pre_header
        _
      $region61: #{lstm_model_forward.1} parent=58 // loop_header
        %s186 = sphi 0, %s190
        %p187 = scmp.ge.s32.totalorder %s186, 1
        %s191 = sphi %s4, %s4
        %s192 = sphi [#allocation4], [#allocation4]
      $region62: #{lstm_model_forward.1} parent=58 // loop_header_branch
        %189 = sbr.rel (%p187) target = $region66
      $region63: #{lstm_model_forward.1} parent=58 // loop_body
        %v193 = vld [vmem:[%s191] sm:$0xff]
        %194 = vst [vmem:[%s192] sm:$0xff] %v193
        %v195 = vld [vmem:[%s191 + $0x8] sm:$0xff]
        %196 = vst [vmem:[%s192 + $0x8] sm:$0xff] %v195
        %v197 = vld [vmem:[%s191 + $0x10] sm:$0xff]
        %198 = vst [vmem:[%s192 + $0x10] sm:$0xff] %v197
        %v199 = vld [vmem:[%s191 + $0x18] sm:$0xff]
        %200 = vst [vmem:[%s192 + $0x18] sm:$0xff] %v199
        %v201 = vld [vmem:[%s191 + $0x20] sm:$0xff]
        %202 = vst [vmem:[%s192 + $0x20] sm:$0xff] %v201
        %v203 = vld [vmem:[%s191 + $0x28] sm:$0xff]
        %204 = vst [vmem:[%s192 + $0x28] sm:$0xff] %v203
        %v205 = vld [vmem:[%s191 + $0x30] sm:$0xff]
        %206 = vst [vmem:[%s192 + $0x30] sm:$0xff] %v205
        %v207 = vld [vmem:[%s191 + $0x38] sm:$0xff]
        %208 = vst [vmem:[%s192 + $0x38] sm:$0xff] %v207
      $region64: #{lstm_model_forward.1} parent=58 // loop_footer
        %s190 = sadd.s32 1, %s186
      $region65: #{lstm_model_forward.1} parent=58 // loop_footer_branch
        %185 = sbr.rel target = $region61
      $region66: #{lstm_model_forward.1} parent=58 // loop_exit
        _
    $region59: #{lstm_model_forward.1} parent=16 // pred_fallthru
      _
    // Predicated region
    $region67: #{lstm_model_forward.1} parent=16 // pred_check
      _
    $region68: #{lstm_model_forward.1} parent=16 // pred_check_branch
      %210 = sbr.rel target = $region70
    $region69: #{lstm_model_forward.1} parent=16 // pred_region
      _
    $region70: #{lstm_model_forward.1} parent=16 // pred_fallthru
      _
    // Predicated region
    $region71: #{lstm_model_forward.1} parent=16 // pred_check
      _
    $region72: #{lstm_model_forward.1} parent=16 // pred_check_branch
      %213 = sbr.rel (0) target = $region74
    $region73: #{lstm_model_forward.1} parent=16 // pred_region
      %214 = vsyncadd %s182, 1024
    $region74: #{lstm_model_forward.1} parent=16 // pred_fallthru
      _
    %s215 = smul.u32 4, 16
    %s216 = smul.u32 %s215, 4
    %s217 = sshll.u32 %s216, 4
    %218 = dma.done [#allocation8], %s217
    %s219 = sshll.u32 %s216, 4
    %220 = dma.done %s101, %s219
    %s221 = smul.u32 %s215, 1
    %s222 = sshll.u32 %s221, 4
    %223 = dma.done %s182, %s222
    %224 = vst [vmem:[#allocation6] sm:$0xff] 0.0
    %225 = vst [vmem:[#allocation7] sm:$0xff] 0.0
  $region17: #{lstm_model_forward.1} parent=0 // pred_fallthru
    _
  %v226 = vld [vmem:[%s0] sm:$0xff]
  %v227 = vld [vmem:[%s0 + $0x8] sm:$0xff]
  %v228 = vld [vmem:[%s0 + $0x10] sm:$0xff]
  %v229 = vld [vmem:[%s0 + $0x18] sm:$0xff]
  %v230 = vld [vmem:[%s0 + $0x20] sm:$0xff]
  %v231 = vld [vmem:[%s0 + $0x28] sm:$0xff]
  %v232 = vld [vmem:[%s0 + $0x30] sm:$0xff]
  %v233 = vld [vmem:[%s0 + $0x38] sm:$0xff]
  %v234 = vpack.c.bf16 %v227, %v226
  %v235 = vpack.c.bf16 %v229, %v228
  %v236 = vpack.c.bf16 %v231, %v230
  %v237 = vpack.c.bf16 %v233, %v232
  %v238 = vld [vmem:[#allocation2] sm:$0xff]
  %v239 = vld [vmem:[#allocation2 + $0x8] sm:$0xff]
  %v240 = vld [vmem:[#allocation2 + $0x10] sm:$0xff]
  %v241 = vld [vmem:[#allocation2 + $0x18] sm:$0xff]
  %v242 = vld [vmem:[#allocation2 + $0x20] sm:$0xff]
  %v243 = vld [vmem:[#allocation2 + $0x28] sm:$0xff]
  %v244 = vld [vmem:[#allocation2 + $0x30] sm:$0xff]
  %v245 = vld [vmem:[#allocation2 + $0x38] sm:$0xff]
  %v246 = vld [vmem:[#allocation2 + $0x40] sm:$0xff]
  %v247 = vld [vmem:[#allocation2 + $0x48] sm:$0xff]
  %v248 = vld [vmem:[#allocation2 + $0x50] sm:$0xff]
  %v249 = vld [vmem:[#allocation2 + $0x58] sm:$0xff]
  %v250 = vld [vmem:[#allocation2 + $0x60] sm:$0xff]
  %v251 = vld [vmem:[#allocation2 + $0x68] sm:$0xff]
  %v252 = vld [vmem:[#allocation2 + $0x70] sm:$0xff]
  %v253 = vld [vmem:[#allocation2 + $0x78] sm:$0xff]
  %v254 = vld [vmem:[#allocation2 + $0x80] sm:$0xff]
  %v255 = vld [vmem:[#allocation2 + $0x88] sm:$0xff]
  %v256 = vld [vmem:[#allocation2 + $0x90] sm:$0xff]
  %v257 = vld [vmem:[#allocation2 + $0x98] sm:$0xff]
  %v258 = vld [vmem:[#allocation2 + $0xa0] sm:$0xff]
  %v259 = vld [vmem:[#allocation2 + $0xa8] sm:$0xff]
  %v260 = vld [vmem:[#allocation2 + $0xb0] sm:$0xff]
  %v261 = vld [vmem:[#allocation2 + $0xb8] sm:$0xff]
  %v262 = vld [vmem:[#allocation2 + $0xc0] sm:$0xff]
  %v263 = vld [vmem:[#allocation2 + $0xc8] sm:$0xff]
  %v264 = vld [vmem:[#allocation2 + $0xd0] sm:$0xff]
  %v265 = vld [vmem:[#allocation2 + $0xd8] sm:$0xff]
  %v266 = vld [vmem:[#allocation2 + $0xe0] sm:$0xff]
  %v267 = vld [vmem:[#allocation2 + $0xe8] sm:$0xff]
  %v268 = vld [vmem:[#allocation2 + $0xf0] sm:$0xff]
  %v269 = vld [vmem:[#allocation2 + $0xf8] sm:$0xff]
  %v270 = vld [vmem:[%s1] sm:$0xf]
  %v272 = vperm.slane %v270, 0
  %v273 = vperm.slane %v270, 1
  %v274 = vperm.slane %v270, 2
  %v275 = vperm.slane %v270, 3
  %v312 = vunpack.c.l.b16 %v238
  %v313 = vunpack.c.h.b16 %v238
  %v314 = vunpack.c.l.b16 %v239
  %v315 = vunpack.c.h.b16 %v239
  %v316 = vunpack.c.l.b16 %v240
  %v317 = vunpack.c.h.b16 %v240
  %v318 = vunpack.c.l.b16 %v241
  %v319 = vunpack.c.h.b16 %v241
  %v320 = vunpack.c.l.b16 %v242
  %v321 = vunpack.c.h.b16 %v242
  %v322 = vunpack.c.l.b16 %v243
  %v323 = vunpack.c.h.b16 %v243
  %v324 = vunpack.c.l.b16 %v244
  %v325 = vunpack.c.h.b16 %v244
  %v326 = vunpack.c.l.b16 %v245
  %v327 = vunpack.c.h.b16 %v245
  %v328 = vunpack.c.l.b16 %v246
  %v329 = vunpack.c.h.b16 %v246
  %v330 = vunpack.c.l.b16 %v247
  %v331 = vunpack.c.h.b16 %v247
  %v332 = vunpack.c.l.b16 %v248
  %v333 = vunpack.c.h.b16 %v248
  %v334 = vunpack.c.l.b16 %v249
  %v335 = vunpack.c.h.b16 %v249
  %v336 = vunpack.c.l.b16 %v250
  %v337 = vunpack.c.h.b16 %v250
  %v338 = vunpack.c.l.b16 %v251
  %v339 = vunpack.c.h.b16 %v251
  %v340 = vunpack.c.l.b16 %v252
  %v341 = vunpack.c.h.b16 %v252
  %v342 = vunpack.c.l.b16 %v253
  %v343 = vunpack.c.h.b16 %v253
  %v344 = vunpack.c.l.b16 %v254
  %v345 = vunpack.c.h.b16 %v254
  %v346 = vunpack.c.l.b16 %v255
  %v347 = vunpack.c.h.b16 %v255
  %v348 = vunpack.c.l.b16 %v256
  %v349 = vunpack.c.h.b16 %v256
  %v350 = vunpack.c.l.b16 %v257
  %v351 = vunpack.c.h.b16 %v257
  %v352 = vunpack.c.l.b16 %v258
  %v353 = vunpack.c.h.b16 %v258
  %v354 = vunpack.c.l.b16 %v259
  %v355 = vunpack.c.h.b16 %v259
  %v356 = vunpack.c.l.b16 %v260
  %v357 = vunpack.c.h.b16 %v260
  %v358 = vunpack.c.l.b16 %v261
  %v359 = vunpack.c.h.b16 %v261
  %v360 = vunpack.c.l.b16 %v262
  %v361 = vunpack.c.h.b16 %v262
  %v362 = vunpack.c.l.b16 %v263
  %v363 = vunpack.c.h.b16 %v263
  %v364 = vunpack.c.l.b16 %v264
  %v365 = vunpack.c.h.b16 %v264
  %v366 = vunpack.c.l.b16 %v265
  %v367 = vunpack.c.h.b16 %v265
  %v368 = vunpack.c.l.b16 %v266
  %v369 = vunpack.c.h.b16 %v266
  %v370 = vunpack.c.l.b16 %v267
  %v371 = vunpack.c.h.b16 %v267
  %v372 = vunpack.c.l.b16 %v268
  %v373 = vunpack.c.h.b16 %v268
  %v374 = vunpack.c.l.b16 %v269
  %v375 = vunpack.c.h.b16 %v269
  %v376 = vpack.c.b16 %v316, %v312
  %v377 = vpack.c.b16 %v317, %v313
  %v378 = vpack.c.b16 %v318, %v314
  %v379 = vpack.c.b16 %v319, %v315
  %v380 = vpack.c.b16 %v324, %v320
  %v381 = vpack.c.b16 %v325, %v321
  %v382 = vpack.c.b16 %v326, %v322
  %v383 = vpack.c.b16 %v327, %v323
  %v384 = vpack.c.b16 %v332, %v328
  %v385 = vpack.c.b16 %v333, %v329
  %v386 = vpack.c.b16 %v334, %v330
  %v387 = vpack.c.b16 %v335, %v331
  %v388 = vpack.c.b16 %v340, %v336
  %v389 = vpack.c.b16 %v341, %v337
  %v390 = vpack.c.b16 %v342, %v338
  %v391 = vpack.c.b16 %v343, %v339
  %v392 = vpack.c.b16 %v348, %v344
  %v393 = vpack.c.b16 %v349, %v345
  %v394 = vpack.c.b16 %v350, %v346
  %v395 = vpack.c.b16 %v351, %v347
  %v396 = vpack.c.b16 %v356, %v352
  %v397 = vpack.c.b16 %v357, %v353
  %v398 = vpack.c.b16 %v358, %v354
  %v399 = vpack.c.b16 %v359, %v355
  %v400 = vpack.c.b16 %v364, %v360
  %v401 = vpack.c.b16 %v365, %v361
  %v402 = vpack.c.b16 %v366, %v362
  %v403 = vpack.c.b16 %v367, %v363
  %v404 = vpack.c.b16 %v372, %v368
  %v405 = vpack.c.b16 %v373, %v369
  %v406 = vpack.c.b16 %v374, %v370
  %v407 = vpack.c.b16 %v375, %v371
  %440 = vmatpush.bf16.msra.mxu0 %v404
  %441 = vmatpush.bf16.msra.mxu0 %v400
  %442 = vmatpush.bf16.msra.mxu0 %v396
  %443 = vmatpush.bf16.msra.mxu0 %v392
  %444 = vmatpush.bf16.msra.mxu0 %v388
  %445 = vmatpush.bf16.msra.mxu0 %v384
  %446 = vmatpush.bf16.msra.mxu0 %v380
  %447 = vmatpush.bf16.msra.mxu0 %v376
  %448 = vmatmul.bf16.gmra.mxu0 %v234
  %v449 = vpop.f32.mrf.mxu0
  %v450 = vadd.f32 %v272, %v449
  %v451 = vpop.f32.mrf.mxu0
  %v452 = vadd.f32 %v272, %v451
  %453 = vmatmul.bf16.gmra.mxu0 %v235
  %v454 = vpop.f32.mrf.mxu0
  %v455 = vadd.f32 %v272, %v454
  %v456 = vpop.f32.mrf.mxu0
  %v457 = vadd.f32 %v272, %v456
  %458 = vmatmul.bf16.gmra.mxu0 %v236
  %v459 = vpop.f32.mrf.mxu0
  %v460 = vadd.f32 %v272, %v459
  %v461 = vpop.f32.mrf.mxu0
  %v462 = vadd.f32 %v272, %v461
  %463 = vmatmul.bf16.gmra.mxu0 %v237
  %v464 = vpop.f32.mrf.mxu0
  %v465 = vadd.f32 %v272, %v464
  %v466 = vpop.f32.mrf.mxu0
  %v467 = vadd.f32 %v272, %v466
  %468 = vdwg.mxu0
  %469 = vmatpush.bf16.msra.mxu0 %v405
  %470 = vmatpush.bf16.msra.mxu0 %v401
  %471 = vmatpush.bf16.msra.mxu0 %v397
  %472 = vmatpush.bf16.msra.mxu0 %v393
  %473 = vmatpush.bf16.msra.mxu0 %v389
  %474 = vmatpush.bf16.msra.mxu0 %v385
  %475 = vmatpush.bf16.msra.mxu0 %v381
  %476 = vmatpush.bf16.msra.mxu0 %v377
  %477 = vmatmul.bf16.gmra.mxu0 %v234
  %v478 = vpop.f32.mrf.mxu0
  %v479 = vadd.f32 %v273, %v478
  %v480 = vpop.f32.mrf.mxu0
  %v481 = vadd.f32 %v273, %v480
  %482 = vmatmul.bf16.gmra.mxu0 %v235
  %v483 = vpop.f32.mrf.mxu0
  %v484 = vadd.f32 %v273, %v483
  %v485 = vpop.f32.mrf.mxu0
  %v486 = vadd.f32 %v273, %v485
  %487 = vmatmul.bf16.gmra.mxu0 %v236
  %v488 = vpop.f32.mrf.mxu0
  %v489 = vadd.f32 %v273, %v488
  %v490 = vpop.f32.mrf.mxu0
  %v491 = vadd.f32 %v273, %v490
  %492 = vmatmul.bf16.gmra.mxu0 %v237
  %v493 = vpop.f32.mrf.mxu0
  %v494 = vadd.f32 %v273, %v493
  %v495 = vpop.f32.mrf.mxu0
  %v496 = vadd.f32 %v273, %v495
  %497 = vdwg.mxu0
  %498 = vmatpush.bf16.msra.mxu0 %v406
  %499 = vmatpush.bf16.msra.mxu0 %v402
  %500 = vmatpush.bf16.msra.mxu0 %v398
  %501 = vmatpush.bf16.msra.mxu0 %v394
  %502 = vmatpush.bf16.msra.mxu0 %v390
  %503 = vmatpush.bf16.msra.mxu0 %v386
  %504 = vmatpush.bf16.msra.mxu0 %v382
  %505 = vmatpush.bf16.msra.mxu0 %v378
  %506 = vmatmul.bf16.gmra.mxu0 %v234
  %v507 = vpop.f32.mrf.mxu0
  %v508 = vadd.f32 %v274, %v507
  %v509 = vpop.f32.mrf.mxu0
  %v510 = vadd.f32 %v274, %v509
  %511 = vmatmul.bf16.gmra.mxu0 %v235
  %v512 = vpop.f32.mrf.mxu0
  %v513 = vadd.f32 %v274, %v512
  %v514 = vpop.f32.mrf.mxu0
  %v515 = vadd.f32 %v274, %v514
  %516 = vmatmul.bf16.gmra.mxu0 %v236
  %v517 = vpop.f32.mrf.mxu0
  %v518 = vadd.f32 %v274, %v517
  %v519 = vpop.f32.mrf.mxu0
  %v520 = vadd.f32 %v274, %v519
  %521 = vmatmul.bf16.gmra.mxu0 %v237
  %v522 = vpop.f32.mrf.mxu0
  %v523 = vadd.f32 %v274, %v522
  %v524 = vpop.f32.mrf.mxu0
  %v525 = vadd.f32 %v274, %v524
  %526 = vdwg.mxu0
  %527 = vmatpush.bf16.msra.mxu0 %v407
  %528 = vmatpush.bf16.msra.mxu0 %v403
  %529 = vmatpush.bf16.msra.mxu0 %v399
  %530 = vmatpush.bf16.msra.mxu0 %v395
  %531 = vmatpush.bf16.msra.mxu0 %v391
  %532 = vmatpush.bf16.msra.mxu0 %v387
  %533 = vmatpush.bf16.msra.mxu0 %v383
  %534 = vmatpush.bf16.msra.mxu0 %v379
  %535 = vmatmul.bf16.gmra.mxu0 %v234
  %v536 = vpop.f32.mrf.mxu0
  %v537 = vadd.f32 %v275, %v536
  %v538 = vpop.f32.mrf.mxu0
  %v539 = vadd.f32 %v275, %v538
  %540 = vmatmul.bf16.gmra.mxu0 %v235
  %v541 = vpop.f32.mrf.mxu0
  %v542 = vadd.f32 %v275, %v541
  %v543 = vpop.f32.mrf.mxu0
  %v544 = vadd.f32 %v275, %v543
  %545 = vmatmul.bf16.gmra.mxu0 %v236
  %v546 = vpop.f32.mrf.mxu0
  %v547 = vadd.f32 %v275, %v546
  %v548 = vpop.f32.mrf.mxu0
  %v549 = vadd.f32 %v275, %v548
  %550 = vmatmul.bf16.gmra.mxu0 %v237
  %v551 = vpop.f32.mrf.mxu0
  %v552 = vadd.f32 %v275, %v551
  %v553 = vpop.f32.mrf.mxu0
  %v554 = vadd.f32 %v275, %v553
  %555 = vdwg.mxu0
  %556 = vst [vmem:[#allocation5] sm:$0xff] %v450
  %557 = vst [vmem:[#allocation5 + $0x8] sm:$0xff] %v479
  %558 = vst [vmem:[#allocation5 + $0x10] sm:$0xff] %v508
  %559 = vst [vmem:[#allocation5 + $0x18] sm:$0xff] %v537
  %560 = vst [vmem:[#allocation5 + $0x20] sm:$0xff] %v452
  %561 = vst [vmem:[#allocation5 + $0x28] sm:$0xff] %v481
  %562 = vst [vmem:[#allocation5 + $0x30] sm:$0xff] %v510
  %563 = vst [vmem:[#allocation5 + $0x38] sm:$0xff] %v539
  %564 = vst [vmem:[#allocation5 + $0x40] sm:$0xff] %v455
  %565 = vst [vmem:[#allocation5 + $0x48] sm:$0xff] %v484
  %566 = vst [vmem:[#allocation5 + $0x50] sm:$0xff] %v513
  %567 = vst [vmem:[#allocation5 + $0x58] sm:$0xff] %v542
  %568 = vst [vmem:[#allocation5 + $0x60] sm:$0xff] %v457
  %569 = vst [vmem:[#allocation5 + $0x68] sm:$0xff] %v486
  %570 = vst [vmem:[#allocation5 + $0x70] sm:$0xff] %v515
  %571 = vst [vmem:[#allocation5 + $0x78] sm:$0xff] %v544
  %572 = vst [vmem:[#allocation5 + $0x80] sm:$0xff] %v460
  %573 = vst [vmem:[#allocation5 + $0x88] sm:$0xff] %v489
  %574 = vst [vmem:[#allocation5 + $0x90] sm:$0xff] %v518
  %575 = vst [vmem:[#allocation5 + $0x98] sm:$0xff] %v547
  %576 = vst [vmem:[#allocation5 + $0xa0] sm:$0xff] %v462
  %577 = vst [vmem:[#allocation5 + $0xa8] sm:$0xff] %v491
  %578 = vst [vmem:[#allocation5 + $0xb0] sm:$0xff] %v520
  %579 = vst [vmem:[#allocation5 + $0xb8] sm:$0xff] %v549
  %580 = vst [vmem:[#allocation5 + $0xc0] sm:$0xff] %v465
  %581 = vst [vmem:[#allocation5 + $0xc8] sm:$0xff] %v494
  %582 = vst [vmem:[#allocation5 + $0xd0] sm:$0xff] %v523
  %583 = vst [vmem:[#allocation5 + $0xd8] sm:$0xff] %v552
  %584 = vst [vmem:[#allocation5 + $0xe0] sm:$0xff] %v467
  %585 = vst [vmem:[#allocation5 + $0xe8] sm:$0xff] %v496
  %586 = vst [vmem:[#allocation5 + $0xf0] sm:$0xff] %v525
  %587 = vst [vmem:[#allocation5 + $0xf8] sm:$0xff] %v554
  %v588 = vld [vmem:[#allocation5] sm:$0xff]
  %v589 = vld [vmem:[#allocation5 + $0x8] sm:$0xff]
  %v590 = vld [vmem:[#allocation5 + $0x10] sm:$0xff]
  %v591 = vld [vmem:[#allocation5 + $0x18] sm:$0xff]
  %v592 = vld [vmem:[#allocation6] sm:$0xff]
  %v593 = vpack.c.bf16 %v592, %v592
  %v594 = vld [vmem:[#allocation3] sm:$0xff]
  %v595 = vld [vmem:[#allocation3 + $0x8] sm:$0xff]
  %v596 = vld [vmem:[#allocation3 + $0x10] sm:$0xff]
  %v597 = vld [vmem:[#allocation3 + $0x18] sm:$0xff]
  %v598 = vld [vmem:[#allocation3 + $0x20] sm:$0xff]
  %v599 = vld [vmem:[#allocation3 + $0x28] sm:$0xff]
  %v600 = vld [vmem:[#allocation3 + $0x30] sm:$0xff]
  %v601 = vld [vmem:[#allocation3 + $0x38] sm:$0xff]
  %v602 = vld [vmem:[#allocation3 + $0x40] sm:$0xff]
  %v603 = vld [vmem:[#allocation3 + $0x48] sm:$0xff]
  %v604 = vld [vmem:[#allocation3 + $0x50] sm:$0xff]
  %v605 = vld [vmem:[#allocation3 + $0x58] sm:$0xff]
  %v606 = vld [vmem:[#allocation3 + $0x60] sm:$0xff]
  %v607 = vld [vmem:[#allocation3 + $0x68] sm:$0xff]
  %v608 = vld [vmem:[#allocation3 + $0x70] sm:$0xff]
  %v609 = vld [vmem:[#allocation3 + $0x78] sm:$0xff]
  %v610 = vld [vmem:[#allocation3 + $0x80] sm:$0xff]
  %v611 = vld [vmem:[#allocation3 + $0x88] sm:$0xff]
  %v612 = vld [vmem:[#allocation3 + $0x90] sm:$0xff]
  %v613 = vld [vmem:[#allocation3 + $0x98] sm:$0xff]
  %v614 = vld [vmem:[#allocation3 + $0xa0] sm:$0xff]
  %v615 = vld [vmem:[#allocation3 + $0xa8] sm:$0xff]
  %v616 = vld [vmem:[#allocation3 + $0xb0] sm:$0xff]
  %v617 = vld [vmem:[#allocation3 + $0xb8] sm:$0xff]
  %v618 = vld [vmem:[#allocation3 + $0xc0] sm:$0xff]
  %v619 = vld [vmem:[#allocation3 + $0xc8] sm:$0xff]
  %v620 = vld [vmem:[#allocation3 + $0xd0] sm:$0xff]
  %v621 = vld [vmem:[#allocation3 + $0xd8] sm:$0xff]
  %v622 = vld [vmem:[#allocation3 + $0xe0] sm:$0xff]
  %v623 = vld [vmem:[#allocation3 + $0xe8] sm:$0xff]
  %v624 = vld [vmem:[#allocation3 + $0xf0] sm:$0xff]
  %v625 = vld [vmem:[#allocation3 + $0xf8] sm:$0xff]
  %v658 = vunpack.c.l.b16 %v594
  %v659 = vunpack.c.h.b16 %v594
  %v660 = vunpack.c.l.b16 %v595
  %v661 = vunpack.c.h.b16 %v595
  %v662 = vunpack.c.l.b16 %v596
  %v663 = vunpack.c.h.b16 %v596
  %v664 = vunpack.c.l.b16 %v597
  %v665 = vunpack.c.h.b16 %v597
  %v666 = vunpack.c.l.b16 %v598
  %v667 = vunpack.c.h.b16 %v598
  %v668 = vunpack.c.l.b16 %v599
  %v669 = vunpack.c.h.b16 %v599
  %v670 = vunpack.c.l.b16 %v600
  %v671 = vunpack.c.h.b16 %v600
  %v672 = vunpack.c.l.b16 %v601
  %v673 = vunpack.c.h.b16 %v601
  %v674 = vunpack.c.l.b16 %v602
  %v675 = vunpack.c.h.b16 %v602
  %v676 = vunpack.c.l.b16 %v603
  %v677 = vunpack.c.h.b16 %v603
  %v678 = vunpack.c.l.b16 %v604
  %v679 = vunpack.c.h.b16 %v604
  %v680 = vunpack.c.l.b16 %v605
  %v681 = vunpack.c.h.b16 %v605
  %v682 = vunpack.c.l.b16 %v606
  %v683 = vunpack.c.h.b16 %v606
  %v684 = vunpack.c.l.b16 %v607
  %v685 = vunpack.c.h.b16 %v607
  %v686 = vunpack.c.l.b16 %v608
  %v687 = vunpack.c.h.b16 %v608
  %v688 = vunpack.c.l.b16 %v609
  %v689 = vunpack.c.h.b16 %v609
  %v690 = vunpack.c.l.b16 %v610
  %v691 = vunpack.c.h.b16 %v610
  %v692 = vunpack.c.l.b16 %v611
  %v693 = vunpack.c.h.b16 %v611
  %v694 = vunpack.c.l.b16 %v612
  %v695 = vunpack.c.h.b16 %v612
  %v696 = vunpack.c.l.b16 %v613
  %v697 = vunpack.c.h.b16 %v613
  %v698 = vunpack.c.l.b16 %v614
  %v699 = vunpack.c.h.b16 %v614
  %v700 = vunpack.c.l.b16 %v615
  %v701 = vunpack.c.h.b16 %v615
  %v702 = vunpack.c.l.b16 %v616
  %v703 = vunpack.c.h.b16 %v616
  %v704 = vunpack.c.l.b16 %v617
  %v705 = vunpack.c.h.b16 %v617
  %v706 = vunpack.c.l.b16 %v618
  %v707 = vunpack.c.h.b16 %v618
  %v708 = vunpack.c.l.b16 %v619
  %v709 = vunpack.c.h.b16 %v619
  %v710 = vunpack.c.l.b16 %v620
  %v711 = vunpack.c.h.b16 %v620
  %v712 = vunpack.c.l.b16 %v621
  %v713 = vunpack.c.h.b16 %v621
  %v714 = vunpack.c.l.b16 %v622
  %v715 = vunpack.c.h.b16 %v622
  %v716 = vunpack.c.l.b16 %v623
  %v717 = vunpack.c.h.b16 %v623
  %v718 = vunpack.c.l.b16 %v624
  %v719 = vunpack.c.h.b16 %v624
  %v720 = vunpack.c.l.b16 %v625
  %v721 = vunpack.c.h.b16 %v625
  %v722 = vpack.c.b16 %v662, %v658
  %v723 = vpack.c.b16 %v663, %v659
  %v724 = vpack.c.b16 %v664, %v660
  %v725 = vpack.c.b16 %v665, %v661
  %v726 = vpack.c.b16 %v670, %v666
  %v727 = vpack.c.b16 %v671, %v667
  %v728 = vpack.c.b16 %v672, %v668
  %v729 = vpack.c.b16 %v673, %v669
  %v730 = vpack.c.b16 %v678, %v674
  %v731 = vpack.c.b16 %v679, %v675
  %v732 = vpack.c.b16 %v680, %v676
  %v733 = vpack.c.b16 %v681, %v677
  %v734 = vpack.c.b16 %v686, %v682
  %v735 = vpack.c.b16 %v687, %v683
  %v736 = vpack.c.b16 %v688, %v684
  %v737 = vpack.c.b16 %v689, %v685
  %v738 = vpack.c.b16 %v694, %v690
  %v739 = vpack.c.b16 %v695, %v691
  %v740 = vpack.c.b16 %v696, %v692
  %v741 = vpack.c.b16 %v697, %v693
  %v742 = vpack.c.b16 %v702, %v698
  %v743 = vpack.c.b16 %v703, %v699
  %v744 = vpack.c.b16 %v704, %v700
  %v745 = vpack.c.b16 %v705, %v701
  %v746 = vpack.c.b16 %v710, %v706
  %v747 = vpack.c.b16 %v711, %v707
  %v748 = vpack.c.b16 %v712, %v708
  %v749 = vpack.c.b16 %v713, %v709
  %v750 = vpack.c.b16 %v718, %v714
  %v751 = vpack.c.b16 %v719, %v715
  %v752 = vpack.c.b16 %v720, %v716
  %v753 = vpack.c.b16 %v721, %v717
  %786 = vmatpush.bf16.msra.mxu0 %v750
  %787 = vmatpush.bf16.msra.mxu0 %v746
  %788 = vmatpush.bf16.msra.mxu0 %v742
  %789 = vmatpush.bf16.msra.mxu0 %v738
  %790 = vmatpush.bf16.msra.mxu0 %v734
  %791 = vmatpush.bf16.msra.mxu0 %v730
  %792 = vmatpush.bf16.msra.mxu0 %v726
  %793 = vmatpush.bf16.msra.mxu0 %v722
  %794 = vmatmul.bf16.gmra.mxu0 %v593
  %v795 = vpop.f32.mrf.mxu0
  %v796 = vadd.f32 0.0, %v795
  %v797 = vpop.f32.mrf.mxu0
  %798 = vdwg.mxu0
  %799 = vmatpush.bf16.msra.mxu0 %v751
  %800 = vmatpush.bf16.msra.mxu0 %v747
  %801 = vmatpush.bf16.msra.mxu0 %v743
  %802 = vmatpush.bf16.msra.mxu0 %v739
  %803 = vmatpush.bf16.msra.mxu0 %v735
  %804 = vmatpush.bf16.msra.mxu0 %v731
  %805 = vmatpush.bf16.msra.mxu0 %v727
  %806 = vmatpush.bf16.msra.mxu0 %v723
  %807 = vmatmul.bf16.gmra.mxu0 %v593
  %v808 = vpop.f32.mrf.mxu0
  %v809 = vadd.f32 0.0, %v808
  %v810 = vpop.f32.mrf.mxu0
  %811 = vdwg.mxu0
  %812 = vmatpush.bf16.msra.mxu0 %v752
  %813 = vmatpush.bf16.msra.mxu0 %v748
  %814 = vmatpush.bf16.msra.mxu0 %v744
  %815 = vmatpush.bf16.msra.mxu0 %v740
  %816 = vmatpush.bf16.msra.mxu0 %v736
  %817 = vmatpush.bf16.msra.mxu0 %v732
  %818 = vmatpush.bf16.msra.mxu0 %v728
  %819 = vmatpush.bf16.msra.mxu0 %v724
  %820 = vmatmul.bf16.gmra.mxu0 %v593
  %v821 = vpop.f32.mrf.mxu0
  %v822 = vadd.f32 0.0, %v821
  %v823 = vpop.f32.mrf.mxu0
  %824 = vdwg.mxu0
  %825 = vmatpush.bf16.msra.mxu0 %v753
  %826 = vmatpush.bf16.msra.mxu0 %v749
  %827 = vmatpush.bf16.msra.mxu0 %v745
  %828 = vmatpush.bf16.msra.mxu0 %v741
  %829 = vmatpush.bf16.msra.mxu0 %v737
  %830 = vmatpush.bf16.msra.mxu0 %v733
  %831 = vmatpush.bf16.msra.mxu0 %v729
  %832 = vmatpush.bf16.msra.mxu0 %v725
  %833 = vmatmul.bf16.gmra.mxu0 %v593
  %v834 = vpop.f32.mrf.mxu0
  %v835 = vadd.f32 0.0, %v834
  %v836 = vpop.f32.mrf.mxu0
  %837 = vdwg.mxu0
  %v838 = vadd.f32 %v588, %v796
  %v839 = vadd.f32 %v589, %v809
  %v840 = vadd.f32 %v590, %v822
  %v841 = vadd.f32 %v591, %v835
  %v842 = vxor.u32 %v838, 2147483648
  %v843 = vxor.u32 %v839, 2147483648
  %v844 = vxor.u32 %v840, 2147483648
  %v845 = vmul.f32 %v842, 1.442695
  %v846 = vpow.pop %v845
  %v847 = vmul.f32 %v843, 1.442695
  %v848 = vpow.pop %v847
  %v849 = vmul.f32 %v844, 1.442695
  %v850 = vpow.pop %v849
  %v851 = vadd.f32 %v846, 1.0
  %v852 = vadd.f32 %v848, 1.0
  %v853 = vadd.f32 %v850, 1.0
  %v854 = vrcp.pop %v851
  %v855 = vmul.f32 %v851, %v854
  %v856 = vsub.f32 1.0, %v855
  %v857 = vmul.f32 %v854, %v856
  %v858 = vadd.f32 %v854, %v857
  %vm859 = vweird.f32 %v851
  %vm860 = vweird.f32 %v854
  %vm861 = vmor %vm859, %vm860
  %v862 = vsel %vm861, %v854, %v858
  %v863 = vand.u32 2147483647, %v851
  %vm864 = vcmp.eq.f32.partialorder %v863, 8.507059e+37
  %v865 = vand.u32 %v851, 2147483648
  %v866 = vor.u32 1.1754944e-38, %v865
  %v867 = vsel %vm864, %v866, %v862
  %v868 = vmul.f32 1.0, %v867
  %v869 = vrcp.pop %v852
  %v870 = vmul.f32 %v852, %v869
  %v871 = vsub.f32 1.0, %v870
  %v872 = vmul.f32 %v869, %v871
  %v873 = vadd.f32 %v869, %v872
  %vm874 = vweird.f32 %v852
  %vm875 = vweird.f32 %v869
  %vm876 = vmor %vm874, %vm875
  %v877 = vsel %vm876, %v869, %v873
  %v878 = vand.u32 2147483647, %v852
  %vm879 = vcmp.eq.f32.partialorder %v878, 8.507059e+37
  %v880 = vand.u32 %v852, 2147483648
  %v881 = vor.u32 1.1754944e-38, %v880
  %v882 = vsel %vm879, %v881, %v877
  %v883 = vmul.f32 1.0, %v882
  %v884 = vrcp.pop %v853
  %v885 = vmul.f32 %v853, %v884
  %v886 = vsub.f32 1.0, %v885
  %v887 = vmul.f32 %v884, %v886
  %v888 = vadd.f32 %v884, %v887
  %vm889 = vweird.f32 %v853
  %vm890 = vweird.f32 %v884
  %vm891 = vmor %vm889, %vm890
  %v892 = vsel %vm891, %v884, %v888
  %v893 = vand.u32 2147483647, %v853
  %vm894 = vcmp.eq.f32.partialorder %v893, 8.507059e+37
  %v895 = vand.u32 %v853, 2147483648
  %v896 = vor.u32 1.1754944e-38, %v895
  %v897 = vsel %vm894, %v896, %v892
  %v898 = vmul.f32 1.0, %v897
  %v899 = vtanh.pop %v841
  %v900 = vld [vmem:[#allocation7] sm:$0xff]
  %v901 = vmul.f32 %v883, %v900
  %v902 = vmul.f32 %v868, %v899
  %v903 = vadd.f32 %v901, %v902
  %v904 = vtanh.pop %v903
  %v905 = vmul.f32 %v898, %v904
  %906 = vst [vmem:[#allocation7] sm:$0xff] %v903
  %907 = vst [vmem:[#allocation6] sm:$0xff] %v905
  %s908 = scalar_lea.vmem [#allocation5], 32
  %v909 = vld [vmem:[%s908] sm:$0xff]
  %v910 = vld [vmem:[%s908 + $0x8] sm:$0xff]
  %v911 = vld [vmem:[%s908 + $0x10] sm:$0xff]
  %v912 = vld [vmem:[%s908 + $0x18] sm:$0xff]
  %v913 = vld [vmem:[#allocation6] sm:$0xff]
  %v914 = vpack.c.bf16 %v913, %v913
  %v915 = vld [vmem:[#allocation3] sm:$0xff]
  %v916 = vld [vmem:[#allocation3 + $0x8] sm:$0xff]
  %v917 = vld [vmem:[#allocation3 + $0x10] sm:$0xff]
  %v918 = vld [vmem:[#allocation3 + $0x18] sm:$0xff]
  %v919 = vld [vmem:[#allocation3 + $0x20] sm:$0xff]
  %v920 = vld [vmem:[#allocation3 + $0x28] sm:$0xff]
  %v921 = vld [vmem:[#allocation3 + $0x30] sm:$0xff]
  %v922 = vld [vmem:[#allocation3 + $0x38] sm:$0xff]
  %v923 = vld [vmem:[#allocation3 + $0x40] sm:$0xff]
  %v924 = vld [vmem:[#allocation3 + $0x48] sm:$0xff]
  %v925 = vld [vmem:[#allocation3 + $0x50] sm:$0xff]
  %v926 = vld [vmem:[#allocation3 + $0x58] sm:$0xff]
  %v927 = vld [vmem:[#allocation3 + $0x60] sm:$0xff]
  %v928 = vld [vmem:[#allocation3 + $0x68] sm:$0xff]
  %v929 = vld [vmem:[#allocation3 + $0x70] sm:$0xff]
  %v930 = vld [vmem:[#allocation3 + $0x78] sm:$0xff]
  %v931 = vld [vmem:[#allocation3 + $0x80] sm:$0xff]
  %v932 = vld [vmem:[#allocation3 + $0x88] sm:$0xff]
  %v933 = vld [vmem:[#allocation3 + $0x90] sm:$0xff]
  %v934 = vld [vmem:[#allocation3 + $0x98] sm:$0xff]
  %v935 = vld [vmem:[#allocation3 + $0xa0] sm:$0xff]
  %v936 = vld [vmem:[#allocation3 + $0xa8] sm:$0xff]
  %v937 = vld [vmem:[#allocation3 + $0xb0] sm:$0xff]
  %v938 = vld [vmem:[#allocation3 + $0xb8] sm:$0xff]
  %v939 = vld [vmem:[#allocation3 + $0xc0] sm:$0xff]
  %v940 = vld [vmem:[#allocation3 + $0xc8] sm:$0xff]
  %v941 = vld [vmem:[#allocation3 + $0xd0] sm:$0xff]
  %v942 = vld [vmem:[#allocation3 + $0xd8] sm:$0xff]
  %v943 = vld [vmem:[#allocation3 + $0xe0] sm:$0xff]
  %v944 = vld [vmem:[#allocation3 + $0xe8] sm:$0xff]
  %v945 = vld [vmem:[#allocation3 + $0xf0] sm:$0xff]
  %v946 = vld [vmem:[#allocation3 + $0xf8] sm:$0xff]
  %v979 = vunpack.c.l.b16 %v915
  %v980 = vunpack.c.h.b16 %v915
  %v981 = vunpack.c.l.b16 %v916
  %v982 = vunpack.c.h.b16 %v916
  %v983 = vunpack.c.l.b16 %v917
  %v984 = vunpack.c.h.b16 %v917
  %v985 = vunpack.c.l.b16 %v918
  %v986 = vunpack.c.h.b16 %v918
  %v987 = vunpack.c.l.b16 %v919
  %v988 = vunpack.c.h.b16 %v919
  %v989 = vunpack.c.l.b16 %v920
  %v990 = vunpack.c.h.b16 %v920
  %v991 = vunpack.c.l.b16 %v921
  %v992 = vunpack.c.h.b16 %v921
  %v993 = vunpack.c.l.b16 %v922
  %v994 = vunpack.c.h.b16 %v922
  %v995 = vunpack.c.l.b16 %v923
  %v996 = vunpack.c.h.b16 %v923
  %v997 = vunpack.c.l.b16 %v924
  %v998 = vunpack.c.h.b16 %v924
  %v999 = vunpack.c.l.b16 %v925
  %v1000 = vunpack.c.h.b16 %v925
  %v1001 = vunpack.c.l.b16 %v926
  %v1002 = vunpack.c.h.b16 %v926
  %v1003 = vunpack.c.l.b16 %v927
  %v1004 = vunpack.c.h.b16 %v927
  %v1005 = vunpack.c.l.b16 %v928
  %v1006 = vunpack.c.h.b16 %v928
  %v1007 = vunpack.c.l.b16 %v929
  %v1008 = vunpack.c.h.b16 %v929
  %v1009 = vunpack.c.l.b16 %v930
  %v1010 = vunpack.c.h.b16 %v930
  %v1011 = vunpack.c.l.b16 %v931
  %v1012 = vunpack.c.h.b16 %v931
  %v1013 = vunpack.c.l.b16 %v932
  %v1014 = vunpack.c.h.b16 %v932
  %v1015 = vunpack.c.l.b16 %v933
  %v1016 = vunpack.c.h.b16 %v933
  %v1017 = vunpack.c.l.b16 %v934
  %v1018 = vunpack.c.h.b16 %v934
  %v1019 = vunpack.c.l.b16 %v935
  %v1020 = vunpack.c.h.b16 %v935
  %v1021 = vunpack.c.l.b16 %v936
  %v1022 = vunpack.c.h.b16 %v936
  %v1023 = vunpack.c.l.b16 %v937
  %v1024 = vunpack.c.h.b16 %v937
  %v1025 = vunpack.c.l.b16 %v938
  %v1026 = vunpack.c.h.b16 %v938
  %v1027 = vunpack.c.l.b16 %v939
  %v1028 = vunpack.c.h.b16 %v939
  %v1029 = vunpack.c.l.b16 %v940
  %v1030 = vunpack.c.h.b16 %v940
  %v1031 = vunpack.c.l.b16 %v941
  %v1032 = vunpack.c.h.b16 %v941
  %v1033 = vunpack.c.l.b16 %v942
  %v1034 = vunpack.c.h.b16 %v942
  %v1035 = vunpack.c.l.b16 %v943
  %v1036 = vunpack.c.h.b16 %v943
  %v1037 = vunpack.c.l.b16 %v944
  %v1038 = vunpack.c.h.b16 %v944
  %v1039 = vunpack.c.l.b16 %v945
  %v1040 = vunpack.c.h.b16 %v945
  %v1041 = vunpack.c.l.b16 %v946
  %v1042 = vunpack.c.h.b16 %v946
  %v1043 = vpack.c.b16 %v983, %v979
  %v1044 = vpack.c.b16 %v984, %v980
  %v1045 = vpack.c.b16 %v985, %v981
  %v1046 = vpack.c.b16 %v986, %v982
  %v1047 = vpack.c.b16 %v991, %v987
  %v1048 = vpack.c.b16 %v992, %v988
  %v1049 = vpack.c.b16 %v993, %v989
  %v1050 = vpack.c.b16 %v994, %v990
  %v1051 = vpack.c.b16 %v999, %v995
  %v1052 = vpack.c.b16 %v1000, %v996
  %v1053 = vpack.c.b16 %v1001, %v997
  %v1054 = vpack.c.b16 %v1002, %v998
  %v1055 = vpack.c.b16 %v1007, %v1003
  %v1056 = vpack.c.b16 %v1008, %v1004
  %v1057 = vpack.c.b16 %v1009, %v1005
  %v1058 = vpack.c.b16 %v1010, %v1006
  %v1059 = vpack.c.b16 %v1015, %v1011
  %v1060 = vpack.c.b16 %v1016, %v1012
  %v1061 = vpack.c.b16 %v1017, %v1013
  %v1062 = vpack.c.b16 %v1018, %v1014
  %v1063 = vpack.c.b16 %v1023, %v1019
  %v1064 = vpack.c.b16 %v1024, %v1020
  %v1065 = vpack.c.b16 %v1025, %v1021
  %v1066 = vpack.c.b16 %v1026, %v1022
  %v1067 = vpack.c.b16 %v1031, %v1027
  %v1068 = vpack.c.b16 %v1032, %v1028
  %v1069 = vpack.c.b16 %v1033, %v1029
  %v1070 = vpack.c.b16 %v1034, %v1030
  %v1071 = vpack.c.b16 %v1039, %v1035
  %v1072 = vpack.c.b16 %v1040, %v1036
  %v1073 = vpack.c.b16 %v1041, %v1037
  %v1074 = vpack.c.b16 %v1042, %v1038
  %1107 = vmatpush.bf16.msra.mxu0 %v1071
  %1108 = vmatpush.bf16.msra.mxu0 %v1067
  %1109 = vmatpush.bf16.msra.mxu0 %v1063
  %1110 = vmatpush.bf16.msra.mxu0 %v1059
  %1111 = vmatpush.bf16.msra.mxu0 %v1055
  %1112 = vmatpush.bf16.msra.mxu0 %v1051
  %1113 = vmatpush.bf16.msra.mxu0 %v1047
  %1114 = vmatpush.bf16.msra.mxu0 %v1043
  %1115 = vmatmul.bf16.gmra.mxu0 %v914
  %v1116 = vpop.f32.mrf.mxu0
  %v1117 = vadd.f32 0.0, %v1116
  %v1118 = vpop.f32.mrf.mxu0
  %1119 = vdwg.mxu0
  %1120 = vmatpush.bf16.msra.mxu0 %v1072
  %1121 = vmatpush.bf16.msra.mxu0 %v1068
  %1122 = vmatpush.bf16.msra.mxu0 %v1064
  %1123 = vmatpush.bf16.msra.mxu0 %v1060
  %1124 = vmatpush.bf16.msra.mxu0 %v1056
  %1125 = vmatpush.bf16.msra.mxu0 %v1052
  %1126 = vmatpush.bf16.msra.mxu0 %v1048
  %1127 = vmatpush.bf16.msra.mxu0 %v1044
  %1128 = vmatmul.bf16.gmra.mxu0 %v914
  %v1129 = vpop.f32.mrf.mxu0
  %v1130 = vadd.f32 0.0, %v1129
  %v1131 = vpop.f32.mrf.mxu0
  %1132 = vdwg.mxu0
  %1133 = vmatpush.bf16.msra.mxu0 %v1073
  %1134 = vmatpush.bf16.msra.mxu0 %v1069
  %1135 = vmatpush.bf16.msra.mxu0 %v1065
  %1136 = vmatpush.bf16.msra.mxu0 %v1061
  %1137 = vmatpush.bf16.msra.mxu0 %v1057
  %1138 = vmatpush.bf16.msra.mxu0 %v1053
  %1139 = vmatpush.bf16.msra.mxu0 %v1049
  %1140 = vmatpush.bf16.msra.mxu0 %v1045
  %1141 = vmatmul.bf16.gmra.mxu0 %v914
  %v1142 = vpop.f32.mrf.mxu0
  %v1143 = vadd.f32 0.0, %v1142
  %v1144 = vpop.f32.mrf.mxu0
  %1145 = vdwg.mxu0
  %1146 = vmatpush.bf16.msra.mxu0 %v1074
  %1147 = vmatpush.bf16.msra.mxu0 %v1070
  %1148 = vmatpush.bf16.msra.mxu0 %v1066
  %1149 = vmatpush.bf16.msra.mxu0 %v1062
  %1150 = vmatpush.bf16.msra.mxu0 %v1058
  %1151 = vmatpush.bf16.msra.mxu0 %v1054
  %1152 = vmatpush.bf16.msra.mxu0 %v1050
  %1153 = vmatpush.bf16.msra.mxu0 %v1046
  %1154 = vmatmul.bf16.gmra.mxu0 %v914
  %v1155 = vpop.f32.mrf.mxu0
  %v1156 = vadd.f32 0.0, %v1155
  %v1157 = vpop.f32.mrf.mxu0
  %1158 = vdwg.mxu0
  %v1159 = vadd.f32 %v909, %v1117
  %v1160 = vadd.f32 %v910, %v1130
  %v1161 = vadd.f32 %v911, %v1143
  %v1162 = vadd.f32 %v912, %v1156
  %v1163 = vxor.u32 %v1159, 2147483648
  %v1164 = vxor.u32 %v1160, 2147483648
  %v1165 = vxor.u32 %v1161, 2147483648
  %v1166 = vmul.f32 %v1163, 1.442695
  %v1167 = vpow.pop %v1166
  %v1168 = vmul.f32 %v1164, 1.442695
  %v1169 = vpow.pop %v1168
  %v1170 = vmul.f32 %v1165, 1.442695
  %v1171 = vpow.pop %v1170
  %v1172 = vadd.f32 %v1167, 1.0
  %v1173 = vadd.f32 %v1169, 1.0
  %v1174 = vadd.f32 %v1171, 1.0
  %v1175 = vrcp.pop %v1172
  %v1176 = vmul.f32 %v1172, %v1175
  %v1177 = vsub.f32 1.0, %v1176
  %v1178 = vmul.f32 %v1175, %v1177
  %v1179 = vadd.f32 %v1175, %v1178
  %vm1180 = vweird.f32 %v1172
  %vm1181 = vweird.f32 %v1175
  %vm1182 = vmor %vm1180, %vm1181
  %v1183 = vsel %vm1182, %v1175, %v1179
  %v1184 = vand.u32 2147483647, %v1172
  %vm1185 = vcmp.eq.f32.partialorder %v1184, 8.507059e+37
  %v1186 = vand.u32 %v1172, 2147483648
  %v1187 = vor.u32 1.1754944e-38, %v1186
  %v1188 = vsel %vm1185, %v1187, %v1183
  %v1189 = vmul.f32 1.0, %v1188
  %v1190 = vrcp.pop %v1173
  %v1191 = vmul.f32 %v1173, %v1190
  %v1192 = vsub.f32 1.0, %v1191
  %v1193 = vmul.f32 %v1190, %v1192
  %v1194 = vadd.f32 %v1190, %v1193
  %vm1195 = vweird.f32 %v1173
  %vm1196 = vweird.f32 %v1190
  %vm1197 = vmor %vm1195, %vm1196
  %v1198 = vsel %vm1197, %v1190, %v1194
  %v1199 = vand.u32 2147483647, %v1173
  %vm1200 = vcmp.eq.f32.partialorder %v1199, 8.507059e+37
  %v1201 = vand.u32 %v1173, 2147483648
  %v1202 = vor.u32 1.1754944e-38, %v1201
  %v1203 = vsel %vm1200, %v1202, %v1198
  %v1204 = vmul.f32 1.0, %v1203
  %v1205 = vrcp.pop %v1174
  %v1206 = vmul.f32 %v1174, %v1205
  %v1207 = vsub.f32 1.0, %v1206
  %v1208 = vmul.f32 %v1205, %v1207
  %v1209 = vadd.f32 %v1205, %v1208
  %vm1210 = vweird.f32 %v1174
  %vm1211 = vweird.f32 %v1205
  %vm1212 = vmor %vm1210, %vm1211
  %v1213 = vsel %vm1212, %v1205, %v1209
  %v1214 = vand.u32 2147483647, %v1174
  %vm1215 = vcmp.eq.f32.partialorder %v1214, 8.507059e+37
  %v1216 = vand.u32 %v1174, 2147483648
  %v1217 = vor.u32 1.1754944e-38, %v1216
  %v1218 = vsel %vm1215, %v1217, %v1213
  %v1219 = vmul.f32 1.0, %v1218
  %v1220 = vtanh.pop %v1162
  %v1221 = vld [vmem:[#allocation7] sm:$0xff]
  %v1222 = vmul.f32 %v1204, %v1221
  %v1223 = vmul.f32 %v1189, %v1220
  %v1224 = vadd.f32 %v1222, %v1223
  %v1225 = vtanh.pop %v1224
  %v1226 = vmul.f32 %v1219, %v1225
  %1227 = vst [vmem:[#allocation7] sm:$0xff] %v1224
  %1228 = vst [vmem:[#allocation6] sm:$0xff] %v1226
  %s1229 = scalar_lea.vmem [#allocation5], 64
  %v1230 = vld [vmem:[%s1229] sm:$0xff]
  %v1231 = vld [vmem:[%s1229 + $0x8] sm:$0xff]
  %v1232 = vld [vmem:[%s1229 + $0x10] sm:$0xff]
  %v1233 = vld [vmem:[%s1229 + $0x18] sm:$0xff]
  %v1234 = vld [vmem:[#allocation6] sm:$0xff]
  %v1235 = vpack.c.bf16 %v1234, %v1234
  %v1236 = vld [vmem:[#allocation3] sm:$0xff]
  %v1237 = vld [vmem:[#allocation3 + $0x8] sm:$0xff]
  %v1238 = vld [vmem:[#allocation3 + $0x10] sm:$0xff]
  %v1239 = vld [vmem:[#allocation3 + $0x18] sm:$0xff]
  %v1240 = vld [vmem:[#allocation3 + $0x20] sm:$0xff]
  %v1241 = vld [vmem:[#allocation3 + $0x28] sm:$0xff]
  %v1242 = vld [vmem:[#allocation3 + $0x30] sm:$0xff]
  %v1243 = vld [vmem:[#allocation3 + $0x38] sm:$0xff]
  %v1244 = vld [vmem:[#allocation3 + $0x40] sm:$0xff]
  %v1245 = vld [vmem:[#allocation3 + $0x48] sm:$0xff]
  %v1246 = vld [vmem:[#allocation3 + $0x50] sm:$0xff]
  %v1247 = vld [vmem:[#allocation3 + $0x58] sm:$0xff]
  %v1248 = vld [vmem:[#allocation3 + $0x60] sm:$0xff]
  %v1249 = vld [vmem:[#allocation3 + $0x68] sm:$0xff]
  %v1250 = vld [vmem:[#allocation3 + $0x70] sm:$0xff]
  %v1251 = vld [vmem:[#allocation3 + $0x78] sm:$0xff]
  %v1252 = vld [vmem:[#allocation3 + $0x80] sm:$0xff]
  %v1253 = vld [vmem:[#allocation3 + $0x88] sm:$0xff]
  %v1254 = vld [vmem:[#allocation3 + $0x90] sm:$0xff]
  %v1255 = vld [vmem:[#allocation3 + $0x98] sm:$0xff]
  %v1256 = vld [vmem:[#allocation3 + $0xa0] sm:$0xff]
  %v1257 = vld [vmem:[#allocation3 + $0xa8] sm:$0xff]
  %v1258 = vld [vmem:[#allocation3 + $0xb0] sm:$0xff]
  %v1259 = vld [vmem:[#allocation3 + $0xb8] sm:$0xff]
  %v1260 = vld [vmem:[#allocation3 + $0xc0] sm:$0xff]
  %v1261 = vld [vmem:[#allocation3 + $0xc8] sm:$0xff]
  %v1262 = vld [vmem:[#allocation3 + $0xd0] sm:$0xff]
  %v1263 = vld [vmem:[#allocation3 + $0xd8] sm:$0xff]
  %v1264 = vld [vmem:[#allocation3 + $0xe0] sm:$0xff]
  %v1265 = vld [vmem:[#allocation3 + $0xe8] sm:$0xff]
  %v1266 = vld [vmem:[#allocation3 + $0xf0] sm:$0xff]
  %v1267 = vld [vmem:[#allocation3 + $0xf8] sm:$0xff]
  %v1300 = vunpack.c.l.b16 %v1236
  %v1301 = vunpack.c.h.b16 %v1236
  %v1302 = vunpack.c.l.b16 %v1237
  %v1303 = vunpack.c.h.b16 %v1237
  %v1304 = vunpack.c.l.b16 %v1238
  %v1305 = vunpack.c.h.b16 %v1238
  %v1306 = vunpack.c.l.b16 %v1239
  %v1307 = vunpack.c.h.b16 %v1239
  %v1308 = vunpack.c.l.b16 %v1240
  %v1309 = vunpack.c.h.b16 %v1240
  %v1310 = vunpack.c.l.b16 %v1241
  %v1311 = vunpack.c.h.b16 %v1241
  %v1312 = vunpack.c.l.b16 %v1242
  %v1313 = vunpack.c.h.b16 %v1242
  %v1314 = vunpack.c.l.b16 %v1243
  %v1315 = vunpack.c.h.b16 %v1243
  %v1316 = vunpack.c.l.b16 %v1244
  %v1317 = vunpack.c.h.b16 %v1244
  %v1318 = vunpack.c.l.b16 %v1245
  %v1319 = vunpack.c.h.b16 %v1245
  %v1320 = vunpack.c.l.b16 %v1246
  %v1321 = vunpack.c.h.b16 %v1246
  %v1322 = vunpack.c.l.b16 %v1247
  %v1323 = vunpack.c.h.b16 %v1247
  %v1324 = vunpack.c.l.b16 %v1248
  %v1325 = vunpack.c.h.b16 %v1248
  %v1326 = vunpack.c.l.b16 %v1249
  %v1327 = vunpack.c.h.b16 %v1249
  %v1328 = vunpack.c.l.b16 %v1250
  %v1329 = vunpack.c.h.b16 %v1250
  %v1330 = vunpack.c.l.b16 %v1251
  %v1331 = vunpack.c.h.b16 %v1251
  %v1332 = vunpack.c.l.b16 %v1252
  %v1333 = vunpack.c.h.b16 %v1252
  %v1334 = vunpack.c.l.b16 %v1253
  %v1335 = vunpack.c.h.b16 %v1253
  %v1336 = vunpack.c.l.b16 %v1254
  %v1337 = vunpack.c.h.b16 %v1254
  %v1338 = vunpack.c.l.b16 %v1255
  %v1339 = vunpack.c.h.b16 %v1255
  %v1340 = vunpack.c.l.b16 %v1256
  %v1341 = vunpack.c.h.b16 %v1256
  %v1342 = vunpack.c.l.b16 %v1257
  %v1343 = vunpack.c.h.b16 %v1257
  %v1344 = vunpack.c.l.b16 %v1258
  %v1345 = vunpack.c.h.b16 %v1258
  %v1346 = vunpack.c.l.b16 %v1259
  %v1347 = vunpack.c.h.b16 %v1259
  %v1348 = vunpack.c.l.b16 %v1260
  %v1349 = vunpack.c.h.b16 %v1260
  %v1350 = vunpack.c.l.b16 %v1261
  %v1351 = vunpack.c.h.b16 %v1261
  %v1352 = vunpack.c.l.b16 %v1262
  %v1353 = vunpack.c.h.b16 %v1262
  %v1354 = vunpack.c.l.b16 %v1263
  %v1355 = vunpack.c.h.b16 %v1263
  %v1356 = vunpack.c.l.b16 %v1264
  %v1357 = vunpack.c.h.b16 %v1264
  %v1358 = vunpack.c.l.b16 %v1265
  %v1359 = vunpack.c.h.b16 %v1265
  %v1360 = vunpack.c.l.b16 %v1266
  %v1361 = vunpack.c.h.b16 %v1266
  %v1362 = vunpack.c.l.b16 %v1267
  %v1363 = vunpack.c.h.b16 %v1267
  %v1364 = vpack.c.b16 %v1304, %v1300
  %v1365 = vpack.c.b16 %v1305, %v1301
  %v1366 = vpack.c.b16 %v1306, %v1302
  %v1367 = vpack.c.b16 %v1307, %v1303
  %v1368 = vpack.c.b16 %v1312, %v1308
  %v1369 = vpack.c.b16 %v1313, %v1309
  %v1370 = vpack.c.b16 %v1314, %v1310
  %v1371 = vpack.c.b16 %v1315, %v1311
  %v1372 = vpack.c.b16 %v1320, %v1316
  %v1373 = vpack.c.b16 %v1321, %v1317
  %v1374 = vpack.c.b16 %v1322, %v1318
  %v1375 = vpack.c.b16 %v1323, %v1319
  %v1376 = vpack.c.b16 %v1328, %v1324
  %v1377 = vpack.c.b16 %v1329, %v1325
  %v1378 = vpack.c.b16 %v1330, %v1326
  %v1379 = vpack.c.b16 %v1331, %v1327
  %v1380 = vpack.c.b16 %v1336, %v1332
  %v1381 = vpack.c.b16 %v1337, %v1333
  %v1382 = vpack.c.b16 %v1338, %v1334
  %v1383 = vpack.c.b16 %v1339, %v1335
  %v1384 = vpack.c.b16 %v1344, %v1340
  %v1385 = vpack.c.b16 %v1345, %v1341
  %v1386 = vpack.c.b16 %v1346, %v1342
  %v1387 = vpack.c.b16 %v1347, %v1343
  %v1388 = vpack.c.b16 %v1352, %v1348
  %v1389 = vpack.c.b16 %v1353, %v1349
  %v1390 = vpack.c.b16 %v1354, %v1350
  %v1391 = vpack.c.b16 %v1355, %v1351
  %v1392 = vpack.c.b16 %v1360, %v1356
  %v1393 = vpack.c.b16 %v1361, %v1357
  %v1394 = vpack.c.b16 %v1362, %v1358
  %v1395 = vpack.c.b16 %v1363, %v1359
  %1428 = vmatpush.bf16.msra.mxu0 %v1392
  %1429 = vmatpush.bf16.msra.mxu0 %v1388
  %1430 = vmatpush.bf16.msra.mxu0 %v1384
  %1431 = vmatpush.bf16.msra.mxu0 %v1380
  %1432 = vmatpush.bf16.msra.mxu0 %v1376
  %1433 = vmatpush.bf16.msra.mxu0 %v1372
  %1434 = vmatpush.bf16.msra.mxu0 %v1368
  %1435 = vmatpush.bf16.msra.mxu0 %v1364
  %1436 = vmatmul.bf16.gmra.mxu0 %v1235
  %v1437 = vpop.f32.mrf.mxu0
  %v1438 = vadd.f32 0.0, %v1437
  %v1439 = vpop.f32.mrf.mxu0
  %1440 = vdwg.mxu0
  %1441 = vmatpush.bf16.msra.mxu0 %v1393
  %1442 = vmatpush.bf16.msra.mxu0 %v1389
  %1443 = vmatpush.bf16.msra.mxu0 %v1385
  %1444 = vmatpush.bf16.msra.mxu0 %v1381
  %1445 = vmatpush.bf16.msra.mxu0 %v1377
  %1446 = vmatpush.bf16.msra.mxu0 %v1373
  %1447 = vmatpush.bf16.msra.mxu0 %v1369
  %1448 = vmatpush.bf16.msra.mxu0 %v1365
  %1449 = vmatmul.bf16.gmra.mxu0 %v1235
  %v1450 = vpop.f32.mrf.mxu0
  %v1451 = vadd.f32 0.0, %v1450
  %v1452 = vpop.f32.mrf.mxu0
  %1453 = vdwg.mxu0
  %1454 = vmatpush.bf16.msra.mxu0 %v1394
  %1455 = vmatpush.bf16.msra.mxu0 %v1390
  %1456 = vmatpush.bf16.msra.mxu0 %v1386
  %1457 = vmatpush.bf16.msra.mxu0 %v1382
  %1458 = vmatpush.bf16.msra.mxu0 %v1378
  %1459 = vmatpush.bf16.msra.mxu0 %v1374
  %1460 = vmatpush.bf16.msra.mxu0 %v1370
  %1461 = vmatpush.bf16.msra.mxu0 %v1366
  %1462 = vmatmul.bf16.gmra.mxu0 %v1235
  %v1463 = vpop.f32.mrf.mxu0
  %v1464 = vadd.f32 0.0, %v1463
  %v1465 = vpop.f32.mrf.mxu0
  %1466 = vdwg.mxu0
  %1467 = vmatpush.bf16.msra.mxu0 %v1395
  %1468 = vmatpush.bf16.msra.mxu0 %v1391
  %1469 = vmatpush.bf16.msra.mxu0 %v1387
  %1470 = vmatpush.bf16.msra.mxu0 %v1383
  %1471 = vmatpush.bf16.msra.mxu0 %v1379
  %1472 = vmatpush.bf16.msra.mxu0 %v1375
  %1473 = vmatpush.bf16.msra.mxu0 %v1371
  %1474 = vmatpush.bf16.msra.mxu0 %v1367
  %1475 = vmatmul.bf16.gmra.mxu0 %v1235
  %v1476 = vpop.f32.mrf.mxu0
  %v1477 = vadd.f32 0.0, %v1476
  %v1478 = vpop.f32.mrf.mxu0
  %1479 = vdwg.mxu0
  %v1480 = vadd.f32 %v1230, %v1438
  %v1481 = vadd.f32 %v1231, %v1451
  %v1482 = vadd.f32 %v1232, %v1464
  %v1483 = vadd.f32 %v1233, %v1477
  %v1484 = vxor.u32 %v1480, 2147483648
  %v1485 = vxor.u32 %v1481, 2147483648
  %v1486 = vxor.u32 %v1482, 2147483648
  %v1487 = vmul.f32 %v1484, 1.442695
  %v1488 = vpow.pop %v1487
  %v1489 = vmul.f32 %v1485, 1.442695
  %v1490 = vpow.pop %v1489
  %v1491 = vmul.f32 %v1486, 1.442695
  %v1492 = vpow.pop %v1491
  %v1493 = vadd.f32 %v1488, 1.0
  %v1494 = vadd.f32 %v1490, 1.0
  %v1495 = vadd.f32 %v1492, 1.0
  %v1496 = vrcp.pop %v1493
  %v1497 = vmul.f32 %v1493, %v1496
  %v1498 = vsub.f32 1.0, %v1497
  %v1499 = vmul.f32 %v1496, %v1498
  %v1500 = vadd.f32 %v1496, %v1499
  %vm1501 = vweird.f32 %v1493
  %vm1502 = vweird.f32 %v1496
  %vm1503 = vmor %vm1501, %vm1502
  %v1504 = vsel %vm1503, %v1496, %v1500
  %v1505 = vand.u32 2147483647, %v1493
  %vm1506 = vcmp.eq.f32.partialorder %v1505, 8.507059e+37
  %v1507 = vand.u32 %v1493, 2147483648
  %v1508 = vor.u32 1.1754944e-38, %v1507
  %v1509 = vsel %vm1506, %v1508, %v1504
  %v1510 = vmul.f32 1.0, %v1509
  %v1511 = vrcp.pop %v1494
  %v1512 = vmul.f32 %v1494, %v1511
  %v1513 = vsub.f32 1.0, %v1512
  %v1514 = vmul.f32 %v1511, %v1513
  %v1515 = vadd.f32 %v1511, %v1514
  %vm1516 = vweird.f32 %v1494
  %vm1517 = vweird.f32 %v1511
  %vm1518 = vmor %vm1516, %vm1517
  %v1519 = vsel %vm1518, %v1511, %v1515
  %v1520 = vand.u32 2147483647, %v1494
  %vm1521 = vcmp.eq.f32.partialorder %v1520, 8.507059e+37
  %v1522 = vand.u32 %v1494, 2147483648
  %v1523 = vor.u32 1.1754944e-38, %v1522
  %v1524 = vsel %vm1521, %v1523, %v1519
  %v1525 = vmul.f32 1.0, %v1524
  %v1526 = vrcp.pop %v1495
  %v1527 = vmul.f32 %v1495, %v1526
  %v1528 = vsub.f32 1.0, %v1527
  %v1529 = vmul.f32 %v1526, %v1528
  %v1530 = vadd.f32 %v1526, %v1529
  %vm1531 = vweird.f32 %v1495
  %vm1532 = vweird.f32 %v1526
  %vm1533 = vmor %vm1531, %vm1532
  %v1534 = vsel %vm1533, %v1526, %v1530
  %v1535 = vand.u32 2147483647, %v1495
  %vm1536 = vcmp.eq.f32.partialorder %v1535, 8.507059e+37
  %v1537 = vand.u32 %v1495, 2147483648
  %v1538 = vor.u32 1.1754944e-38, %v1537
  %v1539 = vsel %vm1536, %v1538, %v1534
  %v1540 = vmul.f32 1.0, %v1539
  %v1541 = vtanh.pop %v1483
  %v1542 = vld [vmem:[#allocation7] sm:$0xff]
  %v1543 = vmul.f32 %v1525, %v1542
  %v1544 = vmul.f32 %v1510, %v1541
  %v1545 = vadd.f32 %v1543, %v1544
  %v1546 = vtanh.pop %v1545
  %v1547 = vmul.f32 %v1540, %v1546
  %1548 = vst [vmem:[#allocation7] sm:$0xff] %v1545
  %1549 = vst [vmem:[#allocation6] sm:$0xff] %v1547
  %s1550 = scalar_lea.vmem [#allocation5], 96
  %v1551 = vld [vmem:[%s1550] sm:$0xff]
  %v1552 = vld [vmem:[%s1550 + $0x8] sm:$0xff]
  %v1553 = vld [vmem:[%s1550 + $0x10] sm:$0xff]
  %v1554 = vld [vmem:[%s1550 + $0x18] sm:$0xff]
  %v1555 = vld [vmem:[#allocation6] sm:$0xff]
  %v1556 = vpack.c.bf16 %v1555, %v1555
  %v1557 = vld [vmem:[#allocation3] sm:$0xff]
  %v1558 = vld [vmem:[#allocation3 + $0x8] sm:$0xff]
  %v1559 = vld [vmem:[#allocation3 + $0x10] sm:$0xff]
  %v1560 = vld [vmem:[#allocation3 + $0x18] sm:$0xff]
  %v1561 = vld [vmem:[#allocation3 + $0x20] sm:$0xff]
  %v1562 = vld [vmem:[#allocation3 + $0x28] sm:$0xff]
  %v1563 = vld [vmem:[#allocation3 + $0x30] sm:$0xff]
  %v1564 = vld [vmem:[#allocation3 + $0x38] sm:$0xff]
  %v1565 = vld [vmem:[#allocation3 + $0x40] sm:$0xff]
  %v1566 = vld [vmem:[#allocation3 + $0x48] sm:$0xff]
  %v1567 = vld [vmem:[#allocation3 + $0x50] sm:$0xff]
  %v1568 = vld [vmem:[#allocation3 + $0x58] sm:$0xff]
  %v1569 = vld [vmem:[#allocation3 + $0x60] sm:$0xff]
  %v1570 = vld [vmem:[#allocation3 + $0x68] sm:$0xff]
  %v1571 = vld [vmem:[#allocation3 + $0x70] sm:$0xff]
  %v1572 = vld [vmem:[#allocation3 + $0x78] sm:$0xff]
  %v1573 = vld [vmem:[#allocation3 + $0x80] sm:$0xff]
  %v1574 = vld [vmem:[#allocation3 + $0x88] sm:$0xff]
  %v1575 = vld [vmem:[#allocation3 + $0x90] sm:$0xff]
  %v1576 = vld [vmem:[#allocation3 + $0x98] sm:$0xff]
  %v1577 = vld [vmem:[#allocation3 + $0xa0] sm:$0xff]
  %v1578 = vld [vmem:[#allocation3 + $0xa8] sm:$0xff]
  %v1579 = vld [vmem:[#allocation3 + $0xb0] sm:$0xff]
  %v1580 = vld [vmem:[#allocation3 + $0xb8] sm:$0xff]
  %v1581 = vld [vmem:[#allocation3 + $0xc0] sm:$0xff]
  %v1582 = vld [vmem:[#allocation3 + $0xc8] sm:$0xff]
  %v1583 = vld [vmem:[#allocation3 + $0xd0] sm:$0xff]
  %v1584 = vld [vmem:[#allocation3 + $0xd8] sm:$0xff]
  %v1585 = vld [vmem:[#allocation3 + $0xe0] sm:$0xff]
  %v1586 = vld [vmem:[#allocation3 + $0xe8] sm:$0xff]
  %v1587 = vld [vmem:[#allocation3 + $0xf0] sm:$0xff]
  %v1588 = vld [vmem:[#allocation3 + $0xf8] sm:$0xff]
  %v1621 = vunpack.c.l.b16 %v1557
  %v1622 = vunpack.c.h.b16 %v1557
  %v1623 = vunpack.c.l.b16 %v1558
  %v1624 = vunpack.c.h.b16 %v1558
  %v1625 = vunpack.c.l.b16 %v1559
  %v1626 = vunpack.c.h.b16 %v1559
  %v1627 = vunpack.c.l.b16 %v1560
  %v1628 = vunpack.c.h.b16 %v1560
  %v1629 = vunpack.c.l.b16 %v1561
  %v1630 = vunpack.c.h.b16 %v1561
  %v1631 = vunpack.c.l.b16 %v1562
  %v1632 = vunpack.c.h.b16 %v1562
  %v1633 = vunpack.c.l.b16 %v1563
  %v1634 = vunpack.c.h.b16 %v1563
  %v1635 = vunpack.c.l.b16 %v1564
  %v1636 = vunpack.c.h.b16 %v1564
  %v1637 = vunpack.c.l.b16 %v1565
  %v1638 = vunpack.c.h.b16 %v1565
  %v1639 = vunpack.c.l.b16 %v1566
  %v1640 = vunpack.c.h.b16 %v1566
  %v1641 = vunpack.c.l.b16 %v1567
  %v1642 = vunpack.c.h.b16 %v1567
  %v1643 = vunpack.c.l.b16 %v1568
  %v1644 = vunpack.c.h.b16 %v1568
  %v1645 = vunpack.c.l.b16 %v1569
  %v1646 = vunpack.c.h.b16 %v1569
  %v1647 = vunpack.c.l.b16 %v1570
  %v1648 = vunpack.c.h.b16 %v1570
  %v1649 = vunpack.c.l.b16 %v1571
  %v1650 = vunpack.c.h.b16 %v1571
  %v1651 = vunpack.c.l.b16 %v1572
  %v1652 = vunpack.c.h.b16 %v1572
  %v1653 = vunpack.c.l.b16 %v1573
  %v1654 = vunpack.c.h.b16 %v1573
  %v1655 = vunpack.c.l.b16 %v1574
  %v1656 = vunpack.c.h.b16 %v1574
  %v1657 = vunpack.c.l.b16 %v1575
  %v1658 = vunpack.c.h.b16 %v1575
  %v1659 = vunpack.c.l.b16 %v1576
  %v1660 = vunpack.c.h.b16 %v1576
  %v1661 = vunpack.c.l.b16 %v1577
  %v1662 = vunpack.c.h.b16 %v1577
  %v1663 = vunpack.c.l.b16 %v1578
  %v1664 = vunpack.c.h.b16 %v1578
  %v1665 = vunpack.c.l.b16 %v1579
  %v1666 = vunpack.c.h.b16 %v1579
  %v1667 = vunpack.c.l.b16 %v1580
  %v1668 = vunpack.c.h.b16 %v1580
  %v1669 = vunpack.c.l.b16 %v1581
  %v1670 = vunpack.c.h.b16 %v1581
  %v1671 = vunpack.c.l.b16 %v1582
  %v1672 = vunpack.c.h.b16 %v1582
  %v1673 = vunpack.c.l.b16 %v1583
  %v1674 = vunpack.c.h.b16 %v1583
  %v1675 = vunpack.c.l.b16 %v1584
  %v1676 = vunpack.c.h.b16 %v1584
  %v1677 = vunpack.c.l.b16 %v1585
  %v1678 = vunpack.c.h.b16 %v1585
  %v1679 = vunpack.c.l.b16 %v1586
  %v1680 = vunpack.c.h.b16 %v1586
  %v1681 = vunpack.c.l.b16 %v1587
  %v1682 = vunpack.c.h.b16 %v1587
  %v1683 = vunpack.c.l.b16 %v1588
  %v1684 = vunpack.c.h.b16 %v1588
  %v1685 = vpack.c.b16 %v1625, %v1621
  %v1686 = vpack.c.b16 %v1626, %v1622
  %v1687 = vpack.c.b16 %v1627, %v1623
  %v1688 = vpack.c.b16 %v1628, %v1624
  %v1689 = vpack.c.b16 %v1633, %v1629
  %v1690 = vpack.c.b16 %v1634, %v1630
  %v1691 = vpack.c.b16 %v1635, %v1631
  %v1692 = vpack.c.b16 %v1636, %v1632
  %v1693 = vpack.c.b16 %v1641, %v1637
  %v1694 = vpack.c.b16 %v1642, %v1638
  %v1695 = vpack.c.b16 %v1643, %v1639
  %v1696 = vpack.c.b16 %v1644, %v1640
  %v1697 = vpack.c.b16 %v1649, %v1645
  %v1698 = vpack.c.b16 %v1650, %v1646
  %v1699 = vpack.c.b16 %v1651, %v1647
  %v1700 = vpack.c.b16 %v1652, %v1648
  %v1701 = vpack.c.b16 %v1657, %v1653
  %v1702 = vpack.c.b16 %v1658, %v1654
  %v1703 = vpack.c.b16 %v1659, %v1655
  %v1704 = vpack.c.b16 %v1660, %v1656
  %v1705 = vpack.c.b16 %v1665, %v1661
  %v1706 = vpack.c.b16 %v1666, %v1662
  %v1707 = vpack.c.b16 %v1667, %v1663
  %v1708 = vpack.c.b16 %v1668, %v1664
  %v1709 = vpack.c.b16 %v1673, %v1669
  %v1710 = vpack.c.b16 %v1674, %v1670
  %v1711 = vpack.c.b16 %v1675, %v1671
  %v1712 = vpack.c.b16 %v1676, %v1672
  %v1713 = vpack.c.b16 %v1681, %v1677
  %v1714 = vpack.c.b16 %v1682, %v1678
  %v1715 = vpack.c.b16 %v1683, %v1679
  %v1716 = vpack.c.b16 %v1684, %v1680
  %1749 = vmatpush.bf16.msra.mxu0 %v1713
  %1750 = vmatpush.bf16.msra.mxu0 %v1709
  %1751 = vmatpush.bf16.msra.mxu0 %v1705
  %1752 = vmatpush.bf16.msra.mxu0 %v1701
  %1753 = vmatpush.bf16.msra.mxu0 %v1697
  %1754 = vmatpush.bf16.msra.mxu0 %v1693
  %1755 = vmatpush.bf16.msra.mxu0 %v1689
  %1756 = vmatpush.bf16.msra.mxu0 %v1685
  %1757 = vmatmul.bf16.gmra.mxu0 %v1556
  %v1758 = vpop.f32.mrf.mxu0
  %v1759 = vadd.f32 0.0, %v1758
  %v1760 = vpop.f32.mrf.mxu0
  %1761 = vdwg.mxu0
  %1762 = vmatpush.bf16.msra.mxu0 %v1714
  %1763 = vmatpush.bf16.msra.mxu0 %v1710
  %1764 = vmatpush.bf16.msra.mxu0 %v1706
  %1765 = vmatpush.bf16.msra.mxu0 %v1702
  %1766 = vmatpush.bf16.msra.mxu0 %v1698
  %1767 = vmatpush.bf16.msra.mxu0 %v1694
  %1768 = vmatpush.bf16.msra.mxu0 %v1690
  %1769 = vmatpush.bf16.msra.mxu0 %v1686
  %1770 = vmatmul.bf16.gmra.mxu0 %v1556
  %v1771 = vpop.f32.mrf.mxu0
  %v1772 = vadd.f32 0.0, %v1771
  %v1773 = vpop.f32.mrf.mxu0
  %1774 = vdwg.mxu0
  %1775 = vmatpush.bf16.msra.mxu0 %v1715
  %1776 = vmatpush.bf16.msra.mxu0 %v1711
  %1777 = vmatpush.bf16.msra.mxu0 %v1707
  %1778 = vmatpush.bf16.msra.mxu0 %v1703
  %1779 = vmatpush.bf16.msra.mxu0 %v1699
  %1780 = vmatpush.bf16.msra.mxu0 %v1695
  %1781 = vmatpush.bf16.msra.mxu0 %v1691
  %1782 = vmatpush.bf16.msra.mxu0 %v1687
  %1783 = vmatmul.bf16.gmra.mxu0 %v1556
  %v1784 = vpop.f32.mrf.mxu0
  %v1785 = vadd.f32 0.0, %v1784
  %v1786 = vpop.f32.mrf.mxu0
  %1787 = vdwg.mxu0
  %1788 = vmatpush.bf16.msra.mxu0 %v1716
  %1789 = vmatpush.bf16.msra.mxu0 %v1712
  %1790 = vmatpush.bf16.msra.mxu0 %v1708
  %1791 = vmatpush.bf16.msra.mxu0 %v1704
  %1792 = vmatpush.bf16.msra.mxu0 %v1700
  %1793 = vmatpush.bf16.msra.mxu0 %v1696
  %1794 = vmatpush.bf16.msra.mxu0 %v1692
  %1795 = vmatpush.bf16.msra.mxu0 %v1688
  %1796 = vmatmul.bf16.gmra.mxu0 %v1556
  %v1797 = vpop.f32.mrf.mxu0
  %v1798 = vadd.f32 0.0, %v1797
  %v1799 = vpop.f32.mrf.mxu0
  %1800 = vdwg.mxu0
  %v1801 = vadd.f32 %v1551, %v1759
  %v1802 = vadd.f32 %v1552, %v1772
  %v1803 = vadd.f32 %v1553, %v1785
  %v1804 = vadd.f32 %v1554, %v1798
  %v1805 = vxor.u32 %v1801, 2147483648
  %v1806 = vxor.u32 %v1802, 2147483648
  %v1807 = vxor.u32 %v1803, 2147483648
  %v1808 = vmul.f32 %v1805, 1.442695
  %v1809 = vpow.pop %v1808
  %v1810 = vmul.f32 %v1806, 1.442695
  %v1811 = vpow.pop %v1810
  %v1812 = vmul.f32 %v1807, 1.442695
  %v1813 = vpow.pop %v1812
  %v1814 = vadd.f32 %v1809, 1.0
  %v1815 = vadd.f32 %v1811, 1.0
  %v1816 = vadd.f32 %v1813, 1.0
  %v1817 = vrcp.pop %v1814
  %v1818 = vmul.f32 %v1814, %v1817
  %v1819 = vsub.f32 1.0, %v1818
  %v1820 = vmul.f32 %v1817, %v1819
  %v1821 = vadd.f32 %v1817, %v1820
  %vm1822 = vweird.f32 %v1814
  %vm1823 = vweird.f32 %v1817
  %vm1824 = vmor %vm1822, %vm1823
  %v1825 = vsel %vm1824, %v1817, %v1821
  %v1826 = vand.u32 2147483647, %v1814
  %vm1827 = vcmp.eq.f32.partialorder %v1826, 8.507059e+37
  %v1828 = vand.u32 %v1814, 2147483648
  %v1829 = vor.u32 1.1754944e-38, %v1828
  %v1830 = vsel %vm1827, %v1829, %v1825
  %v1831 = vmul.f32 1.0, %v1830
  %v1832 = vrcp.pop %v1815
  %v1833 = vmul.f32 %v1815, %v1832
  %v1834 = vsub.f32 1.0, %v1833
  %v1835 = vmul.f32 %v1832, %v1834
  %v1836 = vadd.f32 %v1832, %v1835
  %vm1837 = vweird.f32 %v1815
  %vm1838 = vweird.f32 %v1832
  %vm1839 = vmor %vm1837, %vm1838
  %v1840 = vsel %vm1839, %v1832, %v1836
  %v1841 = vand.u32 2147483647, %v1815
  %vm1842 = vcmp.eq.f32.partialorder %v1841, 8.507059e+37
  %v1843 = vand.u32 %v1815, 2147483648
  %v1844 = vor.u32 1.1754944e-38, %v1843
  %v1845 = vsel %vm1842, %v1844, %v1840
  %v1846 = vmul.f32 1.0, %v1845
  %v1847 = vrcp.pop %v1816
  %v1848 = vmul.f32 %v1816, %v1847
  %v1849 = vsub.f32 1.0, %v1848
  %v1850 = vmul.f32 %v1847, %v1849
  %v1851 = vadd.f32 %v1847, %v1850
  %vm1852 = vweird.f32 %v1816
  %vm1853 = vweird.f32 %v1847
  %vm1854 = vmor %vm1852, %vm1853
  %v1855 = vsel %vm1854, %v1847, %v1851
  %v1856 = vand.u32 2147483647, %v1816
  %vm1857 = vcmp.eq.f32.partialorder %v1856, 8.507059e+37
  %v1858 = vand.u32 %v1816, 2147483648
  %v1859 = vor.u32 1.1754944e-38, %v1858
  %v1860 = vsel %vm1857, %v1859, %v1855
  %v1861 = vmul.f32 1.0, %v1860
  %v1862 = vtanh.pop %v1804
  %v1863 = vld [vmem:[#allocation7] sm:$0xff]
  %v1864 = vmul.f32 %v1846, %v1863
  %v1865 = vmul.f32 %v1831, %v1862
  %v1866 = vadd.f32 %v1864, %v1865
  %v1867 = vtanh.pop %v1866
  %v1868 = vmul.f32 %v1861, %v1867
  %1869 = vst [vmem:[#allocation7] sm:$0xff] %v1866
  %1870 = vst [vmem:[#allocation6] sm:$0xff] %v1868
  %s1871 = scalar_lea.vmem [#allocation5], 128
  %v1872 = vld [vmem:[%s1871] sm:$0xff]
  %v1873 = vld [vmem:[%s1871 + $0x8] sm:$0xff]
  %v1874 = vld [vmem:[%s1871 + $0x10] sm:$0xff]
  %v1875 = vld [vmem:[%s1871 + $0x18] sm:$0xff]
  %v1876 = vld [vmem:[#allocation6] sm:$0xff]
  %v1877 = vpack.c.bf16 %v1876, %v1876
  %v1878 = vld [vmem:[#allocation3] sm:$0xff]
  %v1879 = vld [vmem:[#allocation3 + $0x8] sm:$0xff]
  %v1880 = vld [vmem:[#allocation3 + $0x10] sm:$0xff]
  %v1881 = vld [vmem:[#allocation3 + $0x18] sm:$0xff]
  %v1882 = vld [vmem:[#allocation3 + $0x20] sm:$0xff]
  %v1883 = vld [vmem:[#allocation3 + $0x28] sm:$0xff]
  %v1884 = vld [vmem:[#allocation3 + $0x30] sm:$0xff]
  %v1885 = vld [vmem:[#allocation3 + $0x38] sm:$0xff]
  %v1886 = vld [vmem:[#allocation3 + $0x40] sm:$0xff]
  %v1887 = vld [vmem:[#allocation3 + $0x48] sm:$0xff]
  %v1888 = vld [vmem:[#allocation3 + $0x50] sm:$0xff]
  %v1889 = vld [vmem:[#allocation3 + $0x58] sm:$0xff]
  %v1890 = vld [vmem:[#allocation3 + $0x60] sm:$0xff]
  %v1891 = vld [vmem:[#allocation3 + $0x68] sm:$0xff]
  %v1892 = vld [vmem:[#allocation3 + $0x70] sm:$0xff]
  %v1893 = vld [vmem:[#allocation3 + $0x78] sm:$0xff]
  %v1894 = vld [vmem:[#allocation3 + $0x80] sm:$0xff]
  %v1895 = vld [vmem:[#allocation3 + $0x88] sm:$0xff]
  %v1896 = vld [vmem:[#allocation3 + $0x90] sm:$0xff]
  %v1897 = vld [vmem:[#allocation3 + $0x98] sm:$0xff]
  %v1898 = vld [vmem:[#allocation3 + $0xa0] sm:$0xff]
  %v1899 = vld [vmem:[#allocation3 + $0xa8] sm:$0xff]
  %v1900 = vld [vmem:[#allocation3 + $0xb0] sm:$0xff]
  %v1901 = vld [vmem:[#allocation3 + $0xb8] sm:$0xff]
  %v1902 = vld [vmem:[#allocation3 + $0xc0] sm:$0xff]
  %v1903 = vld [vmem:[#allocation3 + $0xc8] sm:$0xff]
  %v1904 = vld [vmem:[#allocation3 + $0xd0] sm:$0xff]
  %v1905 = vld [vmem:[#allocation3 + $0xd8] sm:$0xff]
  %v1906 = vld [vmem:[#allocation3 + $0xe0] sm:$0xff]
  %v1907 = vld [vmem:[#allocation3 + $0xe8] sm:$0xff]
  %v1908 = vld [vmem:[#allocation3 + $0xf0] sm:$0xff]
  %v1909 = vld [vmem:[#allocation3 + $0xf8] sm:$0xff]
  %v1942 = vunpack.c.l.b16 %v1878
  %v1943 = vunpack.c.h.b16 %v1878
  %v1944 = vunpack.c.l.b16 %v1879
  %v1945 = vunpack.c.h.b16 %v1879
  %v1946 = vunpack.c.l.b16 %v1880
  %v1947 = vunpack.c.h.b16 %v1880
  %v1948 = vunpack.c.l.b16 %v1881
  %v1949 = vunpack.c.h.b16 %v1881
  %v1950 = vunpack.c.l.b16 %v1882
  %v1951 = vunpack.c.h.b16 %v1882
  %v1952 = vunpack.c.l.b16 %v1883
  %v1953 = vunpack.c.h.b16 %v1883
  %v1954 = vunpack.c.l.b16 %v1884
  %v1955 = vunpack.c.h.b16 %v1884
  %v1956 = vunpack.c.l.b16 %v1885
  %v1957 = vunpack.c.h.b16 %v1885
  %v1958 = vunpack.c.l.b16 %v1886
  %v1959 = vunpack.c.h.b16 %v1886
  %v1960 = vunpack.c.l.b16 %v1887
  %v1961 = vunpack.c.h.b16 %v1887
  %v1962 = vunpack.c.l.b16 %v1888
  %v1963 = vunpack.c.h.b16 %v1888
  %v1964 = vunpack.c.l.b16 %v1889
  %v1965 = vunpack.c.h.b16 %v1889
  %v1966 = vunpack.c.l.b16 %v1890
  %v1967 = vunpack.c.h.b16 %v1890
  %v1968 = vunpack.c.l.b16 %v1891
  %v1969 = vunpack.c.h.b16 %v1891
  %v1970 = vunpack.c.l.b16 %v1892
  %v1971 = vunpack.c.h.b16 %v1892
  %v1972 = vunpack.c.l.b16 %v1893
  %v1973 = vunpack.c.h.b16 %v1893
  %v1974 = vunpack.c.l.b16 %v1894
  %v1975 = vunpack.c.h.b16 %v1894
  %v1976 = vunpack.c.l.b16 %v1895
  %v1977 = vunpack.c.h.b16 %v1895
  %v1978 = vunpack.c.l.b16 %v1896
  %v1979 = vunpack.c.h.b16 %v1896
  %v1980 = vunpack.c.l.b16 %v1897
  %v1981 = vunpack.c.h.b16 %v1897
  %v1982 = vunpack.c.l.b16 %v1898
  %v1983 = vunpack.c.h.b16 %v1898
  %v1984 = vunpack.c.l.b16 %v1899
  %v1985 = vunpack.c.h.b16 %v1899
  %v1986 = vunpack.c.l.b16 %v1900
  %v1987 = vunpack.c.h.b16 %v1900
  %v1988 = vunpack.c.l.b16 %v1901
  %v1989 = vunpack.c.h.b16 %v1901
  %v1990 = vunpack.c.l.b16 %v1902
  %v1991 = vunpack.c.h.b16 %v1902
  %v1992 = vunpack.c.l.b16 %v1903
  %v1993 = vunpack.c.h.b16 %v1903
  %v1994 = vunpack.c.l.b16 %v1904
  %v1995 = vunpack.c.h.b16 %v1904
  %v1996 = vunpack.c.l.b16 %v1905
  %v1997 = vunpack.c.h.b16 %v1905
  %v1998 = vunpack.c.l.b16 %v1906
  %v1999 = vunpack.c.h.b16 %v1906
  %v2000 = vunpack.c.l.b16 %v1907
  %v2001 = vunpack.c.h.b16 %v1907
  %v2002 = vunpack.c.l.b16 %v1908
  %v2003 = vunpack.c.h.b16 %v1908
  %v2004 = vunpack.c.l.b16 %v1909
  %v2005 = vunpack.c.h.b16 %v1909
  %v2006 = vpack.c.b16 %v1946, %v1942
  %v2007 = vpack.c.b16 %v1947, %v1943
  %v2008 = vpack.c.b16 %v1948, %v1944
  %v2009 = vpack.c.b16 %v1949, %v1945
  %v2010 = vpack.c.b16 %v1954, %v1950
  %v2011 = vpack.c.b16 %v1955, %v1951
  %v2012 = vpack.c.b16 %v1956, %v1952
  %v2013 = vpack.c.b16 %v1957, %v1953
  %v2014 = vpack.c.b16 %v1962, %v1958
  %v2015 = vpack.c.b16 %v1963, %v1959
  %v2016 = vpack.c.b16 %v1964, %v1960
  %v2017 = vpack.c.b16 %v1965, %v1961
  %v2018 = vpack.c.b16 %v1970, %v1966
  %v2019 = vpack.c.b16 %v1971, %v1967
  %v2020 = vpack.c.b16 %v1972, %v1968
  %v2021 = vpack.c.b16 %v1973, %v1969
  %v2022 = vpack.c.b16 %v1978, %v1974
  %v2023 = vpack.c.b16 %v1979, %v1975
  %v2024 = vpack.c.b16 %v1980, %v1976
  %v2025 = vpack.c.b16 %v1981, %v1977
  %v2026 = vpack.c.b16 %v1986, %v1982
  %v2027 = vpack.c.b16 %v1987, %v1983
  %v2028 = vpack.c.b16 %v1988, %v1984
  %v2029 = vpack.c.b16 %v1989, %v1985
  %v2030 = vpack.c.b16 %v1994, %v1990
  %v2031 = vpack.c.b16 %v1995, %v1991
  %v2032 = vpack.c.b16 %v1996, %v1992
  %v2033 = vpack.c.b16 %v1997, %v1993
  %v2034 = vpack.c.b16 %v2002, %v1998
  %v2035 = vpack.c.b16 %v2003, %v1999
  %v2036 = vpack.c.b16 %v2004, %v2000
  %v2037 = vpack.c.b16 %v2005, %v2001
  %2070 = vmatpush.bf16.msra.mxu0 %v2034
  %2071 = vmatpush.bf16.msra.mxu0 %v2030
  %2072 = vmatpush.bf16.msra.mxu0 %v2026
  %2073 = vmatpush.bf16.msra.mxu0 %v2022
  %2074 = vmatpush.bf16.msra.mxu0 %v2018
  %2075 = vmatpush.bf16.msra.mxu0 %v2014
  %2076 = vmatpush.bf16.msra.mxu0 %v2010
  %2077 = vmatpush.bf16.msra.mxu0 %v2006
  %2078 = vmatmul.bf16.gmra.mxu0 %v1877
  %v2079 = vpop.f32.mrf.mxu0
  %v2080 = vadd.f32 0.0, %v2079
  %v2081 = vpop.f32.mrf.mxu0
  %2082 = vdwg.mxu0
  %2083 = vmatpush.bf16.msra.mxu0 %v2035
  %2084 = vmatpush.bf16.msra.mxu0 %v2031
  %2085 = vmatpush.bf16.msra.mxu0 %v2027
  %2086 = vmatpush.bf16.msra.mxu0 %v2023
  %2087 = vmatpush.bf16.msra.mxu0 %v2019
  %2088 = vmatpush.bf16.msra.mxu0 %v2015
  %2089 = vmatpush.bf16.msra.mxu0 %v2011
  %2090 = vmatpush.bf16.msra.mxu0 %v2007
  %2091 = vmatmul.bf16.gmra.mxu0 %v1877
  %v2092 = vpop.f32.mrf.mxu0
  %v2093 = vadd.f32 0.0, %v2092
  %v2094 = vpop.f32.mrf.mxu0
  %2095 = vdwg.mxu0
  %2096 = vmatpush.bf16.msra.mxu0 %v2036
  %2097 = vmatpush.bf16.msra.mxu0 %v2032
  %2098 = vmatpush.bf16.msra.mxu0 %v2028
  %2099 = vmatpush.bf16.msra.mxu0 %v2024
  %2100 = vmatpush.bf16.msra.mxu0 %v2020
  %2101 = vmatpush.bf16.msra.mxu0 %v2016
  %2102 = vmatpush.bf16.msra.mxu0 %v2012
  %2103 = vmatpush.bf16.msra.mxu0 %v2008
  %2104 = vmatmul.bf16.gmra.mxu0 %v1877
  %v2105 = vpop.f32.mrf.mxu0
  %v2106 = vadd.f32 0.0, %v2105
  %v2107 = vpop.f32.mrf.mxu0
  %2108 = vdwg.mxu0
  %2109 = vmatpush.bf16.msra.mxu0 %v2037
  %2110 = vmatpush.bf16.msra.mxu0 %v2033
  %2111 = vmatpush.bf16.msra.mxu0 %v2029
  %2112 = vmatpush.bf16.msra.mxu0 %v2025
  %2113 = vmatpush.bf16.msra.mxu0 %v2021
  %2114 = vmatpush.bf16.msra.mxu0 %v2017
  %2115 = vmatpush.bf16.msra.mxu0 %v2013
  %2116 = vmatpush.bf16.msra.mxu0 %v2009
  %2117 = vmatmul.bf16.gmra.mxu0 %v1877
  %v2118 = vpop.f32.mrf.mxu0
  %v2119 = vadd.f32 0.0, %v2118
  %v2120 = vpop.f32.mrf.mxu0
  %2121 = vdwg.mxu0
  %v2122 = vadd.f32 %v1872, %v2080
  %v2123 = vadd.f32 %v1873, %v2093
  %v2124 = vadd.f32 %v1874, %v2106
  %v2125 = vadd.f32 %v1875, %v2119
  %v2126 = vxor.u32 %v2122, 2147483648
  %v2127 = vxor.u32 %v2123, 2147483648
  %v2128 = vxor.u32 %v2124, 2147483648
  %v2129 = vmul.f32 %v2126, 1.442695
  %v2130 = vpow.pop %v2129
  %v2131 = vmul.f32 %v2127, 1.442695
  %v2132 = vpow.pop %v2131
  %v2133 = vmul.f32 %v2128, 1.442695
  %v2134 = vpow.pop %v2133
  %v2135 = vadd.f32 %v2130, 1.0
  %v2136 = vadd.f32 %v2132, 1.0
  %v2137 = vadd.f32 %v2134, 1.0
  %v2138 = vrcp.pop %v2135
  %v2139 = vmul.f32 %v2135, %v2138
  %v2140 = vsub.f32 1.0, %v2139
  %v2141 = vmul.f32 %v2138, %v2140
  %v2142 = vadd.f32 %v2138, %v2141
  %vm2143 = vweird.f32 %v2135
  %vm2144 = vweird.f32 %v2138
  %vm2145 = vmor %vm2143, %vm2144
  %v2146 = vsel %vm2145, %v2138, %v2142
  %v2147 = vand.u32 2147483647, %v2135
  %vm2148 = vcmp.eq.f32.partialorder %v2147, 8.507059e+37
  %v2149 = vand.u32 %v2135, 2147483648
  %v2150 = vor.u32 1.1754944e-38, %v2149
  %v2151 = vsel %vm2148, %v2150, %v2146
  %v2152 = vmul.f32 1.0, %v2151
  %v2153 = vrcp.pop %v2136
  %v2154 = vmul.f32 %v2136, %v2153
  %v2155 = vsub.f32 1.0, %v2154
  %v2156 = vmul.f32 %v2153, %v2155
  %v2157 = vadd.f32 %v2153, %v2156
  %vm2158 = vweird.f32 %v2136
  %vm2159 = vweird.f32 %v2153
  %vm2160 = vmor %vm2158, %vm2159
  %v2161 = vsel %vm2160, %v2153, %v2157
  %v2162 = vand.u32 2147483647, %v2136
  %vm2163 = vcmp.eq.f32.partialorder %v2162, 8.507059e+37
  %v2164 = vand.u32 %v2136, 2147483648
  %v2165 = vor.u32 1.1754944e-38, %v2164
  %v2166 = vsel %vm2163, %v2165, %v2161
  %v2167 = vmul.f32 1.0, %v2166
  %v2168 = vrcp.pop %v2137
  %v2169 = vmul.f32 %v2137, %v2168
  %v2170 = vsub.f32 1.0, %v2169
  %v2171 = vmul.f32 %v2168, %v2170
  %v2172 = vadd.f32 %v2168, %v2171
  %vm2173 = vweird.f32 %v2137
  %vm2174 = vweird.f32 %v2168
  %vm2175 = vmor %vm2173, %vm2174
  %v2176 = vsel %vm2175, %v2168, %v2172
  %v2177 = vand.u32 2147483647, %v2137
  %vm2178 = vcmp.eq.f32.partialorder %v2177, 8.507059e+37
  %v2179 = vand.u32 %v2137, 2147483648
  %v2180 = vor.u32 1.1754944e-38, %v2179
  %v2181 = vsel %vm2178, %v2180, %v2176
  %v2182 = vmul.f32 1.0, %v2181
  %v2183 = vtanh.pop %v2125
  %v2184 = vld [vmem:[#allocation7] sm:$0xff]
  %v2185 = vmul.f32 %v2167, %v2184
  %v2186 = vmul.f32 %v2152, %v2183
  %v2187 = vadd.f32 %v2185, %v2186
  %v2188 = vtanh.pop %v2187
  %v2189 = vmul.f32 %v2182, %v2188
  %2190 = vst [vmem:[#allocation7] sm:$0xff] %v2187
  %2191 = vst [vmem:[#allocation6] sm:$0xff] %v2189
  %s2192 = scalar_lea.vmem [#allocation5], 160
  %v2193 = vld [vmem:[%s2192] sm:$0xff]
  %v2194 = vld [vmem:[%s2192 + $0x8] sm:$0xff]
  %v2195 = vld [vmem:[%s2192 + $0x10] sm:$0xff]
  %v2196 = vld [vmem:[%s2192 + $0x18] sm:$0xff]
  %v2197 = vld [vmem:[#allocation6] sm:$0xff]
  %v2198 = vpack.c.bf16 %v2197, %v2197
  %v2199 = vld [vmem:[#allocation3] sm:$0xff]
  %v2200 = vld [vmem:[#allocation3 + $0x8] sm:$0xff]
  %v2201 = vld [vmem:[#allocation3 + $0x10] sm:$0xff]
  %v2202 = vld [vmem:[#allocation3 + $0x18] sm:$0xff]
  %v2203 = vld [vmem:[#allocation3 + $0x20] sm:$0xff]
  %v2204 = vld [vmem:[#allocation3 + $0x28] sm:$0xff]
  %v2205 = vld [vmem:[#allocation3 + $0x30] sm:$0xff]
  %v2206 = vld [vmem:[#allocation3 + $0x38] sm:$0xff]
  %v2207 = vld [vmem:[#allocation3 + $0x40] sm:$0xff]
  %v2208 = vld [vmem:[#allocation3 + $0x48] sm:$0xff]
  %v2209 = vld [vmem:[#allocation3 + $0x50] sm:$0xff]
  %v2210 = vld [vmem:[#allocation3 + $0x58] sm:$0xff]
  %v2211 = vld [vmem:[#allocation3 + $0x60] sm:$0xff]
  %v2212 = vld [vmem:[#allocation3 + $0x68] sm:$0xff]
  %v2213 = vld [vmem:[#allocation3 + $0x70] sm:$0xff]
  %v2214 = vld [vmem:[#allocation3 + $0x78] sm:$0xff]
  %v2215 = vld [vmem:[#allocation3 + $0x80] sm:$0xff]
  %v2216 = vld [vmem:[#allocation3 + $0x88] sm:$0xff]
  %v2217 = vld [vmem:[#allocation3 + $0x90] sm:$0xff]
  %v2218 = vld [vmem:[#allocation3 + $0x98] sm:$0xff]
  %v2219 = vld [vmem:[#allocation3 + $0xa0] sm:$0xff]
  %v2220 = vld [vmem:[#allocation3 + $0xa8] sm:$0xff]
  %v2221 = vld [vmem:[#allocation3 + $0xb0] sm:$0xff]
  %v2222 = vld [vmem:[#allocation3 + $0xb8] sm:$0xff]
  %v2223 = vld [vmem:[#allocation3 + $0xc0] sm:$0xff]
  %v2224 = vld [vmem:[#allocation3 + $0xc8] sm:$0xff]
  %v2225 = vld [vmem:[#allocation3 + $0xd0] sm:$0xff]
  %v2226 = vld [vmem:[#allocation3 + $0xd8] sm:$0xff]
  %v2227 = vld [vmem:[#allocation3 + $0xe0] sm:$0xff]
  %v2228 = vld [vmem:[#allocation3 + $0xe8] sm:$0xff]
  %v2229 = vld [vmem:[#allocation3 + $0xf0] sm:$0xff]
  %v2230 = vld [vmem:[#allocation3 + $0xf8] sm:$0xff]
  %v2263 = vunpack.c.l.b16 %v2199
  %v2264 = vunpack.c.h.b16 %v2199
  %v2265 = vunpack.c.l.b16 %v2200
  %v2266 = vunpack.c.h.b16 %v2200
  %v2267 = vunpack.c.l.b16 %v2201
  %v2268 = vunpack.c.h.b16 %v2201
  %v2269 = vunpack.c.l.b16 %v2202
  %v2270 = vunpack.c.h.b16 %v2202
  %v2271 = vunpack.c.l.b16 %v2203
  %v2272 = vunpack.c.h.b16 %v2203
  %v2273 = vunpack.c.l.b16 %v2204
  %v2274 = vunpack.c.h.b16 %v2204
  %v2275 = vunpack.c.l.b16 %v2205
  %v2276 = vunpack.c.h.b16 %v2205
  %v2277 = vunpack.c.l.b16 %v2206
  %v2278 = vunpack.c.h.b16 %v2206
  %v2279 = vunpack.c.l.b16 %v2207
  %v2280 = vunpack.c.h.b16 %v2207
  %v2281 = vunpack.c.l.b16 %v2208
  %v2282 = vunpack.c.h.b16 %v2208
  %v2283 = vunpack.c.l.b16 %v2209
  %v2284 = vunpack.c.h.b16 %v2209
  %v2285 = vunpack.c.l.b16 %v2210
  %v2286 = vunpack.c.h.b16 %v2210
  %v2287 = vunpack.c.l.b16 %v2211
  %v2288 = vunpack.c.h.b16 %v2211
  %v2289 = vunpack.c.l.b16 %v2212
  %v2290 = vunpack.c.h.b16 %v2212
  %v2291 = vunpack.c.l.b16 %v2213
  %v2292 = vunpack.c.h.b16 %v2213
  %v2293 = vunpack.c.l.b16 %v2214
  %v2294 = vunpack.c.h.b16 %v2214
  %v2295 = vunpack.c.l.b16 %v2215
  %v2296 = vunpack.c.h.b16 %v2215
  %v2297 = vunpack.c.l.b16 %v2216
  %v2298 = vunpack.c.h.b16 %v2216
  %v2299 = vunpack.c.l.b16 %v2217
  %v2300 = vunpack.c.h.b16 %v2217
  %v2301 = vunpack.c.l.b16 %v2218
  %v2302 = vunpack.c.h.b16 %v2218
  %v2303 = vunpack.c.l.b16 %v2219
  %v2304 = vunpack.c.h.b16 %v2219
  %v2305 = vunpack.c.l.b16 %v2220
  %v2306 = vunpack.c.h.b16 %v2220
  %v2307 = vunpack.c.l.b16 %v2221
  %v2308 = vunpack.c.h.b16 %v2221
  %v2309 = vunpack.c.l.b16 %v2222
  %v2310 = vunpack.c.h.b16 %v2222
  %v2311 = vunpack.c.l.b16 %v2223
  %v2312 = vunpack.c.h.b16 %v2223
  %v2313 = vunpack.c.l.b16 %v2224
  %v2314 = vunpack.c.h.b16 %v2224
  %v2315 = vunpack.c.l.b16 %v2225
  %v2316 = vunpack.c.h.b16 %v2225
  %v2317 = vunpack.c.l.b16 %v2226
  %v2318 = vunpack.c.h.b16 %v2226
  %v2319 = vunpack.c.l.b16 %v2227
  %v2320 = vunpack.c.h.b16 %v2227
  %v2321 = vunpack.c.l.b16 %v2228
  %v2322 = vunpack.c.h.b16 %v2228
  %v2323 = vunpack.c.l.b16 %v2229
  %v2324 = vunpack.c.h.b16 %v2229
  %v2325 = vunpack.c.l.b16 %v2230
  %v2326 = vunpack.c.h.b16 %v2230
  %v2327 = vpack.c.b16 %v2267, %v2263
  %v2328 = vpack.c.b16 %v2268, %v2264
  %v2329 = vpack.c.b16 %v2269, %v2265
  %v2330 = vpack.c.b16 %v2270, %v2266
  %v2331 = vpack.c.b16 %v2275, %v2271
  %v2332 = vpack.c.b16 %v2276, %v2272
  %v2333 = vpack.c.b16 %v2277, %v2273
  %v2334 = vpack.c.b16 %v2278, %v2274
  %v2335 = vpack.c.b16 %v2283, %v2279
  %v2336 = vpack.c.b16 %v2284, %v2280
  %v2337 = vpack.c.b16 %v2285, %v2281
  %v2338 = vpack.c.b16 %v2286, %v2282
  %v2339 = vpack.c.b16 %v2291, %v2287
  %v2340 = vpack.c.b16 %v2292, %v2288
  %v2341 = vpack.c.b16 %v2293, %v2289
  %v2342 = vpack.c.b16 %v2294, %v2290
  %v2343 = vpack.c.b16 %v2299, %v2295
  %v2344 = vpack.c.b16 %v2300, %v2296
  %v2345 = vpack.c.b16 %v2301, %v2297
  %v2346 = vpack.c.b16 %v2302, %v2298
  %v2347 = vpack.c.b16 %v2307, %v2303
  %v2348 = vpack.c.b16 %v2308, %v2304
  %v2349 = vpack.c.b16 %v2309, %v2305
  %v2350 = vpack.c.b16 %v2310, %v2306
  %v2351 = vpack.c.b16 %v2315, %v2311
  %v2352 = vpack.c.b16 %v2316, %v2312
  %v2353 = vpack.c.b16 %v2317, %v2313
  %v2354 = vpack.c.b16 %v2318, %v2314
  %v2355 = vpack.c.b16 %v2323, %v2319
  %v2356 = vpack.c.b16 %v2324, %v2320
  %v2357 = vpack.c.b16 %v2325, %v2321
  %v2358 = vpack.c.b16 %v2326, %v2322
  %2391 = vmatpush.bf16.msra.mxu0 %v2355
  %2392 = vmatpush.bf16.msra.mxu0 %v2351
  %2393 = vmatpush.bf16.msra.mxu0 %v2347
  %2394 = vmatpush.bf16.msra.mxu0 %v2343
  %2395 = vmatpush.bf16.msra.mxu0 %v2339
  %2396 = vmatpush.bf16.msra.mxu0 %v2335
  %2397 = vmatpush.bf16.msra.mxu0 %v2331
  %2398 = vmatpush.bf16.msra.mxu0 %v2327
  %2399 = vmatmul.bf16.gmra.mxu0 %v2198
  %v2400 = vpop.f32.mrf.mxu0
  %v2401 = vadd.f32 0.0, %v2400
  %v2402 = vpop.f32.mrf.mxu0
  %2403 = vdwg.mxu0
  %2404 = vmatpush.bf16.msra.mxu0 %v2356
  %2405 = vmatpush.bf16.msra.mxu0 %v2352
  %2406 = vmatpush.bf16.msra.mxu0 %v2348
  %2407 = vmatpush.bf16.msra.mxu0 %v2344
  %2408 = vmatpush.bf16.msra.mxu0 %v2340
  %2409 = vmatpush.bf16.msra.mxu0 %v2336
  %2410 = vmatpush.bf16.msra.mxu0 %v2332
  %2411 = vmatpush.bf16.msra.mxu0 %v2328
  %2412 = vmatmul.bf16.gmra.mxu0 %v2198
  %v2413 = vpop.f32.mrf.mxu0
  %v2414 = vadd.f32 0.0, %v2413
  %v2415 = vpop.f32.mrf.mxu0
  %2416 = vdwg.mxu0
  %2417 = vmatpush.bf16.msra.mxu0 %v2357
  %2418 = vmatpush.bf16.msra.mxu0 %v2353
  %2419 = vmatpush.bf16.msra.mxu0 %v2349
  %2420 = vmatpush.bf16.msra.mxu0 %v2345
  %2421 = vmatpush.bf16.msra.mxu0 %v2341
  %2422 = vmatpush.bf16.msra.mxu0 %v2337
  %2423 = vmatpush.bf16.msra.mxu0 %v2333
  %2424 = vmatpush.bf16.msra.mxu0 %v2329
  %2425 = vmatmul.bf16.gmra.mxu0 %v2198
  %v2426 = vpop.f32.mrf.mxu0
  %v2427 = vadd.f32 0.0, %v2426
  %v2428 = vpop.f32.mrf.mxu0
  %2429 = vdwg.mxu0
  %2430 = vmatpush.bf16.msra.mxu0 %v2358
  %2431 = vmatpush.bf16.msra.mxu0 %v2354
  %2432 = vmatpush.bf16.msra.mxu0 %v2350
  %2433 = vmatpush.bf16.msra.mxu0 %v2346
  %2434 = vmatpush.bf16.msra.mxu0 %v2342
  %2435 = vmatpush.bf16.msra.mxu0 %v2338
  %2436 = vmatpush.bf16.msra.mxu0 %v2334
  %2437 = vmatpush.bf16.msra.mxu0 %v2330
  %2438 = vmatmul.bf16.gmra.mxu0 %v2198
  %v2439 = vpop.f32.mrf.mxu0
  %v2440 = vadd.f32 0.0, %v2439
  %v2441 = vpop.f32.mrf.mxu0
  %2442 = vdwg.mxu0
  %v2443 = vadd.f32 %v2193, %v2401
  %v2444 = vadd.f32 %v2194, %v2414
  %v2445 = vadd.f32 %v2195, %v2427
  %v2446 = vadd.f32 %v2196, %v2440
  %v2447 = vxor.u32 %v2443, 2147483648
  %v2448 = vxor.u32 %v2444, 2147483648
  %v2449 = vxor.u32 %v2445, 2147483648
  %v2450 = vmul.f32 %v2447, 1.442695
  %v2451 = vpow.pop %v2450
  %v2452 = vmul.f32 %v2448, 1.442695
  %v2453 = vpow.pop %v2452
  %v2454 = vmul.f32 %v2449, 1.442695
  %v2455 = vpow.pop %v2454
  %v2456 = vadd.f32 %v2451, 1.0
  %v2457 = vadd.f32 %v2453, 1.0
  %v2458 = vadd.f32 %v2455, 1.0
  %v2459 = vrcp.pop %v2456
  %v2460 = vmul.f32 %v2456, %v2459
  %v2461 = vsub.f32 1.0, %v2460
  %v2462 = vmul.f32 %v2459, %v2461
  %v2463 = vadd.f32 %v2459, %v2462
  %vm2464 = vweird.f32 %v2456
  %vm2465 = vweird.f32 %v2459
  %vm2466 = vmor %vm2464, %vm2465
  %v2467 = vsel %vm2466, %v2459, %v2463
  %v2468 = vand.u32 2147483647, %v2456
  %vm2469 = vcmp.eq.f32.partialorder %v2468, 8.507059e+37
  %v2470 = vand.u32 %v2456, 2147483648
  %v2471 = vor.u32 1.1754944e-38, %v2470
  %v2472 = vsel %vm2469, %v2471, %v2467
  %v2473 = vmul.f32 1.0, %v2472
  %v2474 = vrcp.pop %v2457
  %v2475 = vmul.f32 %v2457, %v2474
  %v2476 = vsub.f32 1.0, %v2475
  %v2477 = vmul.f32 %v2474, %v2476
  %v2478 = vadd.f32 %v2474, %v2477
  %vm2479 = vweird.f32 %v2457
  %vm2480 = vweird.f32 %v2474
  %vm2481 = vmor %vm2479, %vm2480
  %v2482 = vsel %vm2481, %v2474, %v2478
  %v2483 = vand.u32 2147483647, %v2457
  %vm2484 = vcmp.eq.f32.partialorder %v2483, 8.507059e+37
  %v2485 = vand.u32 %v2457, 2147483648
  %v2486 = vor.u32 1.1754944e-38, %v2485
  %v2487 = vsel %vm2484, %v2486, %v2482
  %v2488 = vmul.f32 1.0, %v2487
  %v2489 = vrcp.pop %v2458
  %v2490 = vmul.f32 %v2458, %v2489
  %v2491 = vsub.f32 1.0, %v2490
  %v2492 = vmul.f32 %v2489, %v2491
  %v2493 = vadd.f32 %v2489, %v2492
  %vm2494 = vweird.f32 %v2458
  %vm2495 = vweird.f32 %v2489
  %vm2496 = vmor %vm2494, %vm2495
  %v2497 = vsel %vm2496, %v2489, %v2493
  %v2498 = vand.u32 2147483647, %v2458
  %vm2499 = vcmp.eq.f32.partialorder %v2498, 8.507059e+37
  %v2500 = vand.u32 %v2458, 2147483648
  %v2501 = vor.u32 1.1754944e-38, %v2500
  %v2502 = vsel %vm2499, %v2501, %v2497
  %v2503 = vmul.f32 1.0, %v2502
  %v2504 = vtanh.pop %v2446
  %v2505 = vld [vmem:[#allocation7] sm:$0xff]
  %v2506 = vmul.f32 %v2488, %v2505
  %v2507 = vmul.f32 %v2473, %v2504
  %v2508 = vadd.f32 %v2506, %v2507
  %v2509 = vtanh.pop %v2508
  %v2510 = vmul.f32 %v2503, %v2509
  %2511 = vst [vmem:[#allocation7] sm:$0xff] %v2508
  %2512 = vst [vmem:[#allocation6] sm:$0xff] %v2510
  %s2513 = scalar_lea.vmem [#allocation5], 192
  %v2514 = vld [vmem:[%s2513] sm:$0xff]
  %v2515 = vld [vmem:[%s2513 + $0x8] sm:$0xff]
  %v2516 = vld [vmem:[%s2513 + $0x10] sm:$0xff]
  %v2517 = vld [vmem:[%s2513 + $0x18] sm:$0xff]
  %v2518 = vld [vmem:[#allocation6] sm:$0xff]
  %v2519 = vpack.c.bf16 %v2518, %v2518
  %v2520 = vld [vmem:[#allocation3] sm:$0xff]
  %v2521 = vld [vmem:[#allocation3 + $0x8] sm:$0xff]
  %v2522 = vld [vmem:[#allocation3 + $0x10] sm:$0xff]
  %v2523 = vld [vmem:[#allocation3 + $0x18] sm:$0xff]
  %v2524 = vld [vmem:[#allocation3 + $0x20] sm:$0xff]
  %v2525 = vld [vmem:[#allocation3 + $0x28] sm:$0xff]
  %v2526 = vld [vmem:[#allocation3 + $0x30] sm:$0xff]
  %v2527 = vld [vmem:[#allocation3 + $0x38] sm:$0xff]
  %v2528 = vld [vmem:[#allocation3 + $0x40] sm:$0xff]
  %v2529 = vld [vmem:[#allocation3 + $0x48] sm:$0xff]
  %v2530 = vld [vmem:[#allocation3 + $0x50] sm:$0xff]
  %v2531 = vld [vmem:[#allocation3 + $0x58] sm:$0xff]
  %v2532 = vld [vmem:[#allocation3 + $0x60] sm:$0xff]
  %v2533 = vld [vmem:[#allocation3 + $0x68] sm:$0xff]
  %v2534 = vld [vmem:[#allocation3 + $0x70] sm:$0xff]
  %v2535 = vld [vmem:[#allocation3 + $0x78] sm:$0xff]
  %v2536 = vld [vmem:[#allocation3 + $0x80] sm:$0xff]
  %v2537 = vld [vmem:[#allocation3 + $0x88] sm:$0xff]
  %v2538 = vld [vmem:[#allocation3 + $0x90] sm:$0xff]
  %v2539 = vld [vmem:[#allocation3 + $0x98] sm:$0xff]
  %v2540 = vld [vmem:[#allocation3 + $0xa0] sm:$0xff]
  %v2541 = vld [vmem:[#allocation3 + $0xa8] sm:$0xff]
  %v2542 = vld [vmem:[#allocation3 + $0xb0] sm:$0xff]
  %v2543 = vld [vmem:[#allocation3 + $0xb8] sm:$0xff]
  %v2544 = vld [vmem:[#allocation3 + $0xc0] sm:$0xff]
  %v2545 = vld [vmem:[#allocation3 + $0xc8] sm:$0xff]
  %v2546 = vld [vmem:[#allocation3 + $0xd0] sm:$0xff]
  %v2547 = vld [vmem:[#allocation3 + $0xd8] sm:$0xff]
  %v2548 = vld [vmem:[#allocation3 + $0xe0] sm:$0xff]
  %v2549 = vld [vmem:[#allocation3 + $0xe8] sm:$0xff]
  %v2550 = vld [vmem:[#allocation3 + $0xf0] sm:$0xff]
  %v2551 = vld [vmem:[#allocation3 + $0xf8] sm:$0xff]
  %v2584 = vunpack.c.l.b16 %v2520
  %v2585 = vunpack.c.h.b16 %v2520
  %v2586 = vunpack.c.l.b16 %v2521
  %v2587 = vunpack.c.h.b16 %v2521
  %v2588 = vunpack.c.l.b16 %v2522
  %v2589 = vunpack.c.h.b16 %v2522
  %v2590 = vunpack.c.l.b16 %v2523
  %v2591 = vunpack.c.h.b16 %v2523
  %v2592 = vunpack.c.l.b16 %v2524
  %v2593 = vunpack.c.h.b16 %v2524
  %v2594 = vunpack.c.l.b16 %v2525
  %v2595 = vunpack.c.h.b16 %v2525
  %v2596 = vunpack.c.l.b16 %v2526
  %v2597 = vunpack.c.h.b16 %v2526
  %v2598 = vunpack.c.l.b16 %v2527
  %v2599 = vunpack.c.h.b16 %v2527
  %v2600 = vunpack.c.l.b16 %v2528
  %v2601 = vunpack.c.h.b16 %v2528
  %v2602 = vunpack.c.l.b16 %v2529
  %v2603 = vunpack.c.h.b16 %v2529
  %v2604 = vunpack.c.l.b16 %v2530
  %v2605 = vunpack.c.h.b16 %v2530
  %v2606 = vunpack.c.l.b16 %v2531
  %v2607 = vunpack.c.h.b16 %v2531
  %v2608 = vunpack.c.l.b16 %v2532
  %v2609 = vunpack.c.h.b16 %v2532
  %v2610 = vunpack.c.l.b16 %v2533
  %v2611 = vunpack.c.h.b16 %v2533
  %v2612 = vunpack.c.l.b16 %v2534
  %v2613 = vunpack.c.h.b16 %v2534
  %v2614 = vunpack.c.l.b16 %v2535
  %v2615 = vunpack.c.h.b16 %v2535
  %v2616 = vunpack.c.l.b16 %v2536
  %v2617 = vunpack.c.h.b16 %v2536
  %v2618 = vunpack.c.l.b16 %v2537
  %v2619 = vunpack.c.h.b16 %v2537
  %v2620 = vunpack.c.l.b16 %v2538
  %v2621 = vunpack.c.h.b16 %v2538
  %v2622 = vunpack.c.l.b16 %v2539
  %v2623 = vunpack.c.h.b16 %v2539
  %v2624 = vunpack.c.l.b16 %v2540
  %v2625 = vunpack.c.h.b16 %v2540
  %v2626 = vunpack.c.l.b16 %v2541
  %v2627 = vunpack.c.h.b16 %v2541
  %v2628 = vunpack.c.l.b16 %v2542
  %v2629 = vunpack.c.h.b16 %v2542
  %v2630 = vunpack.c.l.b16 %v2543
  %v2631 = vunpack.c.h.b16 %v2543
  %v2632 = vunpack.c.l.b16 %v2544
  %v2633 = vunpack.c.h.b16 %v2544
  %v2634 = vunpack.c.l.b16 %v2545
  %v2635 = vunpack.c.h.b16 %v2545
  %v2636 = vunpack.c.l.b16 %v2546
  %v2637 = vunpack.c.h.b16 %v2546
  %v2638 = vunpack.c.l.b16 %v2547
  %v2639 = vunpack.c.h.b16 %v2547
  %v2640 = vunpack.c.l.b16 %v2548
  %v2641 = vunpack.c.h.b16 %v2548
  %v2642 = vunpack.c.l.b16 %v2549
  %v2643 = vunpack.c.h.b16 %v2549
  %v2644 = vunpack.c.l.b16 %v2550
  %v2645 = vunpack.c.h.b16 %v2550
  %v2646 = vunpack.c.l.b16 %v2551
  %v2647 = vunpack.c.h.b16 %v2551
  %v2648 = vpack.c.b16 %v2588, %v2584
  %v2649 = vpack.c.b16 %v2589, %v2585
  %v2650 = vpack.c.b16 %v2590, %v2586
  %v2651 = vpack.c.b16 %v2591, %v2587
  %v2652 = vpack.c.b16 %v2596, %v2592
  %v2653 = vpack.c.b16 %v2597, %v2593
  %v2654 = vpack.c.b16 %v2598, %v2594
  %v2655 = vpack.c.b16 %v2599, %v2595
  %v2656 = vpack.c.b16 %v2604, %v2600
  %v2657 = vpack.c.b16 %v2605, %v2601
  %v2658 = vpack.c.b16 %v2606, %v2602
  %v2659 = vpack.c.b16 %v2607, %v2603
  %v2660 = vpack.c.b16 %v2612, %v2608
  %v2661 = vpack.c.b16 %v2613, %v2609
  %v2662 = vpack.c.b16 %v2614, %v2610
  %v2663 = vpack.c.b16 %v2615, %v2611
  %v2664 = vpack.c.b16 %v2620, %v2616
  %v2665 = vpack.c.b16 %v2621, %v2617
  %v2666 = vpack.c.b16 %v2622, %v2618
  %v2667 = vpack.c.b16 %v2623, %v2619
  %v2668 = vpack.c.b16 %v2628, %v2624
  %v2669 = vpack.c.b16 %v2629, %v2625
  %v2670 = vpack.c.b16 %v2630, %v2626
  %v2671 = vpack.c.b16 %v2631, %v2627
  %v2672 = vpack.c.b16 %v2636, %v2632
  %v2673 = vpack.c.b16 %v2637, %v2633
  %v2674 = vpack.c.b16 %v2638, %v2634
  %v2675 = vpack.c.b16 %v2639, %v2635
  %v2676 = vpack.c.b16 %v2644, %v2640
  %v2677 = vpack.c.b16 %v2645, %v2641
  %v2678 = vpack.c.b16 %v2646, %v2642
  %v2679 = vpack.c.b16 %v2647, %v2643
  %2712 = vmatpush.bf16.msra.mxu0 %v2676
  %2713 = vmatpush.bf16.msra.mxu0 %v2672
  %2714 = vmatpush.bf16.msra.mxu0 %v2668
  %2715 = vmatpush.bf16.msra.mxu0 %v2664
  %2716 = vmatpush.bf16.msra.mxu0 %v2660
  %2717 = vmatpush.bf16.msra.mxu0 %v2656
  %2718 = vmatpush.bf16.msra.mxu0 %v2652
  %2719 = vmatpush.bf16.msra.mxu0 %v2648
  %2720 = vmatmul.bf16.gmra.mxu0 %v2519
  %v2721 = vpop.f32.mrf.mxu0
  %v2722 = vadd.f32 0.0, %v2721
  %v2723 = vpop.f32.mrf.mxu0
  %2724 = vdwg.mxu0
  %2725 = vmatpush.bf16.msra.mxu0 %v2677
  %2726 = vmatpush.bf16.msra.mxu0 %v2673
  %2727 = vmatpush.bf16.msra.mxu0 %v2669
  %2728 = vmatpush.bf16.msra.mxu0 %v2665
  %2729 = vmatpush.bf16.msra.mxu0 %v2661
  %2730 = vmatpush.bf16.msra.mxu0 %v2657
  %2731 = vmatpush.bf16.msra.mxu0 %v2653
  %2732 = vmatpush.bf16.msra.mxu0 %v2649
  %2733 = vmatmul.bf16.gmra.mxu0 %v2519
  %v2734 = vpop.f32.mrf.mxu0
  %v2735 = vadd.f32 0.0, %v2734
  %v2736 = vpop.f32.mrf.mxu0
  %2737 = vdwg.mxu0
  %2738 = vmatpush.bf16.msra.mxu0 %v2678
  %2739 = vmatpush.bf16.msra.mxu0 %v2674
  %2740 = vmatpush.bf16.msra.mxu0 %v2670
  %2741 = vmatpush.bf16.msra.mxu0 %v2666
  %2742 = vmatpush.bf16.msra.mxu0 %v2662
  %2743 = vmatpush.bf16.msra.mxu0 %v2658
  %2744 = vmatpush.bf16.msra.mxu0 %v2654
  %2745 = vmatpush.bf16.msra.mxu0 %v2650
  %2746 = vmatmul.bf16.gmra.mxu0 %v2519
  %v2747 = vpop.f32.mrf.mxu0
  %v2748 = vadd.f32 0.0, %v2747
  %v2749 = vpop.f32.mrf.mxu0
  %2750 = vdwg.mxu0
  %2751 = vmatpush.bf16.msra.mxu0 %v2679
  %2752 = vmatpush.bf16.msra.mxu0 %v2675
  %2753 = vmatpush.bf16.msra.mxu0 %v2671
  %2754 = vmatpush.bf16.msra.mxu0 %v2667
  %2755 = vmatpush.bf16.msra.mxu0 %v2663
  %2756 = vmatpush.bf16.msra.mxu0 %v2659
  %2757 = vmatpush.bf16.msra.mxu0 %v2655
  %2758 = vmatpush.bf16.msra.mxu0 %v2651
  %2759 = vmatmul.bf16.gmra.mxu0 %v2519
  %v2760 = vpop.f32.mrf.mxu0
  %v2761 = vadd.f32 0.0, %v2760
  %v2762 = vpop.f32.mrf.mxu0
  %2763 = vdwg.mxu0
  %v2764 = vadd.f32 %v2514, %v2722
  %v2765 = vadd.f32 %v2515, %v2735
  %v2766 = vadd.f32 %v2516, %v2748
  %v2767 = vadd.f32 %v2517, %v2761
  %v2768 = vxor.u32 %v2764, 2147483648
  %v2769 = vxor.u32 %v2765, 2147483648
  %v2770 = vxor.u32 %v2766, 2147483648
  %v2771 = vmul.f32 %v2768, 1.442695
  %v2772 = vpow.pop %v2771
  %v2773 = vmul.f32 %v2769, 1.442695
  %v2774 = vpow.pop %v2773
  %v2775 = vmul.f32 %v2770, 1.442695
  %v2776 = vpow.pop %v2775
  %v2777 = vadd.f32 %v2772, 1.0
  %v2778 = vadd.f32 %v2774, 1.0
  %v2779 = vadd.f32 %v2776, 1.0
  %v2780 = vrcp.pop %v2777
  %v2781 = vmul.f32 %v2777, %v2780
  %v2782 = vsub.f32 1.0, %v2781
  %v2783 = vmul.f32 %v2780, %v2782
  %v2784 = vadd.f32 %v2780, %v2783
  %vm2785 = vweird.f32 %v2777
  %vm2786 = vweird.f32 %v2780
  %vm2787 = vmor %vm2785, %vm2786
  %v2788 = vsel %vm2787, %v2780, %v2784
  %v2789 = vand.u32 2147483647, %v2777
  %vm2790 = vcmp.eq.f32.partialorder %v2789, 8.507059e+37
  %v2791 = vand.u32 %v2777, 2147483648
  %v2792 = vor.u32 1.1754944e-38, %v2791
  %v2793 = vsel %vm2790, %v2792, %v2788
  %v2794 = vmul.f32 1.0, %v2793
  %v2795 = vrcp.pop %v2778
  %v2796 = vmul.f32 %v2778, %v2795
  %v2797 = vsub.f32 1.0, %v2796
  %v2798 = vmul.f32 %v2795, %v2797
  %v2799 = vadd.f32 %v2795, %v2798
  %vm2800 = vweird.f32 %v2778
  %vm2801 = vweird.f32 %v2795
  %vm2802 = vmor %vm2800, %vm2801
  %v2803 = vsel %vm2802, %v2795, %v2799
  %v2804 = vand.u32 2147483647, %v2778
  %vm2805 = vcmp.eq.f32.partialorder %v2804, 8.507059e+37
  %v2806 = vand.u32 %v2778, 2147483648
  %v2807 = vor.u32 1.1754944e-38, %v2806
  %v2808 = vsel %vm2805, %v2807, %v2803
  %v2809 = vmul.f32 1.0, %v2808
  %v2810 = vrcp.pop %v2779
  %v2811 = vmul.f32 %v2779, %v2810
  %v2812 = vsub.f32 1.0, %v2811
  %v2813 = vmul.f32 %v2810, %v2812
  %v2814 = vadd.f32 %v2810, %v2813
  %vm2815 = vweird.f32 %v2779
  %vm2816 = vweird.f32 %v2810
  %vm2817 = vmor %vm2815, %vm2816
  %v2818 = vsel %vm2817, %v2810, %v2814
  %v2819 = vand.u32 2147483647, %v2779
  %vm2820 = vcmp.eq.f32.partialorder %v2819, 8.507059e+37
  %v2821 = vand.u32 %v2779, 2147483648
  %v2822 = vor.u32 1.1754944e-38, %v2821
  %v2823 = vsel %vm2820, %v2822, %v2818
  %v2824 = vmul.f32 1.0, %v2823
  %v2825 = vtanh.pop %v2767
  %v2826 = vld [vmem:[#allocation7] sm:$0xff]
  %v2827 = vmul.f32 %v2809, %v2826
  %v2828 = vmul.f32 %v2794, %v2825
  %v2829 = vadd.f32 %v2827, %v2828
  %v2830 = vtanh.pop %v2829
  %v2831 = vmul.f32 %v2824, %v2830
  %2832 = vst [vmem:[#allocation7] sm:$0xff] %v2829
  %2833 = vst [vmem:[#allocation6] sm:$0xff] %v2831
  %s2834 = scalar_lea.vmem [#allocation5], 224
  %v2835 = vld [vmem:[%s2834] sm:$0xff]
  %v2836 = vld [vmem:[%s2834 + $0x8] sm:$0xff]
  %v2837 = vld [vmem:[%s2834 + $0x10] sm:$0xff]
  %v2838 = vld [vmem:[%s2834 + $0x18] sm:$0xff]
  %v2839 = vld [vmem:[#allocation6] sm:$0xff]
  %v2840 = vpack.c.bf16 %v2839, %v2839
  %v2841 = vld [vmem:[#allocation3] sm:$0xff]
  %v2842 = vld [vmem:[#allocation3 + $0x8] sm:$0xff]
  %v2843 = vld [vmem:[#allocation3 + $0x10] sm:$0xff]
  %v2844 = vld [vmem:[#allocation3 + $0x18] sm:$0xff]
  %v2845 = vld [vmem:[#allocation3 + $0x20] sm:$0xff]
  %v2846 = vld [vmem:[#allocation3 + $0x28] sm:$0xff]
  %v2847 = vld [vmem:[#allocation3 + $0x30] sm:$0xff]
  %v2848 = vld [vmem:[#allocation3 + $0x38] sm:$0xff]
  %v2849 = vld [vmem:[#allocation3 + $0x40] sm:$0xff]
  %v2850 = vld [vmem:[#allocation3 + $0x48] sm:$0xff]
  %v2851 = vld [vmem:[#allocation3 + $0x50] sm:$0xff]
  %v2852 = vld [vmem:[#allocation3 + $0x58] sm:$0xff]
  %v2853 = vld [vmem:[#allocation3 + $0x60] sm:$0xff]
  %v2854 = vld [vmem:[#allocation3 + $0x68] sm:$0xff]
  %v2855 = vld [vmem:[#allocation3 + $0x70] sm:$0xff]
  %v2856 = vld [vmem:[#allocation3 + $0x78] sm:$0xff]
  %v2857 = vld [vmem:[#allocation3 + $0x80] sm:$0xff]
  %v2858 = vld [vmem:[#allocation3 + $0x88] sm:$0xff]
  %v2859 = vld [vmem:[#allocation3 + $0x90] sm:$0xff]
  %v2860 = vld [vmem:[#allocation3 + $0x98] sm:$0xff]
  %v2861 = vld [vmem:[#allocation3 + $0xa0] sm:$0xff]
  %v2862 = vld [vmem:[#allocation3 + $0xa8] sm:$0xff]
  %v2863 = vld [vmem:[#allocation3 + $0xb0] sm:$0xff]
  %v2864 = vld [vmem:[#allocation3 + $0xb8] sm:$0xff]
  %v2865 = vld [vmem:[#allocation3 + $0xc0] sm:$0xff]
  %v2866 = vld [vmem:[#allocation3 + $0xc8] sm:$0xff]
  %v2867 = vld [vmem:[#allocation3 + $0xd0] sm:$0xff]
  %v2868 = vld [vmem:[#allocation3 + $0xd8] sm:$0xff]
  %v2869 = vld [vmem:[#allocation3 + $0xe0] sm:$0xff]
  %v2870 = vld [vmem:[#allocation3 + $0xe8] sm:$0xff]
  %v2871 = vld [vmem:[#allocation3 + $0xf0] sm:$0xff]
  %v2872 = vld [vmem:[#allocation3 + $0xf8] sm:$0xff]
  %v2905 = vunpack.c.l.b16 %v2841
  %v2906 = vunpack.c.h.b16 %v2841
  %v2907 = vunpack.c.l.b16 %v2842
  %v2908 = vunpack.c.h.b16 %v2842
  %v2909 = vunpack.c.l.b16 %v2843
  %v2910 = vunpack.c.h.b16 %v2843
  %v2911 = vunpack.c.l.b16 %v2844
  %v2912 = vunpack.c.h.b16 %v2844
  %v2913 = vunpack.c.l.b16 %v2845
  %v2914 = vunpack.c.h.b16 %v2845
  %v2915 = vunpack.c.l.b16 %v2846
  %v2916 = vunpack.c.h.b16 %v2846
  %v2917 = vunpack.c.l.b16 %v2847
  %v2918 = vunpack.c.h.b16 %v2847
  %v2919 = vunpack.c.l.b16 %v2848
  %v2920 = vunpack.c.h.b16 %v2848
  %v2921 = vunpack.c.l.b16 %v2849
  %v2922 = vunpack.c.h.b16 %v2849
  %v2923 = vunpack.c.l.b16 %v2850
  %v2924 = vunpack.c.h.b16 %v2850
  %v2925 = vunpack.c.l.b16 %v2851
  %v2926 = vunpack.c.h.b16 %v2851
  %v2927 = vunpack.c.l.b16 %v2852
  %v2928 = vunpack.c.h.b16 %v2852
  %v2929 = vunpack.c.l.b16 %v2853
  %v2930 = vunpack.c.h.b16 %v2853
  %v2931 = vunpack.c.l.b16 %v2854
  %v2932 = vunpack.c.h.b16 %v2854
  %v2933 = vunpack.c.l.b16 %v2855
  %v2934 = vunpack.c.h.b16 %v2855
  %v2935 = vunpack.c.l.b16 %v2856
  %v2936 = vunpack.c.h.b16 %v2856
  %v2937 = vunpack.c.l.b16 %v2857
  %v2938 = vunpack.c.h.b16 %v2857
  %v2939 = vunpack.c.l.b16 %v2858
  %v2940 = vunpack.c.h.b16 %v2858
  %v2941 = vunpack.c.l.b16 %v2859
  %v2942 = vunpack.c.h.b16 %v2859
  %v2943 = vunpack.c.l.b16 %v2860
  %v2944 = vunpack.c.h.b16 %v2860
  %v2945 = vunpack.c.l.b16 %v2861
  %v2946 = vunpack.c.h.b16 %v2861
  %v2947 = vunpack.c.l.b16 %v2862
  %v2948 = vunpack.c.h.b16 %v2862
  %v2949 = vunpack.c.l.b16 %v2863
  %v2950 = vunpack.c.h.b16 %v2863
  %v2951 = vunpack.c.l.b16 %v2864
  %v2952 = vunpack.c.h.b16 %v2864
  %v2953 = vunpack.c.l.b16 %v2865
  %v2954 = vunpack.c.h.b16 %v2865
  %v2955 = vunpack.c.l.b16 %v2866
  %v2956 = vunpack.c.h.b16 %v2866
  %v2957 = vunpack.c.l.b16 %v2867
  %v2958 = vunpack.c.h.b16 %v2867
  %v2959 = vunpack.c.l.b16 %v2868
  %v2960 = vunpack.c.h.b16 %v2868
  %v2961 = vunpack.c.l.b16 %v2869
  %v2962 = vunpack.c.h.b16 %v2869
  %v2963 = vunpack.c.l.b16 %v2870
  %v2964 = vunpack.c.h.b16 %v2870
  %v2965 = vunpack.c.l.b16 %v2871
  %v2966 = vunpack.c.h.b16 %v2871
  %v2967 = vunpack.c.l.b16 %v2872
  %v2968 = vunpack.c.h.b16 %v2872
  %v2969 = vpack.c.b16 %v2909, %v2905
  %v2970 = vpack.c.b16 %v2910, %v2906
  %v2971 = vpack.c.b16 %v2911, %v2907
  %v2972 = vpack.c.b16 %v2912, %v2908
  %v2973 = vpack.c.b16 %v2917, %v2913
  %v2974 = vpack.c.b16 %v2918, %v2914
  %v2975 = vpack.c.b16 %v2919, %v2915
  %v2976 = vpack.c.b16 %v2920, %v2916
  %v2977 = vpack.c.b16 %v2925, %v2921
  %v2978 = vpack.c.b16 %v2926, %v2922
  %v2979 = vpack.c.b16 %v2927, %v2923
  %v2980 = vpack.c.b16 %v2928, %v2924
  %v2981 = vpack.c.b16 %v2933, %v2929
  %v2982 = vpack.c.b16 %v2934, %v2930
  %v2983 = vpack.c.b16 %v2935, %v2931
  %v2984 = vpack.c.b16 %v2936, %v2932
  %v2985 = vpack.c.b16 %v2941, %v2937
  %v2986 = vpack.c.b16 %v2942, %v2938
  %v2987 = vpack.c.b16 %v2943, %v2939
  %v2988 = vpack.c.b16 %v2944, %v2940
  %v2989 = vpack.c.b16 %v2949, %v2945
  %v2990 = vpack.c.b16 %v2950, %v2946
  %v2991 = vpack.c.b16 %v2951, %v2947
  %v2992 = vpack.c.b16 %v2952, %v2948
  %v2993 = vpack.c.b16 %v2957, %v2953
  %v2994 = vpack.c.b16 %v2958, %v2954
  %v2995 = vpack.c.b16 %v2959, %v2955
  %v2996 = vpack.c.b16 %v2960, %v2956
  %v2997 = vpack.c.b16 %v2965, %v2961
  %v2998 = vpack.c.b16 %v2966, %v2962
  %v2999 = vpack.c.b16 %v2967, %v2963
  %v3000 = vpack.c.b16 %v2968, %v2964
  %3033 = vmatpush.bf16.msra.mxu0 %v2997
  %3034 = vmatpush.bf16.msra.mxu0 %v2993
  %3035 = vmatpush.bf16.msra.mxu0 %v2989
  %3036 = vmatpush.bf16.msra.mxu0 %v2985
  %3037 = vmatpush.bf16.msra.mxu0 %v2981
  %3038 = vmatpush.bf16.msra.mxu0 %v2977
  %3039 = vmatpush.bf16.msra.mxu0 %v2973
  %3040 = vmatpush.bf16.msra.mxu0 %v2969
  %3041 = vmatmul.bf16.gmra.mxu0 %v2840
  %v3042 = vpop.f32.mrf.mxu0
  %v3043 = vadd.f32 0.0, %v3042
  %v3044 = vpop.f32.mrf.mxu0
  %3045 = vdwg.mxu0
  %3046 = vmatpush.bf16.msra.mxu0 %v2998
  %3047 = vmatpush.bf16.msra.mxu0 %v2994
  %3048 = vmatpush.bf16.msra.mxu0 %v2990
  %3049 = vmatpush.bf16.msra.mxu0 %v2986
  %3050 = vmatpush.bf16.msra.mxu0 %v2982
  %3051 = vmatpush.bf16.msra.mxu0 %v2978
  %3052 = vmatpush.bf16.msra.mxu0 %v2974
  %3053 = vmatpush.bf16.msra.mxu0 %v2970
  %3054 = vmatmul.bf16.gmra.mxu0 %v2840
  %v3055 = vpop.f32.mrf.mxu0
  %v3056 = vadd.f32 0.0, %v3055
  %v3057 = vpop.f32.mrf.mxu0
  %3058 = vdwg.mxu0
  %3059 = vmatpush.bf16.msra.mxu0 %v2999
  %3060 = vmatpush.bf16.msra.mxu0 %v2995
  %3061 = vmatpush.bf16.msra.mxu0 %v2991
  %3062 = vmatpush.bf16.msra.mxu0 %v2987
  %3063 = vmatpush.bf16.msra.mxu0 %v2983
  %3064 = vmatpush.bf16.msra.mxu0 %v2979
  %3065 = vmatpush.bf16.msra.mxu0 %v2975
  %3066 = vmatpush.bf16.msra.mxu0 %v2971
  %3067 = vmatmul.bf16.gmra.mxu0 %v2840
  %v3068 = vpop.f32.mrf.mxu0
  %v3069 = vadd.f32 0.0, %v3068
  %v3070 = vpop.f32.mrf.mxu0
  %3071 = vdwg.mxu0
  %3072 = vmatpush.bf16.msra.mxu0 %v3000
  %3073 = vmatpush.bf16.msra.mxu0 %v2996
  %3074 = vmatpush.bf16.msra.mxu0 %v2992
  %3075 = vmatpush.bf16.msra.mxu0 %v2988
  %3076 = vmatpush.bf16.msra.mxu0 %v2984
  %3077 = vmatpush.bf16.msra.mxu0 %v2980
  %3078 = vmatpush.bf16.msra.mxu0 %v2976
  %3079 = vmatpush.bf16.msra.mxu0 %v2972
  %3080 = vmatmul.bf16.gmra.mxu0 %v2840
  %v3081 = vpop.f32.mrf.mxu0
  %v3082 = vadd.f32 0.0, %v3081
  %v3083 = vpop.f32.mrf.mxu0
  %3084 = vdwg.mxu0
  %v3085 = vadd.f32 %v2835, %v3043
  %v3086 = vadd.f32 %v2836, %v3056
  %v3087 = vadd.f32 %v2837, %v3069
  %v3088 = vadd.f32 %v2838, %v3082
  %v3089 = vxor.u32 %v3085, 2147483648
  %v3090 = vxor.u32 %v3086, 2147483648
  %v3091 = vxor.u32 %v3087, 2147483648
  %v3092 = vmul.f32 %v3089, 1.442695
  %v3093 = vpow.pop %v3092
  %v3094 = vmul.f32 %v3090, 1.442695
  %v3095 = vpow.pop %v3094
  %v3096 = vmul.f32 %v3091, 1.442695
  %v3097 = vpow.pop %v3096
  %v3098 = vadd.f32 %v3093, 1.0
  %v3099 = vadd.f32 %v3095, 1.0
  %v3100 = vadd.f32 %v3097, 1.0
  %v3101 = vrcp.pop %v3098
  %v3102 = vmul.f32 %v3098, %v3101
  %v3103 = vsub.f32 1.0, %v3102
  %v3104 = vmul.f32 %v3101, %v3103
  %v3105 = vadd.f32 %v3101, %v3104
  %vm3106 = vweird.f32 %v3098
  %vm3107 = vweird.f32 %v3101
  %vm3108 = vmor %vm3106, %vm3107
  %v3109 = vsel %vm3108, %v3101, %v3105
  %v3110 = vand.u32 2147483647, %v3098
  %vm3111 = vcmp.eq.f32.partialorder %v3110, 8.507059e+37
  %v3112 = vand.u32 %v3098, 2147483648
  %v3113 = vor.u32 1.1754944e-38, %v3112
  %v3114 = vsel %vm3111, %v3113, %v3109
  %v3115 = vmul.f32 1.0, %v3114
  %v3116 = vrcp.pop %v3099
  %v3117 = vmul.f32 %v3099, %v3116
  %v3118 = vsub.f32 1.0, %v3117
  %v3119 = vmul.f32 %v3116, %v3118
  %v3120 = vadd.f32 %v3116, %v3119
  %vm3121 = vweird.f32 %v3099
  %vm3122 = vweird.f32 %v3116
  %vm3123 = vmor %vm3121, %vm3122
  %v3124 = vsel %vm3123, %v3116, %v3120
  %v3125 = vand.u32 2147483647, %v3099
  %vm3126 = vcmp.eq.f32.partialorder %v3125, 8.507059e+37
  %v3127 = vand.u32 %v3099, 2147483648
  %v3128 = vor.u32 1.1754944e-38, %v3127
  %v3129 = vsel %vm3126, %v3128, %v3124
  %v3130 = vmul.f32 1.0, %v3129
  %v3131 = vrcp.pop %v3100
  %v3132 = vmul.f32 %v3100, %v3131
  %v3133 = vsub.f32 1.0, %v3132
  %v3134 = vmul.f32 %v3131, %v3133
  %v3135 = vadd.f32 %v3131, %v3134
  %vm3136 = vweird.f32 %v3100
  %vm3137 = vweird.f32 %v3131
  %vm3138 = vmor %vm3136, %vm3137
  %v3139 = vsel %vm3138, %v3131, %v3135
  %v3140 = vand.u32 2147483647, %v3100
  %vm3141 = vcmp.eq.f32.partialorder %v3140, 8.507059e+37
  %v3142 = vand.u32 %v3100, 2147483648
  %v3143 = vor.u32 1.1754944e-38, %v3142
  %v3144 = vsel %vm3141, %v3143, %v3139
  %v3145 = vmul.f32 1.0, %v3144
  %v3146 = vtanh.pop %v3088
  %v3147 = vld [vmem:[#allocation7] sm:$0xff]
  %v3148 = vmul.f32 %v3130, %v3147
  %v3149 = vmul.f32 %v3115, %v3146
  %v3150 = vadd.f32 %v3148, %v3149
  %v3151 = vtanh.pop %v3150
  %v3152 = vmul.f32 %v3145, %v3151
  %3153 = vst [vmem:[#allocation7] sm:$0xff] %v3150
  %3154 = vst [vmem:[#allocation6] sm:$0xff] %v3152
  // Predicated region
  $region75: #{lstm_model_forward.1} parent=0 // pred_check
    %p3155 = pneg %p17
  $region76: #{lstm_model_forward.1} parent=0 // pred_check_branch
    %3157 = sbr.rel (%p3155) target = $region78
  $region77: #{lstm_model_forward.1} parent=0 // pred_region
    %v3158 = vld [vmem:[#allocation6] sm:$0xff]
    %v3159 = vpack.c.bf16 %v3158, %v3158
    %v3160 = vld [vmem:[#allocation4] sm:$0xf]
    %v3161 = vld [vmem:[#allocation4 + $0x4] sm:$0xf]
    %v3162 = vld [vmem:[#allocation4 + $0x8] sm:$0xf]
    %v3163 = vld [vmem:[#allocation4 + $0xc] sm:$0xf]
    %v3164 = vld [vmem:[#allocation4 + $0x10] sm:$0xf]
    %v3165 = vld [vmem:[#allocation4 + $0x14] sm:$0xf]
    %v3166 = vld [vmem:[#allocation4 + $0x18] sm:$0xf]
    %v3167 = vld [vmem:[#allocation4 + $0x1c] sm:$0xf]
    %v3168 = vld [vmem:[#allocation4 + $0x20] sm:$0xf]
    %v3169 = vld [vmem:[#allocation4 + $0x24] sm:$0xf]
    %v3170 = vld [vmem:[#allocation4 + $0x28] sm:$0xf]
    %v3171 = vld [vmem:[#allocation4 + $0x2c] sm:$0xf]
    %v3172 = vld [vmem:[#allocation4 + $0x30] sm:$0xf]
    %v3173 = vld [vmem:[#allocation4 + $0x34] sm:$0xf]
    %v3174 = vld [vmem:[#allocation4 + $0x38] sm:$0xf]
    %v3175 = vld [vmem:[#allocation4 + $0x3c] sm:$0xf]
    %v3176 = vld [vmem:[%s5] sm:$0x1]
    %v3178 = vperm.slane %v3176, 0
    %v3196 = vunpack.c.l.b16 %v3160
    %v3197 = vunpack.c.l.b16 %v3161
    %v3198 = vunpack.c.l.b16 %v3162
    %v3199 = vunpack.c.l.b16 %v3163
    %v3200 = vunpack.c.l.b16 %v3164
    %v3201 = vunpack.c.l.b16 %v3165
    %v3202 = vunpack.c.l.b16 %v3166
    %v3203 = vunpack.c.l.b16 %v3167
    %v3204 = vunpack.c.l.b16 %v3168
    %v3205 = vunpack.c.l.b16 %v3169
    %v3206 = vunpack.c.l.b16 %v3170
    %v3207 = vunpack.c.l.b16 %v3171
    %v3208 = vunpack.c.l.b16 %v3172
    %v3209 = vunpack.c.l.b16 %v3173
    %v3210 = vunpack.c.l.b16 %v3174
    %v3211 = vunpack.c.l.b16 %v3175
    %v3212 = vpack.c.b16 %v3197, %v3196
    %v3213 = vpack.c.b16 %v3199, %v3198
    %v3214 = vpack.c.b16 %v3201, %v3200
    %v3215 = vpack.c.b16 %v3203, %v3202
    %v3216 = vpack.c.b16 %v3205, %v3204
    %v3217 = vpack.c.b16 %v3207, %v3206
    %v3218 = vpack.c.b16 %v3209, %v3208
    %v3219 = vpack.c.b16 %v3211, %v3210
    %3228 = vmatpush.bf16.msra.mxu0 %v3219
    %3229 = vmatpush.bf16.msra.mxu0 %v3218
    %3230 = vmatpush.bf16.msra.mxu0 %v3217
    %3231 = vmatpush.bf16.msra.mxu0 %v3216
    %3232 = vmatpush.bf16.msra.mxu0 %v3215
    %3233 = vmatpush.bf16.msra.mxu0 %v3214
    %3234 = vmatpush.bf16.msra.mxu0 %v3213
    %3235 = vmatpush.bf16.msra.mxu0 %v3212
    %3236 = vmatmul.bf16.gmra.mxu0 %v3159
    %v3237 = vpop.f32.mrf.mxu0
    %v3238 = vadd.f32 %v3178, %v3237
    %v3239 = vpop.f32.mrf.mxu0
    %3240 = vdwg.mxu0
    %3241 = vst [vmem:[%s6] sm:$0xff] %v3238
  $region78: #{lstm_model_forward.1} parent=0 // pred_fallthru
    _
  // Predicated region
  $region79: #{lstm_model_forward.1} parent=0 // pred_check
    _
  $region80: #{lstm_model_forward.1} parent=0 // pred_check_branch
    %3243 = sbr.rel (0) target = $region82
  $region81: #{lstm_model_forward.1} parent=0 // pred_region
    _
  $region82: #{lstm_model_forward.1} parent=0 // pred_fallthru
    _
  // Predicated region
  $region83: #{lstm_model_forward.1} parent=0 // pred_check
    _
  $region84: #{lstm_model_forward.1} parent=0 // pred_check_branch
    %3245 = sbr.rel (0) target = $region86
  $region85: #{lstm_model_forward.1} parent=0 // pred_region
    _
  $region86: #{lstm_model_forward.1} parent=0 // pred_fallthru
    _
  %3246 = vsyncmov [#allocation8]
  %s3247 = vpop.sfrf %3246
  %p3248 = scmp.eq.s32.totalorder %s3247, 0
  %p3249 = pneg %p3248
  %3251 = shalt.err (%p3249)
  %s3252 = scalar_lea.sflag [#allocation8], 1
  %3253 = vsyncmov %s3252
  %s3254 = vpop.sfrf %3253
  %p3255 = scmp.eq.s32.totalorder %s3254, 0
  %p3256 = pneg %p3255
  %3258 = shalt.err (%p3256)
  %s3259 = scalar_lea.sflag [#allocation8], 2
  %3260 = vsyncmov %s3259
  %s3261 = vpop.sfrf %3260
  %p3262 = scmp.eq.s32.totalorder %s3261, 0
  %p3263 = pneg %p3262
  %3265 = shalt.err (%p3263)

</llo_original>
